<compile_context>
chip_gen: v7x
topology: tpu7x:2x2x1
jax: 0.10.0
libtpu: 0.0.40
codegen_flags: <defaults>
</compile_context>

<pallas_src>
import functools

import jax
import jax.numpy as jnp
import numpy as np
from jax.experimental import pallas as pl
from jax.experimental.pallas import tpu as pltpu

# ---- fixed LeNet geometry (3x32x32 input is implied by the 16*5*5 flatten) ----
C0, H0, W0 = 3, 32, 32
KH = KW = 5
C1, H1, W1 = 6, 28, 28          # conv1 output
HP1, WP1 = 14, 14               # pool1 output
C2, H2, W2 = 16, 10, 10         # conv2 output
HP2, WP2 = 5, 5                 # pool2 output
N1, N2, N3 = 120, 84, 10        # fc1 / fc2 / fc3 widths
NP = 128                        # lane-padded fc width


# ---------------------------- fused Pallas kernel ----------------------------

def _lenet_kernel(x_ref, w1b_ref, b1_ref, rs1_ref, cs1_ref,
                  w2b_ref, b2_ref, rs2_ref, cs2_ref, sel_ref,
                  wf1_ref, bf1_ref, wf2_ref, bf2_ref, wf3_ref, bf3_ref,
                  o_ref, *, bt):
    bf16 = jnp.bfloat16

    def mm(a, b):
        return jnp.dot(a, b, preferred_element_type=jnp.float32)

    x = x_ref[...]                                 # (bt*32, 96) bf16, images stacked on rows

    # ---- conv1 + relu over the whole tile: 5 row-shifted matmuls, M = bt*32-4 ----
    r1 = bt * H0 - (KH - 1)
    acc = mm(x[0:r1, :], w1b_ref[0])
    for di in range(1, KH):
        acc = acc + mm(x[di:di + r1, :], w1b_ref[di])
    c1 = jnp.maximum(acc + b1_ref[...], 0.0).astype(bf16)                    # (bt*32-4, 168)

    # ---- 2x2 max-pool: row pairs (+ cross-image garbage-row drop) and column pairs ----
    # ---- via 0/1 selection matmuls (exact in bf16).                                ----
    m1 = jnp.maximum(mm(rs1_ref[0], c1), mm(rs1_ref[1], c1)).astype(bf16)    # (bt*14, 168)
    p1 = jnp.maximum(mm(m1, cs1_ref[0]), mm(m1, cs1_ref[1])).astype(bf16)    # (bt*14, 84)

    # ---- conv2 + relu: 5 row-shifted matmuls, M = bt*14-4 ----
    r2 = bt * HP1 - (KH - 1)
    acc = mm(p1[0:r2, :], w2b_ref[0])
    for di in range(1, KH):
        acc = acc + mm(p1[di:di + r2, :], w2b_ref[di])
    c2 = jnp.maximum(acc + b2_ref[...], 0.0).astype(bf16)                    # (bt*14-4, 160)

    # ---- pool2 ----
    m2 = jnp.maximum(mm(rs2_ref[0], c2), mm(rs2_ref[1], c2)).astype(bf16)    # (bt*5, 160)
    p2 = jnp.maximum(mm(m2, cs2_ref[0]), mm(m2, cs2_ref[1])).astype(bf16)    # (bt*5, 80)

    # ---- fc1 + relu: gather pooled row h of every image (selection matmul), then ----
    # ---- contract against the h-slab of the packed (torch C,H,W-order) weight.   ----
    acc = mm(mm(sel_ref[0], p2).astype(bf16), wf1_ref[0])
    for h in range(1, HP2):
        acc = acc + mm(mm(sel_ref[h], p2).astype(bf16), wf1_ref[h])
    f1 = jnp.maximum(acc + bf1_ref[...], 0.0).astype(bf16)                   # (bt, 128)

    # ---- fc2 + relu, fc3 (lane-padded to 128) ----
    f2 = jnp.maximum(mm(f1, wf2_ref[...]) + bf2_ref[...], 0.0).astype(bf16)
    f3 = mm(f2, wf3_ref[...]) + bf3_ref[...]

    o_ref[...] = f3                                # one unmasked (bt, 128) f32 store


# ------------------- one-time weight packing (init-time, numpy) -------------------

def _pack_conv_band(w_oihw, w_out):
    """torch conv weight (Cout,Cin,KH,KW) -> (KH, W_in*Cin, W_out*Cout) banded matrices."""
    c_out, c_in, kh, kw = w_oihw.shape
    wb = np.zeros((kh, (w_out + kw - 1) * c_in, w_out * c_out), np.float32)
    for di in range(kh):
        for j in range(w_out):
            for dj in range(kw):
                wb[di, (j + dj) * c_in:(j + dj + 1) * c_in,
                       j * c_out:(j + 1) * c_out] = w_oihw[:, :, di, dj].T
    return wb


def _pack_col_pool(w_in, c):
    w_out = w_in // 2
    s = np.zeros((2, w_in * c, w_out * c), np.float32)
    for q in range(w_out):
        for co in range(c):
            s[0, (2 * q) * c + co, q * c + co] = 1.0
            s[1, (2 * q + 1) * c + co, q * c + co] = 1.0
    return s


def _pack_fc1(fc1_w):
    """torch fc1 weight (120, 400) over (C,H,W)-ordered flatten -> (5, 5*16, 128)."""
    wf1 = np.zeros((HP2, WP2 * C2, NP), np.float32)
    for h in range(HP2):
        for w in range(WP2):
            for co in range(C2):
                wf1[h, w * C2 + co, :N1] = fc1_w[:, co * (HP2 * WP2) + h * WP2 + w]
    return wf1


def pack_params(p):
    """torch-layout params -> packed, lane-padded, bf16 kernel weights (biases stay f32)."""
    g = lambda a: np.asarray(a, np.float32)
    bf = jnp.bfloat16
    out = {
        'w1b': jnp.asarray(_pack_conv_band(g(p['conv1_w']), W1), bf),     # (5, 96, 168)
        'b1':  jnp.asarray(np.tile(g(p['conv1_b']), W1)[None, :]),        # (1, 168) f32
        'cs1': jnp.asarray(_pack_col_pool(W1, C1), bf),                   # (2, 168, 84)
        'w2b': jnp.asarray(_pack_conv_band(g(p['conv2_w']), W2), bf),     # (5, 84, 160)
        'b2':  jnp.asarray(np.tile(g(p['conv2_b']), W2)[None, :]),        # (1, 160) f32
        'cs2': jnp.asarray(_pack_col_pool(W2, C2), bf),                   # (2, 160, 80)
        'wf1': jnp.asarray(_pack_fc1(g(p['fc1_w'])), bf),                 # (5, 80, 128)
    }
    bf1 = np.zeros((1, NP), np.float32); bf1[0, :N1] = g(p['fc1_b'])
    wf2 = np.zeros((NP, NP), np.float32); wf2[:N1, :N2] = g(p['fc2_w']).T
    bf2 = np.zeros((1, NP), np.float32); bf2[0, :N2] = g(p['fc2_b'])
    wf3 = np.zeros((NP, NP), np.float32); wf3[:N2, :N3] = g(p['fc3_w']).T
    bf3 = np.zeros((1, NP), np.float32); bf3[0, :N3] = g(p['fc3_b'])
    out.update(bf1=jnp.asarray(bf1), wf2=jnp.asarray(wf2, bf), bf2=jnp.asarray(bf2),
               wf3=jnp.asarray(wf3, bf), bf3=jnp.asarray(bf3))
    return out


# -------- bt-dependent 0/1 row-selection matrices (trace-time numpy constants) --------

def _row_pool_select(bt, stride_in, h_out):
    """Pick row pairs (b*stride_in + 2q, +2q+1) -> output row b*h_out + q (drops garbage)."""
    rows_in = bt * stride_in - (KH - 1)
    r = np.zeros((2, bt * h_out, rows_in), np.float32)
    for b in range(bt):
        for q in range(h_out):
            r[0, b * h_out + q, b * stride_in + 2 * q] = 1.0
            r[1, b * h_out + q, b * stride_in + 2 * q + 1] = 1.0
    return r


def _fc_row_select(bt):
    """sel[h, b, b*5 + h] = 1 : extract pooled row h of every image from (bt*5, 80)."""
    s = np.zeros((HP2, bt, bt * HP2), np.float32)
    for h in range(HP2):
        for b in range(bt):
            s[h, b, b * HP2 + h] = 1.0
    return s


# ---------------------------------- wrapper ----------------------------------

def _const_spec(shape):
    n = len(shape)
    return pl.BlockSpec(tuple(shape), lambda i: (0,) * n)   # weight resident, DMA'd once


def _mm_flops(m, k, n):
    return 2 * m * k * n


@functools.partial(jax.jit, static_argnames=('batch_tile',))
def net_forward(packed, x_nchw, *, batch_tile=8):
    B = x_nchw.shape[0]
    bt = max(1, min(int(batch_tile), B))
    if bt < B:                       # multi-step grid: keep (8,128)-aligned output blocks
        bt = ((bt + 7) // 8) * 8
    nb = pl.cdiv(B, bt)
    bp = nb * bt

    # NCHW -> (H, W*C) rows per image, stacked over the batch, bf16 for the MXU.
    # TODO(synk): callers that can provide NHWC/bf16 pre-packed input skip this extra
    # relayout pass over HBM (it runs as a separate XLA op before the fused kernel).
    x = jnp.transpose(x_nchw, (0, 2, 3, 1)).reshape(B, H0, W0 * C0)
    if bp != B:
        x = jnp.pad(x, ((0, bp - B), (0, 0), (0, 0)))       # zero images, sliced off below
    x2d = x.reshape(bp * H0, W0 * C0).astype(jnp.bfloat16)

    rs1 = jnp.asarray(_row_pool_select(bt, H0, HP1), jnp.bfloat16)    # (2, bt*14, bt*32-4)
    rs2 = jnp.asarray(_row_pool_select(bt, HP1, HP2), jnp.bfloat16)   # (2, bt*5,  bt*14-4)
    sel = jnp.asarray(_fc_row_select(bt), jnp.bfloat16)               # (5, bt, bt*5)

    weights = (packed['w1b'], packed['b1'], rs1, packed['cs1'],
               packed['w2b'], packed['b2'], rs2, packed['cs2'], sel,
               packed['wf1'], packed['bf1'], packed['wf2'], packed['bf2'],
               packed['wf3'], packed['bf3'])

    r1, r2 = bt * H0 - (KH - 1), bt * HP1 - (KH - 1)
    flops_per_step = (KH * _mm_flops(r1, W0 * C0, W1 * C1)
                      + 2 * _mm_flops(bt * HP1, r1, W1 * C1)
                      + 2 * _mm_flops(bt * HP1, W1 * C1, WP1 * C1)
                      + KH * _mm_flops(r2, WP1 * C1, W2 * C2)
                      + 2 * _mm_flops(bt * HP2, r2, W2 * C2)
                      + 2 * _mm_flops(bt * HP2, W2 * C2, WP2 * C2)
                      + KH * (_mm_flops(bt, bt * HP2, WP2 * C2) + _mm_flops(bt, WP2 * C2, NP))
                      + 2 * _mm_flops(bt, NP, NP))
    bytes_accessed = int(x2d.size * x2d.dtype.itemsize
                         + sum(int(w.size) * w.dtype.itemsize for w in weights)
                         + bp * NP * 4)

    out = pl.pallas_call(
        functools.partial(_lenet_kernel, bt=bt),
        out_shape=jax.ShapeDtypeStruct((bp, NP), jnp.float32),
        grid=(nb,),
        in_specs=[pl.BlockSpec((bt * H0, W0 * C0), lambda i: (i, 0))]
                 + [_const_spec(w.shape) for w in weights],
        out_specs=pl.BlockSpec((bt, NP), lambda i: (i, 0)),
        compiler_params=pltpu.CompilerParams(dimension_semantics=("parallel",)),
        cost_estimate=pl.CostEstimate(flops=flops_per_step * nb, transcendentals=0,
                                      bytes_accessed=bytes_accessed),
    )(x2d, *weights)

    return out[:B, :N3]


# ------------------- torch-style init + pure-JAX f32 reference -------------------

def init_params(key):
    ks = jax.random.split(key, 10)

    def pt_init(kw_, kb_, fan_in, shape_w, shape_b):
        bound = float(1.0 / np.sqrt(fan_in))
        w = jax.random.uniform(kw_, shape_w, jnp.float32, -bound, bound)
        b = jax.random.uniform(kb_, shape_b, jnp.float32, -bound, bound)
        return w, b

    p = {}
    p['conv1_w'], p['conv1_b'] = pt_init(ks[0], ks[1], C0 * KH * KW, (C1, C0, KH, KW), (C1,))
    p['conv2_w'], p['conv2_b'] = pt_init(ks[2], ks[3], C1 * KH * KW, (C2, C1, KH, KW), (C2,))
    p['fc1_w'], p['fc1_b'] = pt_init(ks[4], ks[5], C2 * HP2 * WP2, (N1, C2 * HP2 * WP2), (N1,))
    p['fc2_w'], p['fc2_b'] = pt_init(ks[6], ks[7], N1, (N2, N1), (N2,))
    p['fc3_w'], p['fc3_b'] = pt_init(ks[8], ks[9], N2, (N3, N2), (N3,))
    return p


def reference_forward(p, x_nchw):
    dn = ('NCHW', 'OIHW', 'NCHW')
    y = jax.lax.conv_general_dilated(x_nchw, p['conv1_w'], (1, 1), 'VALID',
                                     dimension_numbers=dn)
    y = jax.nn.relu(y + p['conv1_b'][None, :, None, None])
    y = jax.lax.reduce_window(y, -jnp.inf, jax.lax.max, (1, 1, 2, 2), (1, 1, 2, 2), 'VALID')
    y = jax.lax.conv_general_dilated(y, p['conv2_w'], (1, 1), 'VALID', dimension_numbers=dn)
    y = jax.nn.relu(y + p['conv2_b'][None, :, None, None])
    y = jax.lax.reduce_window(y, -jnp.inf, jax.lax.max, (1, 1, 2, 2), (1, 1, 2, 2), 'VALID')
    y = y.reshape(y.shape[0], -1)                          # (B, 400) in torch (C,H,W) order
    y = jax.nn.relu(y @ p['fc1_w'].T + p['fc1_b'])
    y = jax.nn.relu(y @ p['fc2_w'].T + p['fc2_b'])
    return y @ p['fc3_w'].T + p['fc3_b']


if __name__ == "__main__":
    key = jax.random.PRNGKey(0)
    kp, kx = jax.random.split(key)
    raw = init_params(kp)
    packed = pack_params(raw)

    B = 12                                   # 2 grid steps (bt=8), exercises batch padding
    x = jax.random.normal(kx, (B, C0, H0, W0), jnp.float32)
    out = jax.block_until_ready(net_forward(packed, x, batch_tile=8))

    assert out.shape == (B, N3) and out.dtype == jnp.float32
    ref = jax.block_until_ready(reference_forward(raw, x))
    # bf16 MXU operands with f32 accumulation: slightly looser tolerance than pure f32.
    np.testing.assert_allclose(np.asarray(out), np.asarray(ref), rtol=5e-2, atol=5e-2)
    print("KERNEL_OK")
</pallas_src>

<mosaic_0001>
module attributes {stable_mosaic.version = 11 : i64} {
  func.func @_lenet_kernel(%arg0: i32, %arg1: memref<256x96xbf16, #tpu.memory_space<vmem>>, %arg2: memref<5x96x168xbf16, #tpu.memory_space<vmem>>, %arg3: memref<1x168xf32, #tpu.memory_space<vmem>>, %arg4: memref<2x112x252xbf16, #tpu.memory_space<vmem>>, %arg5: memref<2x168x84xbf16, #tpu.memory_space<vmem>>, %arg6: memref<5x84x160xbf16, #tpu.memory_space<vmem>>, %arg7: memref<1x160xf32, #tpu.memory_space<vmem>>, %arg8: memref<2x40x108xbf16, #tpu.memory_space<vmem>>, %arg9: memref<2x160x80xbf16, #tpu.memory_space<vmem>>, %arg10: memref<5x8x40xbf16, #tpu.memory_space<vmem>>, %arg11: memref<5x80x128xbf16, #tpu.memory_space<vmem>>, %arg12: memref<1x128xf32, #tpu.memory_space<vmem>>, %arg13: memref<128x128xbf16, #tpu.memory_space<vmem>>, %arg14: memref<1x128xf32, #tpu.memory_space<vmem>>, %arg15: memref<128x128xbf16, #tpu.memory_space<vmem>>, %arg16: memref<1x128xf32, #tpu.memory_space<vmem>>, %arg17: memref<8x128xf32, #tpu.memory_space<vmem>>) attributes {dimension_semantics = [#tpu.dimension_semantics<parallel>], iteration_bounds = array<i64: 2>, scalar_prefetch = 0 : i64, scratch_operands = 0 : i64, tpu.core_type = #tpu.core_type<tc>, window_params = [{transform_indices = @transform_0, window_bounds = array<i64: 256, 96>}, {pipeline_mode = #tpu.pipeline_mode<synchronous>, transform_indices = @transform_1, window_bounds = array<i64: 5, 96, 168>}, {pipeline_mode = #tpu.pipeline_mode<synchronous>, transform_indices = @transform_2, window_bounds = array<i64: 1, 168>}, {pipeline_mode = #tpu.pipeline_mode<synchronous>, transform_indices = @transform_3, window_bounds = array<i64: 2, 112, 252>}, {pipeline_mode = #tpu.pipeline_mode<synchronous>, transform_indices = @transform_4, window_bounds = array<i64: 2, 168, 84>}, {pipeline_mode = #tpu.pipeline_mode<synchronous>, transform_indices = @transform_5, window_bounds = array<i64: 5, 84, 160>}, {pipeline_mode = #tpu.pipeline_mode<synchronous>, transform_indices = @transform_6, window_bounds = array<i64: 1, 160>}, {pipeline_mode = #tpu.pipeline_mode<synchronous>, transform_indices = @transform_7, window_bounds = array<i64: 2, 40, 108>}, {pipeline_mode = #tpu.pipeline_mode<synchronous>, transform_indices = @transform_8, window_bounds = array<i64: 2, 160, 80>}, {pipeline_mode = #tpu.pipeline_mode<synchronous>, transform_indices = @transform_9, window_bounds = array<i64: 5, 8, 40>}, {pipeline_mode = #tpu.pipeline_mode<synchronous>, transform_indices = @transform_10, window_bounds = array<i64: 5, 80, 128>}, {pipeline_mode = #tpu.pipeline_mode<synchronous>, transform_indices = @transform_11, window_bounds = array<i64: 1, 128>}, {pipeline_mode = #tpu.pipeline_mode<synchronous>, transform_indices = @transform_12, window_bounds = array<i64: 128, 128>}, {pipeline_mode = #tpu.pipeline_mode<synchronous>, transform_indices = @transform_13, window_bounds = array<i64: 1, 128>}, {pipeline_mode = #tpu.pipeline_mode<synchronous>, transform_indices = @transform_14, window_bounds = array<i64: 128, 128>}, {pipeline_mode = #tpu.pipeline_mode<synchronous>, transform_indices = @transform_15, window_bounds = array<i64: 1, 128>}, {transform_indices = @transform_16, window_bounds = array<i64: 8, 128>}]} {
    %c0 = arith.constant 0 : index
    %c0_0 = arith.constant 0 : index
    %0 = vector.load %arg1[%c0, %c0_0] : memref<256x96xbf16, #tpu.memory_space<vmem>>, vector<256x96xbf16>
    %1 = vector.extract_strided_slice %0 {offsets = [0, 0], sizes = [252, 96], strides = [1, 1]} : vector<256x96xbf16> to vector<252x96xbf16>
    %c0_1 = arith.constant 0 : index
    %c0_2 = arith.constant 0 : index
    %c0_3 = arith.constant 0 : index
    %2 = vector.load %arg2[%c0_1, %c0_2, %c0_3] : memref<5x96x168xbf16, #tpu.memory_space<vmem>>, vector<1x96x168xbf16>
    %3 = vector.shape_cast %2 : vector<1x96x168xbf16> to vector<96x168xbf16>
    %cst = arith.constant dense<0.000000e+00> : vector<252x168xf32>
    %4 = tpu.matmul %1, %3, %cst {dimension_numbers = #tpu.dot_dimension_numbers<[1], [0], [0], [1], [0, 0, 1, 1], [], []>} : vector<252x96xbf16>, vector<96x168xbf16>, vector<252x168xf32> -> vector<252x168xf32>
    %5 = vector.extract_strided_slice %0 {offsets = [1, 0], sizes = [252, 96], strides = [1, 1]} : vector<256x96xbf16> to vector<252x96xbf16>
    %c1 = arith.constant 1 : index
    %c0_4 = arith.constant 0 : index
    %c0_5 = arith.constant 0 : index
    %6 = vector.load %arg2[%c1, %c0_4, %c0_5] : memref<5x96x168xbf16, #tpu.memory_space<vmem>>, vector<1x96x168xbf16>
    %7 = vector.shape_cast %6 : vector<1x96x168xbf16> to vector<96x168xbf16>
    %cst_6 = arith.constant dense<0.000000e+00> : vector<252x168xf32>
    %8 = tpu.matmul %5, %7, %cst_6 {dimension_numbers = #tpu.dot_dimension_numbers<[1], [0], [0], [1], [0, 0, 1, 1], [], []>} : vector<252x96xbf16>, vector<96x168xbf16>, vector<252x168xf32> -> vector<252x168xf32>
    %9 = arith.addf %4, %8 : vector<252x168xf32>
    %10 = vector.extract_strided_slice %0 {offsets = [2, 0], sizes = [252, 96], strides = [1, 1]} : vector<256x96xbf16> to vector<252x96xbf16>
    %c2 = arith.constant 2 : index
    %c0_7 = arith.constant 0 : index
    %c0_8 = arith.constant 0 : index
    %11 = vector.load %arg2[%c2, %c0_7, %c0_8] : memref<5x96x168xbf16, #tpu.memory_space<vmem>>, vector<1x96x168xbf16>
    %12 = vector.shape_cast %11 : vector<1x96x168xbf16> to vector<96x168xbf16>
    %cst_9 = arith.constant dense<0.000000e+00> : vector<252x168xf32>
    %13 = tpu.matmul %10, %12, %cst_9 {dimension_numbers = #tpu.dot_dimension_numbers<[1], [0], [0], [1], [0, 0, 1, 1], [], []>} : vector<252x96xbf16>, vector<96x168xbf16>, vector<252x168xf32> -> vector<252x168xf32>
    %14 = arith.addf %9, %13 : vector<252x168xf32>
    %15 = vector.extract_strided_slice %0 {offsets = [3, 0], sizes = [252, 96], strides = [1, 1]} : vector<256x96xbf16> to vector<252x96xbf16>
    %c3 = arith.constant 3 : index
    %c0_10 = arith.constant 0 : index
    %c0_11 = arith.constant 0 : index
    %16 = vector.load %arg2[%c3, %c0_10, %c0_11] : memref<5x96x168xbf16, #tpu.memory_space<vmem>>, vector<1x96x168xbf16>
    %17 = vector.shape_cast %16 : vector<1x96x168xbf16> to vector<96x168xbf16>
    %cst_12 = arith.constant dense<0.000000e+00> : vector<252x168xf32>
    %18 = tpu.matmul %15, %17, %cst_12 {dimension_numbers = #tpu.dot_dimension_numbers<[1], [0], [0], [1], [0, 0, 1, 1], [], []>} : vector<252x96xbf16>, vector<96x168xbf16>, vector<252x168xf32> -> vector<252x168xf32>
    %19 = arith.addf %14, %18 : vector<252x168xf32>
    %20 = vector.extract_strided_slice %0 {offsets = [4, 0], sizes = [252, 96], strides = [1, 1]} : vector<256x96xbf16> to vector<252x96xbf16>
    %c4 = arith.constant 4 : index
    %c0_13 = arith.constant 0 : index
    %c0_14 = arith.constant 0 : index
    %21 = vector.load %arg2[%c4, %c0_13, %c0_14] : memref<5x96x168xbf16, #tpu.memory_space<vmem>>, vector<1x96x168xbf16>
    %22 = vector.shape_cast %21 : vector<1x96x168xbf16> to vector<96x168xbf16>
    %cst_15 = arith.constant dense<0.000000e+00> : vector<252x168xf32>
    %23 = tpu.matmul %20, %22, %cst_15 {dimension_numbers = #tpu.dot_dimension_numbers<[1], [0], [0], [1], [0, 0, 1, 1], [], []>} : vector<252x96xbf16>, vector<96x168xbf16>, vector<252x168xf32> -> vector<252x168xf32>
    %24 = arith.addf %19, %23 : vector<252x168xf32>
    %c0_16 = arith.constant 0 : index
    %c0_17 = arith.constant 0 : index
    %25 = vector.load %arg3[%c0_16, %c0_17] : memref<1x168xf32, #tpu.memory_space<vmem>>, vector<1x168xf32>
    %26 = vector.broadcast %25 : vector<1x168xf32> to vector<252x168xf32>
    %27 = arith.addf %24, %26 : vector<252x168xf32>
    %cst_18 = arith.constant 0.000000e+00 : f32
    %28 = vector.broadcast %cst_18 : f32 to vector<252x168xf32>
    %29 = arith.maximumf %27, %28 : vector<252x168xf32>
    %30 = arith.truncf %29 : vector<252x168xf32> to vector<252x168xbf16>
    %c0_19 = arith.constant 0 : index
    %c0_20 = arith.constant 0 : index
    %c0_21 = arith.constant 0 : index
    %31 = vector.load %arg4[%c0_19, %c0_20, %c0_21] : memref<2x112x252xbf16, #tpu.memory_space<vmem>>, vector<1x112x252xbf16>
    %32 = vector.shape_cast %31 : vector<1x112x252xbf16> to vector<112x252xbf16>
    %cst_22 = arith.constant dense<0.000000e+00> : vector<112x168xf32>
    %33 = tpu.matmul %32, %30, %cst_22 {dimension_numbers = #tpu.dot_dimension_numbers<[1], [0], [0], [1], [0, 0, 1, 1], [], []>} : vector<112x252xbf16>, vector<252x168xbf16>, vector<112x168xf32> -> vector<112x168xf32>
    %c1_23 = arith.constant 1 : index
    %c0_24 = arith.constant 0 : index
    %c0_25 = arith.constant 0 : index
    %34 = vector.load %arg4[%c1_23, %c0_24, %c0_25] : memref<2x112x252xbf16, #tpu.memory_space<vmem>>, vector<1x112x252xbf16>
    %35 = vector.shape_cast %34 : vector<1x112x252xbf16> to vector<112x252xbf16>
    %cst_26 = arith.constant dense<0.000000e+00> : vector<112x168xf32>
    %36 = tpu.matmul %35, %30, %cst_26 {dimension_numbers = #tpu.dot_dimension_numbers<[1], [0], [0], [1], [0, 0, 1, 1], [], []>} : vector<112x252xbf16>, vector<252x168xbf16>, vector<112x168xf32> -> vector<112x168xf32>
    %37 = arith.maximumf %33, %36 : vector<112x168xf32>
    %38 = arith.truncf %37 : vector<112x168xf32> to vector<112x168xbf16>
    %c0_27 = arith.constant 0 : index
    %c0_28 = arith.constant 0 : index
    %c0_29 = arith.constant 0 : index
    %39 = vector.load %arg5[%c0_27, %c0_28, %c0_29] : memref<2x168x84xbf16, #tpu.memory_space<vmem>>, vector<1x168x84xbf16>
    %40 = vector.shape_cast %39 : vector<1x168x84xbf16> to vector<168x84xbf16>
    %cst_30 = arith.constant dense<0.000000e+00> : vector<112x84xf32>
    %41 = tpu.matmul %38, %40, %cst_30 {dimension_numbers = #tpu.dot_dimension_numbers<[1], [0], [0], [1], [0, 0, 1, 1], [], []>} : vector<112x168xbf16>, vector<168x84xbf16>, vector<112x84xf32> -> vector<112x84xf32>
    %c1_31 = arith.constant 1 : index
    %c0_32 = arith.constant 0 : index
    %c0_33 = arith.constant 0 : index
    %42 = vector.load %arg5[%c1_31, %c0_32, %c0_33] : memref<2x168x84xbf16, #tpu.memory_space<vmem>>, vector<1x168x84xbf16>
    %43 = vector.shape_cast %42 : vector<1x168x84xbf16> to vector<168x84xbf16>
    %cst_34 = arith.constant dense<0.000000e+00> : vector<112x84xf32>
    %44 = tpu.matmul %38, %43, %cst_34 {dimension_numbers = #tpu.dot_dimension_numbers<[1], [0], [0], [1], [0, 0, 1, 1], [], []>} : vector<112x168xbf16>, vector<168x84xbf16>, vector<112x84xf32> -> vector<112x84xf32>
    %45 = arith.maximumf %41, %44 : vector<112x84xf32>
    %46 = arith.truncf %45 : vector<112x84xf32> to vector<112x84xbf16>
    %47 = vector.extract_strided_slice %46 {offsets = [0, 0], sizes = [108, 84], strides = [1, 1]} : vector<112x84xbf16> to vector<108x84xbf16>
    %c0_35 = arith.constant 0 : index
    %c0_36 = arith.constant 0 : index
    %c0_37 = arith.constant 0 : index
    %48 = vector.load %arg6[%c0_35, %c0_36, %c0_37] : memref<5x84x160xbf16, #tpu.memory_space<vmem>>, vector<1x84x160xbf16>
    %49 = vector.shape_cast %48 : vector<1x84x160xbf16> to vector<84x160xbf16>
    %cst_38 = arith.constant dense<0.000000e+00> : vector<108x160xf32>
    %50 = tpu.matmul %47, %49, %cst_38 {dimension_numbers = #tpu.dot_dimension_numbers<[1], [0], [0], [1], [0, 0, 1, 1], [], []>} : vector<108x84xbf16>, vector<84x160xbf16>, vector<108x160xf32> -> vector<108x160xf32>
    %51 = vector.extract_strided_slice %46 {offsets = [1, 0], sizes = [108, 84], strides = [1, 1]} : vector<112x84xbf16> to vector<108x84xbf16>
    %c1_39 = arith.constant 1 : index
    %c0_40 = arith.constant 0 : index
    %c0_41 = arith.constant 0 : index
    %52 = vector.load %arg6[%c1_39, %c0_40, %c0_41] : memref<5x84x160xbf16, #tpu.memory_space<vmem>>, vector<1x84x160xbf16>
    %53 = vector.shape_cast %52 : vector<1x84x160xbf16> to vector<84x160xbf16>
    %cst_42 = arith.constant dense<0.000000e+00> : vector<108x160xf32>
    %54 = tpu.matmul %51, %53, %cst_42 {dimension_numbers = #tpu.dot_dimension_numbers<[1], [0], [0], [1], [0, 0, 1, 1], [], []>} : vector<108x84xbf16>, vector<84x160xbf16>, vector<108x160xf32> -> vector<108x160xf32>
    %55 = arith.addf %50, %54 : vector<108x160xf32>
    %56 = vector.extract_strided_slice %46 {offsets = [2, 0], sizes = [108, 84], strides = [1, 1]} : vector<112x84xbf16> to vector<108x84xbf16>
    %c2_43 = arith.constant 2 : index
    %c0_44 = arith.constant 0 : index
    %c0_45 = arith.constant 0 : index
    %57 = vector.load %arg6[%c2_43, %c0_44, %c0_45] : memref<5x84x160xbf16, #tpu.memory_space<vmem>>, vector<1x84x160xbf16>
    %58 = vector.shape_cast %57 : vector<1x84x160xbf16> to vector<84x160xbf16>
    %cst_46 = arith.constant dense<0.000000e+00> : vector<108x160xf32>
    %59 = tpu.matmul %56, %58, %cst_46 {dimension_numbers = #tpu.dot_dimension_numbers<[1], [0], [0], [1], [0, 0, 1, 1], [], []>} : vector<108x84xbf16>, vector<84x160xbf16>, vector<108x160xf32> -> vector<108x160xf32>
    %60 = arith.addf %55, %59 : vector<108x160xf32>
    %61 = vector.extract_strided_slice %46 {offsets = [3, 0], sizes = [108, 84], strides = [1, 1]} : vector<112x84xbf16> to vector<108x84xbf16>
    %c3_47 = arith.constant 3 : index
    %c0_48 = arith.constant 0 : index
    %c0_49 = arith.constant 0 : index
    %62 = vector.load %arg6[%c3_47, %c0_48, %c0_49] : memref<5x84x160xbf16, #tpu.memory_space<vmem>>, vector<1x84x160xbf16>
    %63 = vector.shape_cast %62 : vector<1x84x160xbf16> to vector<84x160xbf16>
    %cst_50 = arith.constant dense<0.000000e+00> : vector<108x160xf32>
    %64 = tpu.matmul %61, %63, %cst_50 {dimension_numbers = #tpu.dot_dimension_numbers<[1], [0], [0], [1], [0, 0, 1, 1], [], []>} : vector<108x84xbf16>, vector<84x160xbf16>, vector<108x160xf32> -> vector<108x160xf32>
    %65 = arith.addf %60, %64 : vector<108x160xf32>
    %66 = vector.extract_strided_slice %46 {offsets = [4, 0], sizes = [108, 84], strides = [1, 1]} : vector<112x84xbf16> to vector<108x84xbf16>
    %c4_51 = arith.constant 4 : index
    %c0_52 = arith.constant 0 : index
    %c0_53 = arith.constant 0 : index
    %67 = vector.load %arg6[%c4_51, %c0_52, %c0_53] : memref<5x84x160xbf16, #tpu.memory_space<vmem>>, vector<1x84x160xbf16>
    %68 = vector.shape_cast %67 : vector<1x84x160xbf16> to vector<84x160xbf16>
    %cst_54 = arith.constant dense<0.000000e+00> : vector<108x160xf32>
    %69 = tpu.matmul %66, %68, %cst_54 {dimension_numbers = #tpu.dot_dimension_numbers<[1], [0], [0], [1], [0, 0, 1, 1], [], []>} : vector<108x84xbf16>, vector<84x160xbf16>, vector<108x160xf32> -> vector<108x160xf32>
    %70 = arith.addf %65, %69 : vector<108x160xf32>
    %c0_55 = arith.constant 0 : index
    %c0_56 = arith.constant 0 : index
    %71 = vector.load %arg7[%c0_55, %c0_56] : memref<1x160xf32, #tpu.memory_space<vmem>>, vector<1x160xf32>
    %72 = vector.broadcast %71 : vector<1x160xf32> to vector<108x160xf32>
    %73 = arith.addf %70, %72 : vector<108x160xf32>
    %cst_57 = arith.constant 0.000000e+00 : f32
    %74 = vector.broadcast %cst_57 : f32 to vector<108x160xf32>
    %75 = arith.maximumf %73, %74 : vector<108x160xf32>
    %76 = arith.truncf %75 : vector<108x160xf32> to vector<108x160xbf16>
    %c0_58 = arith.constant 0 : index
    %c0_59 = arith.constant 0 : index
    %c0_60 = arith.constant 0 : index
    %77 = vector.load %arg8[%c0_58, %c0_59, %c0_60] : memref<2x40x108xbf16, #tpu.memory_space<vmem>>, vector<1x40x108xbf16>
    %78 = vector.shape_cast %77 : vector<1x40x108xbf16> to vector<40x108xbf16>
    %cst_61 = arith.constant dense<0.000000e+00> : vector<40x160xf32>
    %79 = tpu.matmul %78, %76, %cst_61 {dimension_numbers = #tpu.dot_dimension_numbers<[1], [0], [0], [1], [0, 0, 1, 1], [], []>} : vector<40x108xbf16>, vector<108x160xbf16>, vector<40x160xf32> -> vector<40x160xf32>
    %c1_62 = arith.constant 1 : index
    %c0_63 = arith.constant 0 : index
    %c0_64 = arith.constant 0 : index
    %80 = vector.load %arg8[%c1_62, %c0_63, %c0_64] : memref<2x40x108xbf16, #tpu.memory_space<vmem>>, vector<1x40x108xbf16>
    %81 = vector.shape_cast %80 : vector<1x40x108xbf16> to vector<40x108xbf16>
    %cst_65 = arith.constant dense<0.000000e+00> : vector<40x160xf32>
    %82 = tpu.matmul %81, %76, %cst_65 {dimension_numbers = #tpu.dot_dimension_numbers<[1], [0], [0], [1], [0, 0, 1, 1], [], []>} : vector<40x108xbf16>, vector<108x160xbf16>, vector<40x160xf32> -> vector<40x160xf32>
    %83 = arith.maximumf %79, %82 : vector<40x160xf32>
    %84 = arith.truncf %83 : vector<40x160xf32> to vector<40x160xbf16>
    %c0_66 = arith.constant 0 : index
    %c0_67 = arith.constant 0 : index
    %c0_68 = arith.constant 0 : index
    %85 = vector.load %arg9[%c0_66, %c0_67, %c0_68] : memref<2x160x80xbf16, #tpu.memory_space<vmem>>, vector<1x160x80xbf16>
    %86 = vector.shape_cast %85 : vector<1x160x80xbf16> to vector<160x80xbf16>
    %cst_69 = arith.constant dense<0.000000e+00> : vector<40x80xf32>
    %87 = tpu.matmul %84, %86, %cst_69 {dimension_numbers = #tpu.dot_dimension_numbers<[1], [0], [0], [1], [0, 0, 1, 1], [], []>} : vector<40x160xbf16>, vector<160x80xbf16>, vector<40x80xf32> -> vector<40x80xf32>
    %c1_70 = arith.constant 1 : index
    %c0_71 = arith.constant 0 : index
    %c0_72 = arith.constant 0 : index
    %88 = vector.load %arg9[%c1_70, %c0_71, %c0_72] : memref<2x160x80xbf16, #tpu.memory_space<vmem>>, vector<1x160x80xbf16>
    %89 = vector.shape_cast %88 : vector<1x160x80xbf16> to vector<160x80xbf16>
    %cst_73 = arith.constant dense<0.000000e+00> : vector<40x80xf32>
    %90 = tpu.matmul %84, %89, %cst_73 {dimension_numbers = #tpu.dot_dimension_numbers<[1], [0], [0], [1], [0, 0, 1, 1], [], []>} : vector<40x160xbf16>, vector<160x80xbf16>, vector<40x80xf32> -> vector<40x80xf32>
    %91 = arith.maximumf %87, %90 : vector<40x80xf32>
    %92 = arith.truncf %91 : vector<40x80xf32> to vector<40x80xbf16>
    %c0_74 = arith.constant 0 : index
    %c0_75 = arith.constant 0 : index
    %c0_76 = arith.constant 0 : index
    %93 = vector.load %arg10[%c0_74, %c0_75, %c0_76] : memref<5x8x40xbf16, #tpu.memory_space<vmem>>, vector<1x8x40xbf16>
    %94 = vector.shape_cast %93 : vector<1x8x40xbf16> to vector<8x40xbf16>
    %cst_77 = arith.constant dense<0.000000e+00> : vector<8x80xf32>
    %95 = tpu.matmul %94, %92, %cst_77 {dimension_numbers = #tpu.dot_dimension_numbers<[1], [0], [0], [1], [0, 0, 1, 1], [], []>} : vector<8x40xbf16>, vector<40x80xbf16>, vector<8x80xf32> -> vector<8x80xf32>
    %96 = arith.truncf %95 : vector<8x80xf32> to vector<8x80xbf16>
    %c0_78 = arith.constant 0 : index
    %c0_79 = arith.constant 0 : index
    %c0_80 = arith.constant 0 : index
    %97 = vector.load %arg11[%c0_78, %c0_79, %c0_80] : memref<5x80x128xbf16, #tpu.memory_space<vmem>>, vector<1x80x128xbf16>
    %98 = vector.shape_cast %97 : vector<1x80x128xbf16> to vector<80x128xbf16>
    %cst_81 = arith.constant dense<0.000000e+00> : vector<8x128xf32>
    %99 = tpu.matmul %96, %98, %cst_81 {dimension_numbers = #tpu.dot_dimension_numbers<[1], [0], [0], [1], [0, 0, 1, 1], [], []>} : vector<8x80xbf16>, vector<80x128xbf16>, vector<8x128xf32> -> vector<8x128xf32>
    %c1_82 = arith.constant 1 : index
    %c0_83 = arith.constant 0 : index
    %c0_84 = arith.constant 0 : index
    %100 = vector.load %arg10[%c1_82, %c0_83, %c0_84] : memref<5x8x40xbf16, #tpu.memory_space<vmem>>, vector<1x8x40xbf16>
    %101 = vector.shape_cast %100 : vector<1x8x40xbf16> to vector<8x40xbf16>
    %cst_85 = arith.constant dense<0.000000e+00> : vector<8x80xf32>
    %102 = tpu.matmul %101, %92, %cst_85 {dimension_numbers = #tpu.dot_dimension_numbers<[1], [0], [0], [1], [0, 0, 1, 1], [], []>} : vector<8x40xbf16>, vector<40x80xbf16>, vector<8x80xf32> -> vector<8x80xf32>
    %103 = arith.truncf %102 : vector<8x80xf32> to vector<8x80xbf16>
    %c1_86 = arith.constant 1 : index
    %c0_87 = arith.constant 0 : index
    %c0_88 = arith.constant 0 : index
    %104 = vector.load %arg11[%c1_86, %c0_87, %c0_88] : memref<5x80x128xbf16, #tpu.memory_space<vmem>>, vector<1x80x128xbf16>
    %105 = vector.shape_cast %104 : vector<1x80x128xbf16> to vector<80x128xbf16>
    %cst_89 = arith.constant dense<0.000000e+00> : vector<8x128xf32>
    %106 = tpu.matmul %103, %105, %cst_89 {dimension_numbers = #tpu.dot_dimension_numbers<[1], [0], [0], [1], [0, 0, 1, 1], [], []>} : vector<8x80xbf16>, vector<80x128xbf16>, vector<8x128xf32> -> vector<8x128xf32>
    %107 = arith.addf %99, %106 : vector<8x128xf32>
    %c2_90 = arith.constant 2 : index
    %c0_91 = arith.constant 0 : index
    %c0_92 = arith.constant 0 : index
    %108 = vector.load %arg10[%c2_90, %c0_91, %c0_92] : memref<5x8x40xbf16, #tpu.memory_space<vmem>>, vector<1x8x40xbf16>
    %109 = vector.shape_cast %108 : vector<1x8x40xbf16> to vector<8x40xbf16>
    %cst_93 = arith.constant dense<0.000000e+00> : vector<8x80xf32>
    %110 = tpu.matmul %109, %92, %cst_93 {dimension_numbers = #tpu.dot_dimension_numbers<[1], [0], [0], [1], [0, 0, 1, 1], [], []>} : vector<8x40xbf16>, vector<40x80xbf16>, vector<8x80xf32> -> vector<8x80xf32>
    %111 = arith.truncf %110 : vector<8x80xf32> to vector<8x80xbf16>
    %c2_94 = arith.constant 2 : index
    %c0_95 = arith.constant 0 : index
    %c0_96 = arith.constant 0 : index
    %112 = vector.load %arg11[%c2_94, %c0_95, %c0_96] : memref<5x80x128xbf16, #tpu.memory_space<vmem>>, vector<1x80x128xbf16>
    %113 = vector.shape_cast %112 : vector<1x80x128xbf16> to vector<80x128xbf16>
    %cst_97 = arith.constant dense<0.000000e+00> : vector<8x128xf32>
    %114 = tpu.matmul %111, %113, %cst_97 {dimension_numbers = #tpu.dot_dimension_numbers<[1], [0], [0], [1], [0, 0, 1, 1], [], []>} : vector<8x80xbf16>, vector<80x128xbf16>, vector<8x128xf32> -> vector<8x128xf32>
    %115 = arith.addf %107, %114 : vector<8x128xf32>
    %c3_98 = arith.constant 3 : index
    %c0_99 = arith.constant 0 : index
    %c0_100 = arith.constant 0 : index
    %116 = vector.load %arg10[%c3_98, %c0_99, %c0_100] : memref<5x8x40xbf16, #tpu.memory_space<vmem>>, vector<1x8x40xbf16>
    %117 = vector.shape_cast %116 : vector<1x8x40xbf16> to vector<8x40xbf16>
    %cst_101 = arith.constant dense<0.000000e+00> : vector<8x80xf32>
    %118 = tpu.matmul %117, %92, %cst_101 {dimension_numbers = #tpu.dot_dimension_numbers<[1], [0], [0], [1], [0, 0, 1, 1], [], []>} : vector<8x40xbf16>, vector<40x80xbf16>, vector<8x80xf32> -> vector<8x80xf32>
    %119 = arith.truncf %118 : vector<8x80xf32> to vector<8x80xbf16>
    %c3_102 = arith.constant 3 : index
    %c0_103 = arith.constant 0 : index
    %c0_104 = arith.constant 0 : index
    %120 = vector.load %arg11[%c3_102, %c0_103, %c0_104] : memref<5x80x128xbf16, #tpu.memory_space<vmem>>, vector<1x80x128xbf16>
    %121 = vector.shape_cast %120 : vector<1x80x128xbf16> to vector<80x128xbf16>
    %cst_105 = arith.constant dense<0.000000e+00> : vector<8x128xf32>
    %122 = tpu.matmul %119, %121, %cst_105 {dimension_numbers = #tpu.dot_dimension_numbers<[1], [0], [0], [1], [0, 0, 1, 1], [], []>} : vector<8x80xbf16>, vector<80x128xbf16>, vector<8x128xf32> -> vector<8x128xf32>
    %123 = arith.addf %115, %122 : vector<8x128xf32>
    %c4_106 = arith.constant 4 : index
    %c0_107 = arith.constant 0 : index
    %c0_108 = arith.constant 0 : index
    %124 = vector.load %arg10[%c4_106, %c0_107, %c0_108] : memref<5x8x40xbf16, #tpu.memory_space<vmem>>, vector<1x8x40xbf16>
    %125 = vector.shape_cast %124 : vector<1x8x40xbf16> to vector<8x40xbf16>
    %cst_109 = arith.constant dense<0.000000e+00> : vector<8x80xf32>
    %126 = tpu.matmul %125, %92, %cst_109 {dimension_numbers = #tpu.dot_dimension_numbers<[1], [0], [0], [1], [0, 0, 1, 1], [], []>} : vector<8x40xbf16>, vector<40x80xbf16>, vector<8x80xf32> -> vector<8x80xf32>
    %127 = arith.truncf %126 : vector<8x80xf32> to vector<8x80xbf16>
    %c4_110 = arith.constant 4 : index
    %c0_111 = arith.constant 0 : index
    %c0_112 = arith.constant 0 : index
    %128 = vector.load %arg11[%c4_110, %c0_111, %c0_112] : memref<5x80x128xbf16, #tpu.memory_space<vmem>>, vector<1x80x128xbf16>
    %129 = vector.shape_cast %128 : vector<1x80x128xbf16> to vector<80x128xbf16>
    %cst_113 = arith.constant dense<0.000000e+00> : vector<8x128xf32>
    %130 = tpu.matmul %127, %129, %cst_113 {dimension_numbers = #tpu.dot_dimension_numbers<[1], [0], [0], [1], [0, 0, 1, 1], [], []>} : vector<8x80xbf16>, vector<80x128xbf16>, vector<8x128xf32> -> vector<8x128xf32>
    %131 = arith.addf %123, %130 : vector<8x128xf32>
    %c0_114 = arith.constant 0 : index
    %c0_115 = arith.constant 0 : index
    %132 = vector.load %arg12[%c0_114, %c0_115] : memref<1x128xf32, #tpu.memory_space<vmem>>, vector<1x128xf32>
    %133 = vector.broadcast %132 : vector<1x128xf32> to vector<8x128xf32>
    %134 = arith.addf %131, %133 : vector<8x128xf32>
    %cst_116 = arith.constant 0.000000e+00 : f32
    %135 = vector.broadcast %cst_116 : f32 to vector<8x128xf32>
    %136 = arith.maximumf %134, %135 : vector<8x128xf32>
    %137 = arith.truncf %136 : vector<8x128xf32> to vector<8x128xbf16>
    %c0_117 = arith.constant 0 : index
    %c0_118 = arith.constant 0 : index
    %138 = vector.load %arg13[%c0_117, %c0_118] : memref<128x128xbf16, #tpu.memory_space<vmem>>, vector<128x128xbf16>
    %cst_119 = arith.constant dense<0.000000e+00> : vector<8x128xf32>
    %139 = tpu.matmul %137, %138, %cst_119 {dimension_numbers = #tpu.dot_dimension_numbers<[1], [0], [0], [1], [0, 0, 1, 1], [], []>} : vector<8x128xbf16>, vector<128x128xbf16>, vector<8x128xf32> -> vector<8x128xf32>
    %c0_120 = arith.constant 0 : index
    %c0_121 = arith.constant 0 : index
    %140 = vector.load %arg14[%c0_120, %c0_121] : memref<1x128xf32, #tpu.memory_space<vmem>>, vector<1x128xf32>
    %141 = vector.broadcast %140 : vector<1x128xf32> to vector<8x128xf32>
    %142 = arith.addf %139, %141 : vector<8x128xf32>
    %cst_122 = arith.constant 0.000000e+00 : f32
    %143 = vector.broadcast %cst_122 : f32 to vector<8x128xf32>
    %144 = arith.maximumf %142, %143 : vector<8x128xf32>
    %145 = arith.truncf %144 : vector<8x128xf32> to vector<8x128xbf16>
    %c0_123 = arith.constant 0 : index
    %c0_124 = arith.constant 0 : index
    %146 = vector.load %arg15[%c0_123, %c0_124] : memref<128x128xbf16, #tpu.memory_space<vmem>>, vector<128x128xbf16>
    %cst_125 = arith.constant dense<0.000000e+00> : vector<8x128xf32>
    %147 = tpu.matmul %145, %146, %cst_125 {dimension_numbers = #tpu.dot_dimension_numbers<[1], [0], [0], [1], [0, 0, 1, 1], [], []>} : vector<8x128xbf16>, vector<128x128xbf16>, vector<8x128xf32> -> vector<8x128xf32>
    %c0_126 = arith.constant 0 : index
    %c0_127 = arith.constant 0 : index
    %148 = vector.load %arg16[%c0_126, %c0_127] : memref<1x128xf32, #tpu.memory_space<vmem>>, vector<1x128xf32>
    %149 = vector.broadcast %148 : vector<1x128xf32> to vector<8x128xf32>
    %150 = arith.addf %147, %149 : vector<8x128xf32>
    %c0_128 = arith.constant 0 : index
    %c0_129 = arith.constant 0 : index
    %151 = vector.load %arg17[%c0_128, %c0_129] : memref<8x128xf32, #tpu.memory_space<vmem>>, vector<8x128xf32>
    tpu.vector_store %arg17[%c0_128, %c0_129], %150 {strides = array<i32>} : memref<8x128xf32, #tpu.memory_space<vmem>>, vector<8x128xf32>,
    return
  }
  func.func @transform_0(%arg0: i32) -> (i32, i32) {
    %c0_i32 = arith.constant 0 : i32
    %c0_i32_0 = arith.constant 0 : i32
    return %arg0, %c0_i32 : i32, i32
  }
  func.func @transform_1(%arg0: i32) -> (i32, i32, i32) {
    %c0_i32 = arith.constant 0 : i32
    %c0_i32_0 = arith.constant 0 : i32
    %c0_i32_1 = arith.constant 0 : i32
    %c0_i32_2 = arith.constant 0 : i32
    return %c0_i32, %c0_i32_0, %c0_i32_1 : i32, i32, i32
  }
  func.func @transform_2(%arg0: i32) -> (i32, i32) {
    %c0_i32 = arith.constant 0 : i32
    %c0_i32_0 = arith.constant 0 : i32
    %c0_i32_1 = arith.constant 0 : i32
    return %c0_i32, %c0_i32_0 : i32, i32
  }
  func.func @transform_3(%arg0: i32) -> (i32, i32, i32) {
    %c0_i32 = arith.constant 0 : i32
    %c0_i32_0 = arith.constant 0 : i32
    %c0_i32_1 = arith.constant 0 : i32
    %c0_i32_2 = arith.constant 0 : i32
    return %c0_i32, %c0_i32_0, %c0_i32_1 : i32, i32, i32
  }
  func.func @transform_4(%arg0: i32) -> (i32, i32, i32) {
    %c0_i32 = arith.constant 0 : i32
    %c0_i32_0 = arith.constant 0 : i32
    %c0_i32_1 = arith.constant 0 : i32
    %c0_i32_2 = arith.constant 0 : i32
    return %c0_i32, %c0_i32_0, %c0_i32_1 : i32, i32, i32
  }
  func.func @transform_5(%arg0: i32) -> (i32, i32, i32) {
    %c0_i32 = arith.constant 0 : i32
    %c0_i32_0 = arith.constant 0 : i32
    %c0_i32_1 = arith.constant 0 : i32
    %c0_i32_2 = arith.constant 0 : i32
    return %c0_i32, %c0_i32_0, %c0_i32_1 : i32, i32, i32
  }
  func.func @transform_6(%arg0: i32) -> (i32, i32) {
    %c0_i32 = arith.constant 0 : i32
    %c0_i32_0 = arith.constant 0 : i32
    %c0_i32_1 = arith.constant 0 : i32
    return %c0_i32, %c0_i32_0 : i32, i32
  }
  func.func @transform_7(%arg0: i32) -> (i32, i32, i32) {
    %c0_i32 = arith.constant 0 : i32
    %c0_i32_0 = arith.constant 0 : i32
    %c0_i32_1 = arith.constant 0 : i32
    %c0_i32_2 = arith.constant 0 : i32
    return %c0_i32, %c0_i32_0, %c0_i32_1 : i32, i32, i32
  }
  func.func @transform_8(%arg0: i32) -> (i32, i32, i32) {
    %c0_i32 = arith.constant 0 : i32
    %c0_i32_0 = arith.constant 0 : i32
    %c0_i32_1 = arith.constant 0 : i32
    %c0_i32_2 = arith.constant 0 : i32
    return %c0_i32, %c0_i32_0, %c0_i32_1 : i32, i32, i32
  }
  func.func @transform_9(%arg0: i32) -> (i32, i32, i32) {
    %c0_i32 = arith.constant 0 : i32
    %c0_i32_0 = arith.constant 0 : i32
    %c0_i32_1 = arith.constant 0 : i32
    %c0_i32_2 = arith.constant 0 : i32
    return %c0_i32, %c0_i32_0, %c0_i32_1 : i32, i32, i32
  }
  func.func @transform_10(%arg0: i32) -> (i32, i32, i32) {
    %c0_i32 = arith.constant 0 : i32
    %c0_i32_0 = arith.constant 0 : i32
    %c0_i32_1 = arith.constant 0 : i32
    %c0_i32_2 = arith.constant 0 : i32
    return %c0_i32, %c0_i32_0, %c0_i32_1 : i32, i32, i32
  }
  func.func @transform_11(%arg0: i32) -> (i32, i32) {
    %c0_i32 = arith.constant 0 : i32
    %c0_i32_0 = arith.constant 0 : i32
    %c0_i32_1 = arith.constant 0 : i32
    return %c0_i32, %c0_i32_0 : i32, i32
  }
  func.func @transform_12(%arg0: i32) -> (i32, i32) {
    %c0_i32 = arith.constant 0 : i32
    %c0_i32_0 = arith.constant 0 : i32
    %c0_i32_1 = arith.constant 0 : i32
    return %c0_i32, %c0_i32_0 : i32, i32
  }
  func.func @transform_13(%arg0: i32) -> (i32, i32) {
    %c0_i32 = arith.constant 0 : i32
    %c0_i32_0 = arith.constant 0 : i32
    %c0_i32_1 = arith.constant 0 : i32
    return %c0_i32, %c0_i32_0 : i32, i32
  }
  func.func @transform_14(%arg0: i32) -> (i32, i32) {
    %c0_i32 = arith.constant 0 : i32
    %c0_i32_0 = arith.constant 0 : i32
    %c0_i32_1 = arith.constant 0 : i32
    return %c0_i32, %c0_i32_0 : i32, i32
  }
  func.func @transform_15(%arg0: i32) -> (i32, i32) {
    %c0_i32 = arith.constant 0 : i32
    %c0_i32_0 = arith.constant 0 : i32
    %c0_i32_1 = arith.constant 0 : i32
    return %c0_i32, %c0_i32_0 : i32, i32
  }
  func.func @transform_16(%arg0: i32) -> (i32, i32) {
    %c0_i32 = arith.constant 0 : i32
    %c0_i32_0 = arith.constant 0 : i32
    return %arg0, %c0_i32 : i32, i32
  }
}

</mosaic_0001>

<llo_original>
// kernel: net_forward.1
$region0: #{net_forward.1}
  #allocation0 [shape = 'u32[]', space=smem, size = 0x4, offset = 0x4, fixed_abs, tag = 'smem constant byte address 0x4 - core index']
  #allocation1 [shape = 'u32[144,128]{1,0:T(1,128)}', space=vmem, size = 0x12000, scoped, tag = 'internal scratch']
  %s0 = inlined_call_operand.vmem [shape: bf16[512,96], index: 0, kind: input, shape index: {}]
  %s1 = inlined_call_operand.vmem [shape: bf16[5,96,168], index: 1, kind: input, shape index: {}]
  %s2 = inlined_call_operand.vmem [shape: f32[1,168], index: 2, kind: input, shape index: {}]
  %s3 = inlined_call_operand.vmem [shape: bf16[2,112,252], index: 3, kind: input, shape index: {}]
  %s4 = inlined_call_operand.vmem [shape: bf16[2,168,84], index: 4, kind: input, shape index: {}]
  %s5 = inlined_call_operand.vmem [shape: bf16[5,84,160], index: 5, kind: input, shape index: {}]
  %s6 = inlined_call_operand.vmem [shape: f32[1,160], index: 6, kind: input, shape index: {}]
  %s7 = inlined_call_operand.vmem [shape: bf16[2,40,108], index: 7, kind: input, shape index: {}]
  %s8 = inlined_call_operand.vmem [shape: bf16[2,160,80], index: 8, kind: input, shape index: {}]
  %s9 = inlined_call_operand.vmem [shape: bf16[5,8,40], index: 9, kind: input, shape index: {}]
  %s10 = inlined_call_operand.vmem [shape: bf16[5,80,128], index: 10, kind: input, shape index: {}]
  %s11 = inlined_call_operand.vmem [shape: f32[1,128], index: 11, kind: input, shape index: {}]
  %s12 = inlined_call_operand.vmem [shape: bf16[128,128], index: 12, kind: input, shape index: {}]
  %s13 = inlined_call_operand.vmem [shape: f32[1,128], index: 13, kind: input, shape index: {}]
  %s14 = inlined_call_operand.vmem [shape: bf16[128,128], index: 14, kind: input, shape index: {}]
  %s15 = inlined_call_operand.vmem [shape: f32[1,128], index: 15, kind: input, shape index: {}]
  %s16 = inlined_call_operand.hbm [shape: f32[16,128], index: 16, kind: output, shape index: {}]
  %s17 = sld [smem:[#allocation0]]
  $region97: #{net_forward.1} parent=0
    _
  %s19 = ssub.s32 1, %s17
  %s20 = scalar_select 0, %s19, %s17
  $region1: #{net_forward.1} parent=0
    #allocation2 [shape = 'u8[8192]{0}', space=vmem, size = 0x2000, scoped, tag = 'output window, operand 0']
    #allocation3 [shape = 's32[2]{0}', space=sflag, size = 0x8, scoped, tag = 'scoped memory for net_forward.1']
    %21 = vsyncpa [#allocation3], 0
    %s22 = scalar_lea.sflag [#allocation3], 1
    %23 = vsyncpa %s22, 0
    loop: start=0, step=1, limit=4
    $region2: #{net_forward.1} parent=1 // loop_pre_header
      _
    $region3: #{net_forward.1} parent=1 // loop_header
      %s25 = sphi 0, %s29
      %p26 = scmp.ge.s32.totalorder %s25, 4
      %s35 = sphi 0, %s37
      %s38 = sphi 0, %s35
      %s39 = sphi 0, %s38
      %s55 = sphi 0, %s39
      %s59 = sphi 0, %s59
      %s61 = sphi 0, %s59
      %s62 = sphi 0, %s61
      %s76 = sphi 0, %s62
      %s80 = sphi 0, %s80
      %s82 = sphi 0, %s80
      %s83 = sphi 0, %s82
      %s97 = sphi 0, %s83
      %s101 = sphi 0, %s101
      %s103 = sphi 0, %s101
      %s104 = sphi 0, %s103
      %s118 = sphi 0, %s104
      %s122 = sphi 0, %s122
      %s124 = sphi 0, %s122
      %s125 = sphi 0, %s124
      %s139 = sphi 0, %s125
      %s143 = sphi 0, %s143
      %s145 = sphi 0, %s143
      %s146 = sphi 0, %s145
      %s160 = sphi 0, %s146
      %s164 = sphi 0, %s164
      %s166 = sphi 0, %s164
      %s167 = sphi 0, %s166
      %s181 = sphi 0, %s167
      %s185 = sphi 0, %s185
      %s187 = sphi 0, %s185
      %s188 = sphi 0, %s187
      %s202 = sphi 0, %s188
      %s206 = sphi 0, %s206
      %s208 = sphi 0, %s206
      %s209 = sphi 0, %s208
      %s223 = sphi 0, %s209
      %s227 = sphi 0, %s227
      %s229 = sphi 0, %s227
      %s230 = sphi 0, %s229
      %s244 = sphi 0, %s230
      %s248 = sphi 0, %s248
      %s250 = sphi 0, %s248
      %s251 = sphi 0, %s250
      %s265 = sphi 0, %s251
      %s269 = sphi 0, %s269
      %s271 = sphi 0, %s269
      %s272 = sphi 0, %s271
      %s286 = sphi 0, %s272
      %s290 = sphi 0, %s290
      %s292 = sphi 0, %s290
      %s293 = sphi 0, %s292
      %s307 = sphi 0, %s293
      %s311 = sphi 0, %s311
      %s313 = sphi 0, %s311
      %s314 = sphi 0, %s313
      %s328 = sphi 0, %s314
      %s332 = sphi 0, %s332
      %s334 = sphi 0, %s332
      %s335 = sphi 0, %s334
      %s349 = sphi 0, %s335
      %s353 = sphi 0, %s353
      %s355 = sphi 0, %s353
      %s356 = sphi 0, %s355
      %s370 = sphi 0, %s356
      %s376 = sphi 0, %s378
      %s379 = sphi 0, %s376
      %s380 = sphi 0, %s379
      %s396 = sphi 0, %s380
    $region4: #{net_forward.1} parent=1 // loop_header_branch
      %28 = sbr.rel (%p26) target = $region8
    $region5: #{net_forward.1} parent=1 // loop_body
      %s30 = ssub.s32 %s25, 1
      %s31 = ssub.s32 %s25, 2
      %s32 = sadd.s32 %s25, 1
      %s33 = ssub.s32 %s25, %s32
      %p34 = scmp.eq.s32.totalorder %s33, 0
      %s36 = sadd.s32 %s35, 1
      %s37 = scalar_select %p34, %s35, %s36
      %p40 = pneg %p34
      %p41 = scmp.eq.s32.totalorder %s25, 1
      %p42 = por %p40, %p41
      %p43 = scmp.ne.s32.totalorder %s35, %s38
      %p44 = scmp.eq.s32.totalorder %s25, 0
      %p45 = por %p43, %p44
      %p46 = scmp.ne.s32.totalorder %s35, %s38
      %p47 = scmp.eq.s32.totalorder %s30, 1
      %p48 = por %p46, %p47
      %p49 = scmp.ne.s32.totalorder %s38, %s39
      %p50 = scmp.eq.s32.totalorder %s30, 0
      %p51 = por %p49, %p50
      %p52 = scmp.ne.s32.totalorder %s38, %s39
      %p53 = scmp.eq.s32.totalorder %s31, 1
      %p54 = por %p52, %p53
      %p56 = scmp.ne.s32.totalorder %s39, %s55
      %p57 = scmp.eq.s32.totalorder %s31, 0
      %p58 = por %p56, %p57
      %s60 = sadd.s32 %s59, 1
      %p63 = scmp.eq.s32.totalorder %s25, 1
      %p64 = scmp.ne.s32.totalorder %s59, %s61
      %p65 = scmp.eq.s32.totalorder %s25, 0
      %p66 = por %p64, %p65
      %p67 = scmp.ne.s32.totalorder %s59, %s61
      %p68 = scmp.eq.s32.totalorder %s30, 1
      %p69 = por %p67, %p68
      %p70 = scmp.ne.s32.totalorder %s61, %s62
      %p71 = scmp.eq.s32.totalorder %s30, 0
      %p72 = por %p70, %p71
      %p73 = scmp.ne.s32.totalorder %s61, %s62
      %p74 = scmp.eq.s32.totalorder %s31, 1
      %p75 = por %p73, %p74
      %p77 = scmp.ne.s32.totalorder %s62, %s76
      %p78 = scmp.eq.s32.totalorder %s31, 0
      %p79 = por %p77, %p78
      %s81 = sadd.s32 %s80, 1
      %p84 = scmp.eq.s32.totalorder %s25, 1
      %p85 = scmp.ne.s32.totalorder %s80, %s82
      %p86 = scmp.eq.s32.totalorder %s25, 0
      %p87 = por %p85, %p86
      %p88 = scmp.ne.s32.totalorder %s80, %s82
      %p89 = scmp.eq.s32.totalorder %s30, 1
      %p90 = por %p88, %p89
      %p91 = scmp.ne.s32.totalorder %s82, %s83
      %p92 = scmp.eq.s32.totalorder %s30, 0
      %p93 = por %p91, %p92
      %p94 = scmp.ne.s32.totalorder %s82, %s83
      %p95 = scmp.eq.s32.totalorder %s31, 1
      %p96 = por %p94, %p95
      %p98 = scmp.ne.s32.totalorder %s83, %s97
      %p99 = scmp.eq.s32.totalorder %s31, 0
      %p100 = por %p98, %p99
      %s102 = sadd.s32 %s101, 1
      %p105 = scmp.eq.s32.totalorder %s25, 1
      %p106 = scmp.ne.s32.totalorder %s101, %s103
      %p107 = scmp.eq.s32.totalorder %s25, 0
      %p108 = por %p106, %p107
      %p109 = scmp.ne.s32.totalorder %s101, %s103
      %p110 = scmp.eq.s32.totalorder %s30, 1
      %p111 = por %p109, %p110
      %p112 = scmp.ne.s32.totalorder %s103, %s104
      %p113 = scmp.eq.s32.totalorder %s30, 0
      %p114 = por %p112, %p113
      %p115 = scmp.ne.s32.totalorder %s103, %s104
      %p116 = scmp.eq.s32.totalorder %s31, 1
      %p117 = por %p115, %p116
      %p119 = scmp.ne.s32.totalorder %s104, %s118
      %p120 = scmp.eq.s32.totalorder %s31, 0
      %p121 = por %p119, %p120
      %s123 = sadd.s32 %s122, 1
      %p126 = scmp.eq.s32.totalorder %s25, 1
      %p127 = scmp.ne.s32.totalorder %s122, %s124
      %p128 = scmp.eq.s32.totalorder %s25, 0
      %p129 = por %p127, %p128
      %p130 = scmp.ne.s32.totalorder %s122, %s124
      %p131 = scmp.eq.s32.totalorder %s30, 1
      %p132 = por %p130, %p131
      %p133 = scmp.ne.s32.totalorder %s124, %s125
      %p134 = scmp.eq.s32.totalorder %s30, 0
      %p135 = por %p133, %p134
      %p136 = scmp.ne.s32.totalorder %s124, %s125
      %p137 = scmp.eq.s32.totalorder %s31, 1
      %p138 = por %p136, %p137
      %p140 = scmp.ne.s32.totalorder %s125, %s139
      %p141 = scmp.eq.s32.totalorder %s31, 0
      %p142 = por %p140, %p141
      %s144 = sadd.s32 %s143, 1
      %p147 = scmp.eq.s32.totalorder %s25, 1
      %p148 = scmp.ne.s32.totalorder %s143, %s145
      %p149 = scmp.eq.s32.totalorder %s25, 0
      %p150 = por %p148, %p149
      %p151 = scmp.ne.s32.totalorder %s143, %s145
      %p152 = scmp.eq.s32.totalorder %s30, 1
      %p153 = por %p151, %p152
      %p154 = scmp.ne.s32.totalorder %s145, %s146
      %p155 = scmp.eq.s32.totalorder %s30, 0
      %p156 = por %p154, %p155
      %p157 = scmp.ne.s32.totalorder %s145, %s146
      %p158 = scmp.eq.s32.totalorder %s31, 1
      %p159 = por %p157, %p158
      %p161 = scmp.ne.s32.totalorder %s146, %s160
      %p162 = scmp.eq.s32.totalorder %s31, 0
      %p163 = por %p161, %p162
      %s165 = sadd.s32 %s164, 1
      %p168 = scmp.eq.s32.totalorder %s25, 1
      %p169 = scmp.ne.s32.totalorder %s164, %s166
      %p170 = scmp.eq.s32.totalorder %s25, 0
      %p171 = por %p169, %p170
      %p172 = scmp.ne.s32.totalorder %s164, %s166
      %p173 = scmp.eq.s32.totalorder %s30, 1
      %p174 = por %p172, %p173
      %p175 = scmp.ne.s32.totalorder %s166, %s167
      %p176 = scmp.eq.s32.totalorder %s30, 0
      %p177 = por %p175, %p176
      %p178 = scmp.ne.s32.totalorder %s166, %s167
      %p179 = scmp.eq.s32.totalorder %s31, 1
      %p180 = por %p178, %p179
      %p182 = scmp.ne.s32.totalorder %s167, %s181
      %p183 = scmp.eq.s32.totalorder %s31, 0
      %p184 = por %p182, %p183
      %s186 = sadd.s32 %s185, 1
      %p189 = scmp.eq.s32.totalorder %s25, 1
      %p190 = scmp.ne.s32.totalorder %s185, %s187
      %p191 = scmp.eq.s32.totalorder %s25, 0
      %p192 = por %p190, %p191
      %p193 = scmp.ne.s32.totalorder %s185, %s187
      %p194 = scmp.eq.s32.totalorder %s30, 1
      %p195 = por %p193, %p194
      %p196 = scmp.ne.s32.totalorder %s187, %s188
      %p197 = scmp.eq.s32.totalorder %s30, 0
      %p198 = por %p196, %p197
      %p199 = scmp.ne.s32.totalorder %s187, %s188
      %p200 = scmp.eq.s32.totalorder %s31, 1
      %p201 = por %p199, %p200
      %p203 = scmp.ne.s32.totalorder %s188, %s202
      %p204 = scmp.eq.s32.totalorder %s31, 0
      %p205 = por %p203, %p204
      %s207 = sadd.s32 %s206, 1
      %p210 = scmp.eq.s32.totalorder %s25, 1
      %p211 = scmp.ne.s32.totalorder %s206, %s208
      %p212 = scmp.eq.s32.totalorder %s25, 0
      %p213 = por %p211, %p212
      %p214 = scmp.ne.s32.totalorder %s206, %s208
      %p215 = scmp.eq.s32.totalorder %s30, 1
      %p216 = por %p214, %p215
      %p217 = scmp.ne.s32.totalorder %s208, %s209
      %p218 = scmp.eq.s32.totalorder %s30, 0
      %p219 = por %p217, %p218
      %p220 = scmp.ne.s32.totalorder %s208, %s209
      %p221 = scmp.eq.s32.totalorder %s31, 1
      %p222 = por %p220, %p221
      %p224 = scmp.ne.s32.totalorder %s209, %s223
      %p225 = scmp.eq.s32.totalorder %s31, 0
      %p226 = por %p224, %p225
      %s228 = sadd.s32 %s227, 1
      %p231 = scmp.eq.s32.totalorder %s25, 1
      %p232 = scmp.ne.s32.totalorder %s227, %s229
      %p233 = scmp.eq.s32.totalorder %s25, 0
      %p234 = por %p232, %p233
      %p235 = scmp.ne.s32.totalorder %s227, %s229
      %p236 = scmp.eq.s32.totalorder %s30, 1
      %p237 = por %p235, %p236
      %p238 = scmp.ne.s32.totalorder %s229, %s230
      %p239 = scmp.eq.s32.totalorder %s30, 0
      %p240 = por %p238, %p239
      %p241 = scmp.ne.s32.totalorder %s229, %s230
      %p242 = scmp.eq.s32.totalorder %s31, 1
      %p243 = por %p241, %p242
      %p245 = scmp.ne.s32.totalorder %s230, %s244
      %p246 = scmp.eq.s32.totalorder %s31, 0
      %p247 = por %p245, %p246
      %s249 = sadd.s32 %s248, 1
      %p252 = scmp.eq.s32.totalorder %s25, 1
      %p253 = scmp.ne.s32.totalorder %s248, %s250
      %p254 = scmp.eq.s32.totalorder %s25, 0
      %p255 = por %p253, %p254
      %p256 = scmp.ne.s32.totalorder %s248, %s250
      %p257 = scmp.eq.s32.totalorder %s30, 1
      %p258 = por %p256, %p257
      %p259 = scmp.ne.s32.totalorder %s250, %s251
      %p260 = scmp.eq.s32.totalorder %s30, 0
      %p261 = por %p259, %p260
      %p262 = scmp.ne.s32.totalorder %s250, %s251
      %p263 = scmp.eq.s32.totalorder %s31, 1
      %p264 = por %p262, %p263
      %p266 = scmp.ne.s32.totalorder %s251, %s265
      %p267 = scmp.eq.s32.totalorder %s31, 0
      %p268 = por %p266, %p267
      %s270 = sadd.s32 %s269, 1
      %p273 = scmp.eq.s32.totalorder %s25, 1
      %p274 = scmp.ne.s32.totalorder %s269, %s271
      %p275 = scmp.eq.s32.totalorder %s25, 0
      %p276 = por %p274, %p275
      %p277 = scmp.ne.s32.totalorder %s269, %s271
      %p278 = scmp.eq.s32.totalorder %s30, 1
      %p279 = por %p277, %p278
      %p280 = scmp.ne.s32.totalorder %s271, %s272
      %p281 = scmp.eq.s32.totalorder %s30, 0
      %p282 = por %p280, %p281
      %p283 = scmp.ne.s32.totalorder %s271, %s272
      %p284 = scmp.eq.s32.totalorder %s31, 1
      %p285 = por %p283, %p284
      %p287 = scmp.ne.s32.totalorder %s272, %s286
      %p288 = scmp.eq.s32.totalorder %s31, 0
      %p289 = por %p287, %p288
      %s291 = sadd.s32 %s290, 1
      %p294 = scmp.eq.s32.totalorder %s25, 1
      %p295 = scmp.ne.s32.totalorder %s290, %s292
      %p296 = scmp.eq.s32.totalorder %s25, 0
      %p297 = por %p295, %p296
      %p298 = scmp.ne.s32.totalorder %s290, %s292
      %p299 = scmp.eq.s32.totalorder %s30, 1
      %p300 = por %p298, %p299
      %p301 = scmp.ne.s32.totalorder %s292, %s293
      %p302 = scmp.eq.s32.totalorder %s30, 0
      %p303 = por %p301, %p302
      %p304 = scmp.ne.s32.totalorder %s292, %s293
      %p305 = scmp.eq.s32.totalorder %s31, 1
      %p306 = por %p304, %p305
      %p308 = scmp.ne.s32.totalorder %s293, %s307
      %p309 = scmp.eq.s32.totalorder %s31, 0
      %p310 = por %p308, %p309
      %s312 = sadd.s32 %s311, 1
      %p315 = scmp.eq.s32.totalorder %s25, 1
      %p316 = scmp.ne.s32.totalorder %s311, %s313
      %p317 = scmp.eq.s32.totalorder %s25, 0
      %p318 = por %p316, %p317
      %p319 = scmp.ne.s32.totalorder %s311, %s313
      %p320 = scmp.eq.s32.totalorder %s30, 1
      %p321 = por %p319, %p320
      %p322 = scmp.ne.s32.totalorder %s313, %s314
      %p323 = scmp.eq.s32.totalorder %s30, 0
      %p324 = por %p322, %p323
      %p325 = scmp.ne.s32.totalorder %s313, %s314
      %p326 = scmp.eq.s32.totalorder %s31, 1
      %p327 = por %p325, %p326
      %p329 = scmp.ne.s32.totalorder %s314, %s328
      %p330 = scmp.eq.s32.totalorder %s31, 0
      %p331 = por %p329, %p330
      %s333 = sadd.s32 %s332, 1
      %p336 = scmp.eq.s32.totalorder %s25, 1
      %p337 = scmp.ne.s32.totalorder %s332, %s334
      %p338 = scmp.eq.s32.totalorder %s25, 0
      %p339 = por %p337, %p338
      %p340 = scmp.ne.s32.totalorder %s332, %s334
      %p341 = scmp.eq.s32.totalorder %s30, 1
      %p342 = por %p340, %p341
      %p343 = scmp.ne.s32.totalorder %s334, %s335
      %p344 = scmp.eq.s32.totalorder %s30, 0
      %p345 = por %p343, %p344
      %p346 = scmp.ne.s32.totalorder %s334, %s335
      %p347 = scmp.eq.s32.totalorder %s31, 1
      %p348 = por %p346, %p347
      %p350 = scmp.ne.s32.totalorder %s335, %s349
      %p351 = scmp.eq.s32.totalorder %s31, 0
      %p352 = por %p350, %p351
      %s354 = sadd.s32 %s353, 1
      %p357 = scmp.eq.s32.totalorder %s25, 1
      %p358 = scmp.ne.s32.totalorder %s353, %s355
      %p359 = scmp.eq.s32.totalorder %s25, 0
      %p360 = por %p358, %p359
      %p361 = scmp.ne.s32.totalorder %s353, %s355
      %p362 = scmp.eq.s32.totalorder %s30, 1
      %p363 = por %p361, %p362
      %p364 = scmp.ne.s32.totalorder %s355, %s356
      %p365 = scmp.eq.s32.totalorder %s30, 0
      %p366 = por %p364, %p365
      %p367 = scmp.ne.s32.totalorder %s355, %s356
      %p368 = scmp.eq.s32.totalorder %s31, 1
      %p369 = por %p367, %p368
      %p371 = scmp.ne.s32.totalorder %s356, %s370
      %p372 = scmp.eq.s32.totalorder %s31, 0
      %p373 = por %p371, %p372
      %s374 = ssub.s32 %s25, %s32
      %p375 = scmp.eq.s32.totalorder %s374, 0
      %s377 = sadd.s32 %s376, 1
      %s378 = scalar_select %p375, %s376, %s377
      %p381 = pneg %p375
      %p382 = scmp.eq.s32.totalorder %s25, 1
      %p383 = por %p381, %p382
      %p384 = scmp.ne.s32.totalorder %s376, %s379
      %p385 = scmp.eq.s32.totalorder %s25, 0
      %p386 = por %p384, %p385
      %p387 = scmp.ne.s32.totalorder %s376, %s379
      %p388 = scmp.eq.s32.totalorder %s30, 1
      %p389 = por %p387, %p388
      %p390 = scmp.ne.s32.totalorder %s379, %s380
      %p391 = scmp.eq.s32.totalorder %s30, 0
      %p392 = por %p390, %p391
      %p393 = scmp.ne.s32.totalorder %s379, %s380
      %p394 = scmp.eq.s32.totalorder %s31, 1
      %p395 = por %p393, %p394
      %p397 = scmp.ne.s32.totalorder %s380, %s396
      %p398 = scmp.eq.s32.totalorder %s31, 0
      %p399 = por %p397, %p398
      %p400 = scmp.le.s32.totalorder 1, %s25
      %p401 = scmp.lt.s32.totalorder %s25, 3
      %p402 = pnand %p400, %p401
      %p403 = pneg %p402
      // Predicated region
      $region9: #{net_forward.1} parent=5 // pred_check
        _
      $region10: #{net_forward.1} parent=5 // pred_check_branch
        %405 = sbr.rel (%p402) target = $region12
      $region11: #{net_forward.1} parent=5 // pred_region
        %s406 = ssub.s32 %s25, 1
        // Predicated region
        $region13: #{net_forward.1} parent=11 // pred_check
          %p407 = pneg %p72
        $region14: #{net_forward.1} parent=11 // pred_check_branch
          %409 = sbr.rel (%p407) target = $region16
        $region15: #{net_forward.1} parent=11 // pred_region
          _
        $region16: #{net_forward.1} parent=11 // pred_fallthru
          _
        // Predicated region
        $region17: #{net_forward.1} parent=11 // pred_check
          %p410 = pneg %p93
        $region18: #{net_forward.1} parent=11 // pred_check_branch
          %412 = sbr.rel (%p410) target = $region20
        $region19: #{net_forward.1} parent=11 // pred_region
          _
        $region20: #{net_forward.1} parent=11 // pred_fallthru
          _
        // Predicated region
        $region21: #{net_forward.1} parent=11 // pred_check
          %p413 = pneg %p114
        $region22: #{net_forward.1} parent=11 // pred_check_branch
          %415 = sbr.rel (%p413) target = $region24
        $region23: #{net_forward.1} parent=11 // pred_region
          _
        $region24: #{net_forward.1} parent=11 // pred_fallthru
          _
        // Predicated region
        $region25: #{net_forward.1} parent=11 // pred_check
          %p416 = pneg %p135
        $region26: #{net_forward.1} parent=11 // pred_check_branch
          %418 = sbr.rel (%p416) target = $region28
        $region27: #{net_forward.1} parent=11 // pred_region
          _
        $region28: #{net_forward.1} parent=11 // pred_fallthru
          _
        // Predicated region
        $region29: #{net_forward.1} parent=11 // pred_check
          %p419 = pneg %p156
        $region30: #{net_forward.1} parent=11 // pred_check_branch
          %421 = sbr.rel (%p419) target = $region32
        $region31: #{net_forward.1} parent=11 // pred_region
          _
        $region32: #{net_forward.1} parent=11 // pred_fallthru
          _
        // Predicated region
        $region33: #{net_forward.1} parent=11 // pred_check
          %p422 = pneg %p177
        $region34: #{net_forward.1} parent=11 // pred_check_branch
          %424 = sbr.rel (%p422) target = $region36
        $region35: #{net_forward.1} parent=11 // pred_region
          _
        $region36: #{net_forward.1} parent=11 // pred_fallthru
          _
        // Predicated region
        $region37: #{net_forward.1} parent=11 // pred_check
          %p425 = pneg %p198
        $region38: #{net_forward.1} parent=11 // pred_check_branch
          %427 = sbr.rel (%p425) target = $region40
        $region39: #{net_forward.1} parent=11 // pred_region
          _
        $region40: #{net_forward.1} parent=11 // pred_fallthru
          _
        // Predicated region
        $region41: #{net_forward.1} parent=11 // pred_check
          %p428 = pneg %p219
        $region42: #{net_forward.1} parent=11 // pred_check_branch
          %430 = sbr.rel (%p428) target = $region44
        $region43: #{net_forward.1} parent=11 // pred_region
          _
        $region44: #{net_forward.1} parent=11 // pred_fallthru
          _
        // Predicated region
        $region45: #{net_forward.1} parent=11 // pred_check
          %p431 = pneg %p240
        $region46: #{net_forward.1} parent=11 // pred_check_branch
          %433 = sbr.rel (%p431) target = $region48
        $region47: #{net_forward.1} parent=11 // pred_region
          _
        $region48: #{net_forward.1} parent=11 // pred_fallthru
          _
        // Predicated region
        $region49: #{net_forward.1} parent=11 // pred_check
          %p434 = pneg %p261
        $region50: #{net_forward.1} parent=11 // pred_check_branch
          %436 = sbr.rel (%p434) target = $region52
        $region51: #{net_forward.1} parent=11 // pred_region
          _
        $region52: #{net_forward.1} parent=11 // pred_fallthru
          _
        // Predicated region
        $region53: #{net_forward.1} parent=11 // pred_check
          %p437 = pneg %p282
        $region54: #{net_forward.1} parent=11 // pred_check_branch
          %439 = sbr.rel (%p437) target = $region56
        $region55: #{net_forward.1} parent=11 // pred_region
          _
        $region56: #{net_forward.1} parent=11 // pred_fallthru
          _
        // Predicated region
        $region57: #{net_forward.1} parent=11 // pred_check
          %p440 = pneg %p303
        $region58: #{net_forward.1} parent=11 // pred_check_branch
          %442 = sbr.rel (%p440) target = $region60
        $region59: #{net_forward.1} parent=11 // pred_region
          _
        $region60: #{net_forward.1} parent=11 // pred_fallthru
          _
        // Predicated region
        $region61: #{net_forward.1} parent=11 // pred_check
          %p443 = pneg %p324
        $region62: #{net_forward.1} parent=11 // pred_check_branch
          %445 = sbr.rel (%p443) target = $region64
        $region63: #{net_forward.1} parent=11 // pred_region
          _
        $region64: #{net_forward.1} parent=11 // pred_fallthru
          _
        // Predicated region
        $region65: #{net_forward.1} parent=11 // pred_check
          %p446 = pneg %p345
        $region66: #{net_forward.1} parent=11 // pred_check_branch
          %448 = sbr.rel (%p446) target = $region68
        $region67: #{net_forward.1} parent=11 // pred_region
          _
        $region68: #{net_forward.1} parent=11 // pred_fallthru
          _
        // Predicated region
        $region69: #{net_forward.1} parent=11 // pred_check
          %p449 = pneg %p366
        $region70: #{net_forward.1} parent=11 // pred_check_branch
          %451 = sbr.rel (%p449) target = $region72
        $region71: #{net_forward.1} parent=11 // pred_region
          _
        $region72: #{net_forward.1} parent=11 // pred_fallthru
          _
      $region12: #{net_forward.1} parent=5 // pred_fallthru
        _
      %p452 = scmp.lt.s32.totalorder %s25, 2
      // Predicated region
      $region73: #{net_forward.1} parent=5 // pred_check
        %p453 = pneg %p452
      $region74: #{net_forward.1} parent=5 // pred_check_branch
        %455 = sbr.rel (%p453) target = $region76
      $region75: #{net_forward.1} parent=5 // pred_region
        // Predicated region
        $region77: #{net_forward.1} parent=75 // pred_check
          %p456 = pneg %p45
        $region78: #{net_forward.1} parent=75 // pred_check_branch
          %458 = sbr.rel (%p456) target = $region80
        $region79: #{net_forward.1} parent=75 // pred_region
          %s459 = smul.u32 32, %s25
          %p460 = scmp.lt.s32.totalorder %s459, 63
          %s461 = scalar_select %p460, %s459, 63
          %s462 = smul.addr %s461, 4
          %s463 = scalar_lea.vmem %s0, %s462
          %s464 = smul.u32 32, %s25
        $region80: #{net_forward.1} parent=75 // pred_fallthru
          _
      $region76: #{net_forward.1} parent=5 // pred_fallthru
        _
      %p465 = scmp.le.s32.totalorder 1, %s25
      %p466 = scmp.lt.s32.totalorder %s25, 3
      %p467 = pnand %p465, %p466
      %p468 = pneg %p467
      // Predicated region
      $region81: #{net_forward.1} parent=5 // pred_check
        _
      $region82: #{net_forward.1} parent=5 // pred_check_branch
        %470 = sbr.rel (%p467) target = $region84
      $region83: #{net_forward.1} parent=5 // pred_region
        %s471 = ssub.s32 %s25, 1
        %s472 = smul.u32 32, %s30
        %p473 = scmp.lt.s32.totalorder %s472, 63
        %s474 = scalar_select %p473, %s472, 63
        %s475 = smul.addr %s474, 4
        %s476 = scalar_lea.vmem %s0, %s475
        %p477 = pneg %p51
        %p478 = pneg %p48
        %p479 = pneg %p72
        %p480 = pneg %p69
        %p481 = pneg %p93
        %p482 = pneg %p90
        %p483 = pneg %p114
        %p484 = pneg %p111
        %p485 = pneg %p135
        %p486 = pneg %p132
        %p487 = pneg %p156
        %p488 = pneg %p153
        %p489 = pneg %p177
        %p490 = pneg %p174
        %p491 = pneg %p198
        %p492 = pneg %p195
        %p493 = pneg %p219
        %p494 = pneg %p216
        %p495 = pneg %p240
        %p496 = pneg %p237
        %p497 = pneg %p261
        %p498 = pneg %p258
        %p499 = pneg %p282
        %p500 = pneg %p279
        %p501 = pneg %p303
        %p502 = pneg %p300
        %p503 = pneg %p324
        %p504 = pneg %p321
        %p505 = pneg %p345
        %p506 = pneg %p342
        %p507 = pneg %p366
        %p508 = pneg %p363
        %p509 = pneg %p392
        %p510 = pneg %p389
        %s511 = sand.u32 %s379, 1
        %s512 = scalar_lea.sflag [#allocation3], %s511
        %s513 = sand.u32 %s379, 1
        %s514 = smul.addr %s513, 8
        %s515 = scalar_lea.vmem [#allocation2], %s514
        %s516 = smul.u32 32, %s30
        %p517 = scmp.lt.s32.totalorder %s516, 63
        %s518 = scalar_select %p517, %s516, 63
        %s519 = smul.addr %s518, 4
        %s520 = scalar_lea.vmem %s0, %s519
        %s521 = smul.u32 32, %s30
        %v523 = vld [vmem:[%s520] sm:$0xf]
        %v524 = vld [vmem:[%s520 + $0x4] sm:$0xf]
        %v525 = vld [vmem:[%s520 + $0x8] sm:$0xf]
        %v526 = vld [vmem:[%s520 + $0xc] sm:$0xf]
        %v527 = vld [vmem:[%s520 + $0x10] sm:$0xf]
        %v528 = vld [vmem:[%s520 + $0x14] sm:$0xf]
        %v529 = vld [vmem:[%s520 + $0x18] sm:$0xf]
        %v530 = vld [vmem:[%s520 + $0x1c] sm:$0xf]
        %v531 = vld [vmem:[%s520 + $0x20] sm:$0xf]
        %v532 = vld [vmem:[%s520 + $0x24] sm:$0xf]
        %v533 = vld [vmem:[%s520 + $0x28] sm:$0xf]
        %v534 = vld [vmem:[%s520 + $0x2c] sm:$0xf]
        %v535 = vld [vmem:[%s520 + $0x30] sm:$0xf]
        %v536 = vld [vmem:[%s520 + $0x34] sm:$0xf]
        %v537 = vld [vmem:[%s520 + $0x38] sm:$0xf]
        %v538 = vld [vmem:[%s520 + $0x3c] sm:$0xf]
        %v539 = vld [vmem:[%s520 + $0x40] sm:$0xf]
        %v540 = vld [vmem:[%s520 + $0x44] sm:$0xf]
        %v541 = vld [vmem:[%s520 + $0x48] sm:$0xf]
        %v542 = vld [vmem:[%s520 + $0x4c] sm:$0xf]
        %v543 = vld [vmem:[%s520 + $0x50] sm:$0xf]
        %v544 = vld [vmem:[%s520 + $0x54] sm:$0xf]
        %v545 = vld [vmem:[%s520 + $0x58] sm:$0xf]
        %v546 = vld [vmem:[%s520 + $0x5c] sm:$0xf]
        %v547 = vld [vmem:[%s520 + $0x60] sm:$0xf]
        %v548 = vld [vmem:[%s520 + $0x64] sm:$0xf]
        %v549 = vld [vmem:[%s520 + $0x68] sm:$0xf]
        %v550 = vld [vmem:[%s520 + $0x6c] sm:$0xf]
        %v551 = vld [vmem:[%s520 + $0x70] sm:$0xf]
        %v552 = vld [vmem:[%s520 + $0x74] sm:$0xf]
        %v553 = vld [vmem:[%s520 + $0x78] sm:$0xf]
        %v554 = vld [vmem:[%s520 + $0x7c] sm:$0xf]
        %v555 = vld [vmem:[%s1] sm:$0xff]
        %v556 = vld [vmem:[%s1 + $0x8] sm:$0xff]
        %v557 = vld [vmem:[%s1 + $0x10] sm:$0xff]
        %v558 = vld [vmem:[%s1 + $0x18] sm:$0xff]
        %v559 = vld [vmem:[%s1 + $0x20] sm:$0xff]
        %v560 = vld [vmem:[%s1 + $0x28] sm:$0xff]
        %v561 = vld [vmem:[%s1 + $0x30] sm:$0xff]
        %v562 = vld [vmem:[%s1 + $0x38] sm:$0xff]
        %v563 = vld [vmem:[%s1 + $0x40] sm:$0xff]
        %v564 = vld [vmem:[%s1 + $0x48] sm:$0xff]
        %v565 = vld [vmem:[%s1 + $0x50] sm:$0xff]
        %v566 = vld [vmem:[%s1 + $0x58] sm:$0xff]
        %s567 = scalar_lea.vmem %s1, 96
        %v568 = vld [vmem:[%s567] sm:$0xff]
        %v569 = vld [vmem:[%s567 + $0x8] sm:$0xff]
        %v570 = vld [vmem:[%s567 + $0x10] sm:$0xff]
        %v571 = vld [vmem:[%s567 + $0x18] sm:$0xff]
        %v572 = vld [vmem:[%s567 + $0x20] sm:$0xff]
        %v573 = vld [vmem:[%s567 + $0x28] sm:$0xff]
        %v574 = vld [vmem:[%s567 + $0x30] sm:$0xff]
        %v575 = vld [vmem:[%s567 + $0x38] sm:$0xff]
        %v576 = vld [vmem:[%s567 + $0x40] sm:$0xff]
        %v577 = vld [vmem:[%s567 + $0x48] sm:$0xff]
        %v578 = vld [vmem:[%s567 + $0x50] sm:$0xff]
        %v579 = vld [vmem:[%s567 + $0x58] sm:$0xff]
        %v612 = vunpack.c.l.b16 %v523
        %v613 = vunpack.c.l.b16 %v524
        %v614 = vunpack.c.l.b16 %v525
        %v615 = vunpack.c.l.b16 %v526
        %v616 = vunpack.c.l.b16 %v527
        %v617 = vunpack.c.l.b16 %v528
        %v618 = vunpack.c.l.b16 %v529
        %v619 = vunpack.c.l.b16 %v530
        %v620 = vunpack.c.l.b16 %v531
        %v621 = vunpack.c.l.b16 %v532
        %v622 = vunpack.c.l.b16 %v533
        %v623 = vunpack.c.l.b16 %v534
        %v624 = vunpack.c.l.b16 %v535
        %v625 = vunpack.c.l.b16 %v536
        %v626 = vunpack.c.l.b16 %v537
        %v627 = vunpack.c.l.b16 %v538
        %v628 = vunpack.c.l.b16 %v539
        %v629 = vunpack.c.l.b16 %v540
        %v630 = vunpack.c.l.b16 %v541
        %v631 = vunpack.c.l.b16 %v542
        %v632 = vunpack.c.l.b16 %v543
        %v633 = vunpack.c.l.b16 %v544
        %v634 = vunpack.c.l.b16 %v545
        %v635 = vunpack.c.l.b16 %v546
        %v636 = vunpack.c.l.b16 %v547
        %v637 = vunpack.c.l.b16 %v548
        %v638 = vunpack.c.l.b16 %v549
        %v639 = vunpack.c.l.b16 %v550
        %v640 = vunpack.c.l.b16 %v551
        %v641 = vunpack.c.l.b16 %v552
        %v642 = vunpack.c.l.b16 %v553
        %v643 = vunpack.c.l.b16 %v554
        %v644 = vpack.c.b16 %v613, %v612
        %v645 = vpack.c.b16 %v615, %v614
        %v646 = vpack.c.b16 %v617, %v616
        %v647 = vpack.c.b16 %v619, %v618
        %v648 = vpack.c.b16 %v621, %v620
        %v649 = vpack.c.b16 %v623, %v622
        %v650 = vpack.c.b16 %v625, %v624
        %v651 = vpack.c.b16 %v627, %v626
        %v652 = vpack.c.b16 %v629, %v628
        %v653 = vpack.c.b16 %v631, %v630
        %v654 = vpack.c.b16 %v633, %v632
        %v655 = vpack.c.b16 %v635, %v634
        %v656 = vpack.c.b16 %v637, %v636
        %v657 = vpack.c.b16 %v639, %v638
        %v658 = vpack.c.b16 %v641, %v640
        %v659 = vpack.c.b16 %v643, %v642
        %vm660 = vsmask.f32 7424
        %v662 = vshrl.u32 %v644, 16
        %v664 = vshll.u32 %v644, 16
        %v666 = vrot.slane %v664, 1
        %v667 = vor.u32 %v662, %v666
        %v669 = vshll.u32 %v645, 16
        %v671 = vrot.slane %v669, 1
        %v672 = vsel %vm660, %v667, %v671
        %v673 = vshrl.u32 %v645, 16
        %v675 = vor.u32 %v673, %v671
        %v677 = vshll.u32 %v646, 16
        %v679 = vrot.slane %v677, 1
        %v680 = vsel %vm660, %v675, %v679
        %v681 = vshrl.u32 %v646, 16
        %v683 = vor.u32 %v681, %v679
        %v685 = vshll.u32 %v647, 16
        %v687 = vrot.slane %v685, 1
        %v688 = vsel %vm660, %v683, %v687
        %v689 = vshrl.u32 %v647, 16
        %v691 = vor.u32 %v689, %v687
        %v693 = vshll.u32 %v648, 16
        %v695 = vrot.slane %v693, 1
        %v696 = vsel %vm660, %v691, %v695
        %v697 = vshrl.u32 %v648, 16
        %v699 = vor.u32 %v697, %v695
        %v701 = vshll.u32 %v649, 16
        %v703 = vrot.slane %v701, 1
        %v704 = vsel %vm660, %v699, %v703
        %v705 = vshrl.u32 %v649, 16
        %v707 = vor.u32 %v705, %v703
        %v709 = vshll.u32 %v650, 16
        %v711 = vrot.slane %v709, 1
        %v712 = vsel %vm660, %v707, %v711
        %v713 = vshrl.u32 %v650, 16
        %v715 = vor.u32 %v713, %v711
        %v717 = vshll.u32 %v651, 16
        %v719 = vrot.slane %v717, 1
        %v720 = vsel %vm660, %v715, %v719
        %v721 = vshrl.u32 %v651, 16
        %v723 = vor.u32 %v721, %v719
        %v725 = vshll.u32 %v652, 16
        %v727 = vrot.slane %v725, 1
        %v728 = vsel %vm660, %v723, %v727
        %v729 = vshrl.u32 %v652, 16
        %v731 = vor.u32 %v729, %v727
        %v733 = vshll.u32 %v653, 16
        %v735 = vrot.slane %v733, 1
        %v736 = vsel %vm660, %v731, %v735
        %v737 = vshrl.u32 %v653, 16
        %v739 = vor.u32 %v737, %v735
        %v741 = vshll.u32 %v654, 16
        %v743 = vrot.slane %v741, 1
        %v744 = vsel %vm660, %v739, %v743
        %v745 = vshrl.u32 %v654, 16
        %v747 = vor.u32 %v745, %v743
        %v749 = vshll.u32 %v655, 16
        %v751 = vrot.slane %v749, 1
        %v752 = vsel %vm660, %v747, %v751
        %v753 = vshrl.u32 %v655, 16
        %v755 = vor.u32 %v753, %v751
        %v757 = vshll.u32 %v656, 16
        %v759 = vrot.slane %v757, 1
        %v760 = vsel %vm660, %v755, %v759
        %v761 = vshrl.u32 %v656, 16
        %v763 = vor.u32 %v761, %v759
        %v765 = vshll.u32 %v657, 16
        %v767 = vrot.slane %v765, 1
        %v768 = vsel %vm660, %v763, %v767
        %v769 = vshrl.u32 %v657, 16
        %v771 = vor.u32 %v769, %v767
        %v773 = vshll.u32 %v658, 16
        %v775 = vrot.slane %v773, 1
        %v776 = vsel %vm660, %v771, %v775
        %v777 = vshrl.u32 %v658, 16
        %v779 = vor.u32 %v777, %v775
        %v781 = vshll.u32 %v659, 16
        %v783 = vrot.slane %v781, 1
        %v784 = vsel %vm660, %v779, %v783
        %v785 = vshrl.u32 %v659, 16
        %v787 = vor.u32 %v785, %v783
        %v800 = vunpack.c.l.b16 %v568
        %v801 = vunpack.c.h.b16 %v568
        %v802 = vunpack.c.l.b16 %v569
        %v803 = vunpack.c.h.b16 %v569
        %v804 = vunpack.c.l.b16 %v570
        %v805 = vunpack.c.h.b16 %v570
        %v806 = vunpack.c.l.b16 %v571
        %v807 = vunpack.c.h.b16 %v571
        %v808 = vunpack.c.l.b16 %v572
        %v809 = vunpack.c.h.b16 %v572
        %v810 = vunpack.c.l.b16 %v573
        %v811 = vunpack.c.h.b16 %v573
        %v812 = vunpack.c.l.b16 %v574
        %v813 = vunpack.c.h.b16 %v574
        %v814 = vunpack.c.l.b16 %v575
        %v815 = vunpack.c.h.b16 %v575
        %v816 = vunpack.c.l.b16 %v576
        %v817 = vunpack.c.h.b16 %v576
        %v818 = vunpack.c.l.b16 %v577
        %v819 = vunpack.c.h.b16 %v577
        %v820 = vunpack.c.l.b16 %v578
        %v821 = vunpack.c.h.b16 %v578
        %v822 = vunpack.c.l.b16 %v579
        %v823 = vunpack.c.h.b16 %v579
        %v824 = vpack.c.b16 %v802, %v800
        %v825 = vpack.c.b16 %v803, %v801
        %v826 = vpack.c.b16 %v806, %v804
        %v827 = vpack.c.b16 %v807, %v805
        %v828 = vpack.c.b16 %v810, %v808
        %v829 = vpack.c.b16 %v811, %v809
        %v830 = vpack.c.b16 %v814, %v812
        %v831 = vpack.c.b16 %v815, %v813
        %v832 = vpack.c.b16 %v818, %v816
        %v833 = vpack.c.b16 %v819, %v817
        %v834 = vpack.c.b16 %v822, %v820
        %v835 = vpack.c.b16 %v823, %v821
        %vm848 = vcmask 785408
        %v850 = vsel %vm848, %v672, 0
        %v853 = vsel %vm848, %v680, 0
        %v856 = vsel %vm848, %v688, 0
        %v859 = vsel %vm848, %v696, 0
        %v862 = vsel %vm848, %v704, 0
        %v865 = vsel %vm848, %v712, 0
        %v868 = vsel %vm848, %v720, 0
        %v871 = vsel %vm848, %v728, 0
        %v874 = vsel %vm848, %v736, 0
        %v877 = vsel %vm848, %v744, 0
        %v880 = vsel %vm848, %v752, 0
        %v883 = vsel %vm848, %v760, 0
        %v886 = vsel %vm848, %v768, 0
        %v889 = vsel %vm848, %v776, 0
        %v892 = vsel %vm848, %v784, 0
        %v895 = vsel %vm848, %v787, 0
        %897 = vmatprep.subr.bf16.mxu0 %v825
        %898 = vmatpush1.bf16.msra.mxu0 %v824
        %899 = vmatprep.subr.bf16.mxu0 %v827
        %900 = vmatpush1.bf16.msra.mxu0 %v826
        %901 = vmatprep.subr.bf16.mxu0 %v829
        %902 = vmatpush1.bf16.msra.mxu0 %v828
        %903 = vmatprep.subr.bf16.mxu0 %v831
        %904 = vmatpush1.bf16.msra.mxu0 %v830
        %905 = vmatprep.subr.bf16.mxu0 %v833
        %906 = vmatpush1.bf16.msra.mxu0 %v832
        %907 = vmatprep.subr.bf16.mxu0 %v835
        %908 = vmatpush1.bf16.msra.mxu0 %v834
        %909 = vmatprep.subr.bf16.mxu0 0
        %910 = vmatpush1.bf16.msra.mxu0 0
        %911 = vmatprep.subr.bf16.mxu0 0
        %912 = vmatpush1.bf16.msra.mxu0 0
        %913 = vmatprep.subr.bf16.mxu0 0
        %914 = vmatpush1.bf16.msra.mxu0 0
        %915 = vmatprep.subr.bf16.mxu0 0
        %916 = vmatpush1.bf16.msra.mxu0 0
        %917 = vmatprep.subr.bf16.mxu0 0
        %918 = vmatpush1.bf16.msra.mxu0 0
        %919 = vmatprep.subr.bf16.mxu0 0
        %920 = vmatpush1.bf16.msra.mxu0 0
        %921 = vmatprep.subr.bf16.mxu0 0
        %922 = vmatpush1.bf16.msra.mxu0 0
        %923 = vmatprep.subr.bf16.mxu0 0
        %924 = vmatpush1.bf16.msra.mxu0 0
        %925 = vmatprep.subr.bf16.mxu0 0
        %926 = vmatpush1.bf16.msra.mxu0 0
        %927 = vmatprep.subr.bf16.mxu0 0
        %928 = vmatpush1.bf16.msra.mxu0 0
        %929 = vmatprep.mubr.bf16.mxu0 0
        %930 = vmatmul.mubr.bf16.gmra.mrb[0].mxu0 %v850
        %v931 = vpop.f32.mrb[0].mxu0
        %v932 = vadd.f32 0.0, %v931
        %v933 = vpop.f32.mrb[0].mxu0
        %v934 = vadd.f32 0.0, %v933
        %v935 = vpop.f32.mrb[0].mxu0
        %v936 = vadd.f32 0.0, %v935
        %v937 = vpop.f32.mrb[0].mxu0
        %v938 = vadd.f32 0.0, %v937
        %939 = vmatprep.mubr.bf16.mxu0 0
        %940 = vmatmul.mubr.bf16.gmra.mrb[0].mxu0 %v853
        %v941 = vpop.f32.mrb[0].mxu0
        %v942 = vadd.f32 0.0, %v941
        %v943 = vpop.f32.mrb[0].mxu0
        %v944 = vadd.f32 0.0, %v943
        %v945 = vpop.f32.mrb[0].mxu0
        %v946 = vadd.f32 0.0, %v945
        %v947 = vpop.f32.mrb[0].mxu0
        %v948 = vadd.f32 0.0, %v947
        %949 = vmatprep.mubr.bf16.mxu0 0
        %950 = vmatmul.mubr.bf16.gmra.mrb[0].mxu0 %v856
        %v951 = vpop.f32.mrb[0].mxu0
        %v952 = vadd.f32 0.0, %v951
        %v953 = vpop.f32.mrb[0].mxu0
        %v954 = vadd.f32 0.0, %v953
        %v955 = vpop.f32.mrb[0].mxu0
        %v956 = vadd.f32 0.0, %v955
        %v957 = vpop.f32.mrb[0].mxu0
        %v958 = vadd.f32 0.0, %v957
        %959 = vmatprep.mubr.bf16.mxu0 0
        %960 = vmatmul.mubr.bf16.gmra.mrb[0].mxu0 %v859
        %v961 = vpop.f32.mrb[0].mxu0
        %v962 = vadd.f32 0.0, %v961
        %v963 = vpop.f32.mrb[0].mxu0
        %v964 = vadd.f32 0.0, %v963
        %v965 = vpop.f32.mrb[0].mxu0
        %v966 = vadd.f32 0.0, %v965
        %v967 = vpop.f32.mrb[0].mxu0
        %v968 = vadd.f32 0.0, %v967
        %969 = vmatprep.mubr.bf16.mxu0 0
        %970 = vmatmul.mubr.bf16.gmra.mrb[0].mxu0 %v862
        %v971 = vpop.f32.mrb[0].mxu0
        %v972 = vadd.f32 0.0, %v971
        %v973 = vpop.f32.mrb[0].mxu0
        %v974 = vadd.f32 0.0, %v973
        %v975 = vpop.f32.mrb[0].mxu0
        %v976 = vadd.f32 0.0, %v975
        %v977 = vpop.f32.mrb[0].mxu0
        %v978 = vadd.f32 0.0, %v977
        %979 = vmatprep.mubr.bf16.mxu0 0
        %980 = vmatmul.mubr.bf16.gmra.mrb[0].mxu0 %v865
        %v981 = vpop.f32.mrb[0].mxu0
        %v982 = vadd.f32 0.0, %v981
        %v983 = vpop.f32.mrb[0].mxu0
        %v984 = vadd.f32 0.0, %v983
        %v985 = vpop.f32.mrb[0].mxu0
        %v986 = vadd.f32 0.0, %v985
        %v987 = vpop.f32.mrb[0].mxu0
        %v988 = vadd.f32 0.0, %v987
        %989 = vmatprep.mubr.bf16.mxu0 0
        %990 = vmatmul.mubr.bf16.gmra.mrb[0].mxu0 %v868
        %v991 = vpop.f32.mrb[0].mxu0
        %v992 = vadd.f32 0.0, %v991
        %v993 = vpop.f32.mrb[0].mxu0
        %v994 = vadd.f32 0.0, %v993
        %v995 = vpop.f32.mrb[0].mxu0
        %v996 = vadd.f32 0.0, %v995
        %v997 = vpop.f32.mrb[0].mxu0
        %v998 = vadd.f32 0.0, %v997
        %999 = vmatprep.mubr.bf16.mxu0 0
        %1000 = vmatmul.mubr.bf16.gmra.mrb[0].mxu0 %v871
        %v1001 = vpop.f32.mrb[0].mxu0
        %v1002 = vadd.f32 0.0, %v1001
        %v1003 = vpop.f32.mrb[0].mxu0
        %v1004 = vadd.f32 0.0, %v1003
        %v1005 = vpop.f32.mrb[0].mxu0
        %v1006 = vadd.f32 0.0, %v1005
        %v1007 = vpop.f32.mrb[0].mxu0
        %v1008 = vadd.f32 0.0, %v1007
        %1009 = vmatprep.mubr.bf16.mxu0 0
        %1010 = vmatmul.mubr.bf16.gmra.mrb[0].mxu0 %v874
        %v1011 = vpop.f32.mrb[0].mxu0
        %v1012 = vadd.f32 0.0, %v1011
        %v1013 = vpop.f32.mrb[0].mxu0
        %v1014 = vadd.f32 0.0, %v1013
        %v1015 = vpop.f32.mrb[0].mxu0
        %v1016 = vadd.f32 0.0, %v1015
        %v1017 = vpop.f32.mrb[0].mxu0
        %v1018 = vadd.f32 0.0, %v1017
        %1019 = vmatprep.mubr.bf16.mxu0 0
        %1020 = vmatmul.mubr.bf16.gmra.mrb[0].mxu0 %v877
        %v1021 = vpop.f32.mrb[0].mxu0
        %v1022 = vadd.f32 0.0, %v1021
        %v1023 = vpop.f32.mrb[0].mxu0
        %v1024 = vadd.f32 0.0, %v1023
        %v1025 = vpop.f32.mrb[0].mxu0
        %v1026 = vadd.f32 0.0, %v1025
        %v1027 = vpop.f32.mrb[0].mxu0
        %v1028 = vadd.f32 0.0, %v1027
        %1029 = vmatprep.mubr.bf16.mxu0 0
        %1030 = vmatmul.mubr.bf16.gmra.mrb[0].mxu0 %v880
        %v1031 = vpop.f32.mrb[0].mxu0
        %v1032 = vadd.f32 0.0, %v1031
        %v1033 = vpop.f32.mrb[0].mxu0
        %v1034 = vadd.f32 0.0, %v1033
        %v1035 = vpop.f32.mrb[0].mxu0
        %v1036 = vadd.f32 0.0, %v1035
        %v1037 = vpop.f32.mrb[0].mxu0
        %v1038 = vadd.f32 0.0, %v1037
        %1039 = vmatprep.mubr.bf16.mxu0 0
        %1040 = vmatmul.mubr.bf16.gmra.mrb[0].mxu0 %v883
        %v1041 = vpop.f32.mrb[0].mxu0
        %v1042 = vadd.f32 0.0, %v1041
        %v1043 = vpop.f32.mrb[0].mxu0
        %v1044 = vadd.f32 0.0, %v1043
        %v1045 = vpop.f32.mrb[0].mxu0
        %v1046 = vadd.f32 0.0, %v1045
        %v1047 = vpop.f32.mrb[0].mxu0
        %v1048 = vadd.f32 0.0, %v1047
        %1049 = vmatprep.mubr.bf16.mxu0 0
        %1050 = vmatmul.mubr.bf16.gmra.mrb[0].mxu0 %v886
        %v1051 = vpop.f32.mrb[0].mxu0
        %v1052 = vadd.f32 0.0, %v1051
        %v1053 = vpop.f32.mrb[0].mxu0
        %v1054 = vadd.f32 0.0, %v1053
        %v1055 = vpop.f32.mrb[0].mxu0
        %v1056 = vadd.f32 0.0, %v1055
        %v1057 = vpop.f32.mrb[0].mxu0
        %v1058 = vadd.f32 0.0, %v1057
        %1059 = vmatprep.mubr.bf16.mxu0 0
        %1060 = vmatmul.mubr.bf16.gmra.mrb[0].mxu0 %v889
        %v1061 = vpop.f32.mrb[0].mxu0
        %v1062 = vadd.f32 0.0, %v1061
        %v1063 = vpop.f32.mrb[0].mxu0
        %v1064 = vadd.f32 0.0, %v1063
        %v1065 = vpop.f32.mrb[0].mxu0
        %v1066 = vadd.f32 0.0, %v1065
        %v1067 = vpop.f32.mrb[0].mxu0
        %v1068 = vadd.f32 0.0, %v1067
        %1069 = vmatprep.mubr.bf16.mxu0 0
        %1070 = vmatmul.mubr.bf16.gmra.mrb[0].mxu0 %v892
        %v1071 = vpop.f32.mrb[0].mxu0
        %v1072 = vadd.f32 0.0, %v1071
        %v1073 = vpop.f32.mrb[0].mxu0
        %v1074 = vadd.f32 0.0, %v1073
        %v1075 = vpop.f32.mrb[0].mxu0
        %v1076 = vadd.f32 0.0, %v1075
        %v1077 = vpop.f32.mrb[0].mxu0
        %v1078 = vadd.f32 0.0, %v1077
        %1079 = vmatprep.mubr.bf16.mxu0 0
        %1080 = vmatmul.mubr.bf16.gmra.mrb[0].mxu0 %v895
        %v1081 = vpop.f32.mrb[0].mxu0
        %v1082 = vadd.f32 0.0, %v1081
        %v1083 = vpop.f32.mrb[0].mxu0
        %v1084 = vadd.f32 0.0, %v1083
        %v1085 = vpop.f32.mrb[0].mxu0
        %v1086 = vadd.f32 0.0, %v1085
        %v1087 = vpop.f32.mrb[0].mxu0
        %v1088 = vadd.f32 0.0, %v1087
        %1089 = vdwg.mxu0
        %v1102 = vunpack.c.l.b16 %v555
        %v1103 = vunpack.c.h.b16 %v555
        %v1104 = vunpack.c.l.b16 %v556
        %v1105 = vunpack.c.h.b16 %v556
        %v1106 = vunpack.c.l.b16 %v557
        %v1107 = vunpack.c.h.b16 %v557
        %v1108 = vunpack.c.l.b16 %v558
        %v1109 = vunpack.c.h.b16 %v558
        %v1110 = vunpack.c.l.b16 %v559
        %v1111 = vunpack.c.h.b16 %v559
        %v1112 = vunpack.c.l.b16 %v560
        %v1113 = vunpack.c.h.b16 %v560
        %v1114 = vunpack.c.l.b16 %v561
        %v1115 = vunpack.c.h.b16 %v561
        %v1116 = vunpack.c.l.b16 %v562
        %v1117 = vunpack.c.h.b16 %v562
        %v1118 = vunpack.c.l.b16 %v563
        %v1119 = vunpack.c.h.b16 %v563
        %v1120 = vunpack.c.l.b16 %v564
        %v1121 = vunpack.c.h.b16 %v564
        %v1122 = vunpack.c.l.b16 %v565
        %v1123 = vunpack.c.h.b16 %v565
        %v1124 = vunpack.c.l.b16 %v566
        %v1125 = vunpack.c.h.b16 %v566
        %v1126 = vpack.c.b16 %v1104, %v1102
        %v1127 = vpack.c.b16 %v1105, %v1103
        %v1128 = vpack.c.b16 %v1108, %v1106
        %v1129 = vpack.c.b16 %v1109, %v1107
        %v1130 = vpack.c.b16 %v1112, %v1110
        %v1131 = vpack.c.b16 %v1113, %v1111
        %v1132 = vpack.c.b16 %v1116, %v1114
        %v1133 = vpack.c.b16 %v1117, %v1115
        %v1134 = vpack.c.b16 %v1120, %v1118
        %v1135 = vpack.c.b16 %v1121, %v1119
        %v1136 = vpack.c.b16 %v1124, %v1122
        %v1137 = vpack.c.b16 %v1125, %v1123
        %v1150 = vsel %vm848, %v644, 0
        %v1152 = vsel %vm848, %v645, 0
        %v1154 = vsel %vm848, %v646, 0
        %v1156 = vsel %vm848, %v647, 0
        %v1158 = vsel %vm848, %v648, 0
        %v1160 = vsel %vm848, %v649, 0
        %v1162 = vsel %vm848, %v650, 0
        %v1164 = vsel %vm848, %v651, 0
        %v1166 = vsel %vm848, %v652, 0
        %v1168 = vsel %vm848, %v653, 0
        %v1170 = vsel %vm848, %v654, 0
        %v1172 = vsel %vm848, %v655, 0
        %v1174 = vsel %vm848, %v656, 0
        %v1176 = vsel %vm848, %v657, 0
        %v1178 = vsel %vm848, %v658, 0
        %v1180 = vsel %vm848, %v659, 0
        %1182 = vmatprep.subr.bf16.mxu0 %v1127
        %1183 = vmatpush1.bf16.msra.mxu0 %v1126
        %1184 = vmatprep.subr.bf16.mxu0 %v1129
        %1185 = vmatpush1.bf16.msra.mxu0 %v1128
        %1186 = vmatprep.subr.bf16.mxu0 %v1131
        %1187 = vmatpush1.bf16.msra.mxu0 %v1130
        %1188 = vmatprep.subr.bf16.mxu0 %v1133
        %1189 = vmatpush1.bf16.msra.mxu0 %v1132
        %1190 = vmatprep.subr.bf16.mxu0 %v1135
        %1191 = vmatpush1.bf16.msra.mxu0 %v1134
        %1192 = vmatprep.subr.bf16.mxu0 %v1137
        %1193 = vmatpush1.bf16.msra.mxu0 %v1136
        %1194 = vmatprep.subr.bf16.mxu0 0
        %1195 = vmatpush1.bf16.msra.mxu0 0
        %1196 = vmatprep.subr.bf16.mxu0 0
        %1197 = vmatpush1.bf16.msra.mxu0 0
        %1198 = vmatprep.subr.bf16.mxu0 0
        %1199 = vmatpush1.bf16.msra.mxu0 0
        %1200 = vmatprep.subr.bf16.mxu0 0
        %1201 = vmatpush1.bf16.msra.mxu0 0
        %1202 = vmatprep.subr.bf16.mxu0 0
        %1203 = vmatpush1.bf16.msra.mxu0 0
        %1204 = vmatprep.subr.bf16.mxu0 0
        %1205 = vmatpush1.bf16.msra.mxu0 0
        %1206 = vmatprep.subr.bf16.mxu0 0
        %1207 = vmatpush1.bf16.msra.mxu0 0
        %1208 = vmatprep.subr.bf16.mxu0 0
        %1209 = vmatpush1.bf16.msra.mxu0 0
        %1210 = vmatprep.subr.bf16.mxu0 0
        %1211 = vmatpush1.bf16.msra.mxu0 0
        %1212 = vmatprep.subr.bf16.mxu0 0
        %1213 = vmatpush1.bf16.msra.mxu0 0
        %1214 = vmatprep.mubr.bf16.mxu0 0
        %1215 = vmatmul.mubr.bf16.gmra.mrb[0].mxu0 %v1150
        %v1216 = vpop.f32.mrb[0].mxu0
        %v1217 = vadd.f32 %v932, %v1216
        %v1218 = vpop.f32.mrb[0].mxu0
        %v1219 = vadd.f32 %v934, %v1218
        %v1220 = vpop.f32.mrb[0].mxu0
        %v1221 = vadd.f32 %v936, %v1220
        %v1222 = vpop.f32.mrb[0].mxu0
        %v1223 = vadd.f32 %v938, %v1222
        %1224 = vmatprep.mubr.bf16.mxu0 0
        %1225 = vmatmul.mubr.bf16.gmra.mrb[0].mxu0 %v1152
        %v1226 = vpop.f32.mrb[0].mxu0
        %v1227 = vadd.f32 %v942, %v1226
        %v1228 = vpop.f32.mrb[0].mxu0
        %v1229 = vadd.f32 %v944, %v1228
        %v1230 = vpop.f32.mrb[0].mxu0
        %v1231 = vadd.f32 %v946, %v1230
        %v1232 = vpop.f32.mrb[0].mxu0
        %v1233 = vadd.f32 %v948, %v1232
        %1234 = vmatprep.mubr.bf16.mxu0 0
        %1235 = vmatmul.mubr.bf16.gmra.mrb[0].mxu0 %v1154
        %v1236 = vpop.f32.mrb[0].mxu0
        %v1237 = vadd.f32 %v952, %v1236
        %v1238 = vpop.f32.mrb[0].mxu0
        %v1239 = vadd.f32 %v954, %v1238
        %v1240 = vpop.f32.mrb[0].mxu0
        %v1241 = vadd.f32 %v956, %v1240
        %v1242 = vpop.f32.mrb[0].mxu0
        %v1243 = vadd.f32 %v958, %v1242
        %1244 = vmatprep.mubr.bf16.mxu0 0
        %1245 = vmatmul.mubr.bf16.gmra.mrb[0].mxu0 %v1156
        %v1246 = vpop.f32.mrb[0].mxu0
        %v1247 = vadd.f32 %v962, %v1246
        %v1248 = vpop.f32.mrb[0].mxu0
        %v1249 = vadd.f32 %v964, %v1248
        %v1250 = vpop.f32.mrb[0].mxu0
        %v1251 = vadd.f32 %v966, %v1250
        %v1252 = vpop.f32.mrb[0].mxu0
        %v1253 = vadd.f32 %v968, %v1252
        %1254 = vmatprep.mubr.bf16.mxu0 0
        %1255 = vmatmul.mubr.bf16.gmra.mrb[0].mxu0 %v1158
        %v1256 = vpop.f32.mrb[0].mxu0
        %v1257 = vadd.f32 %v972, %v1256
        %v1258 = vpop.f32.mrb[0].mxu0
        %v1259 = vadd.f32 %v974, %v1258
        %v1260 = vpop.f32.mrb[0].mxu0
        %v1261 = vadd.f32 %v976, %v1260
        %v1262 = vpop.f32.mrb[0].mxu0
        %v1263 = vadd.f32 %v978, %v1262
        %1264 = vmatprep.mubr.bf16.mxu0 0
        %1265 = vmatmul.mubr.bf16.gmra.mrb[0].mxu0 %v1160
        %v1266 = vpop.f32.mrb[0].mxu0
        %v1267 = vadd.f32 %v982, %v1266
        %v1268 = vpop.f32.mrb[0].mxu0
        %v1269 = vadd.f32 %v984, %v1268
        %v1270 = vpop.f32.mrb[0].mxu0
        %v1271 = vadd.f32 %v986, %v1270
        %v1272 = vpop.f32.mrb[0].mxu0
        %v1273 = vadd.f32 %v988, %v1272
        %1274 = vmatprep.mubr.bf16.mxu0 0
        %1275 = vmatmul.mubr.bf16.gmra.mrb[0].mxu0 %v1162
        %v1276 = vpop.f32.mrb[0].mxu0
        %v1277 = vadd.f32 %v992, %v1276
        %v1278 = vpop.f32.mrb[0].mxu0
        %v1279 = vadd.f32 %v994, %v1278
        %v1280 = vpop.f32.mrb[0].mxu0
        %v1281 = vadd.f32 %v996, %v1280
        %v1282 = vpop.f32.mrb[0].mxu0
        %v1283 = vadd.f32 %v998, %v1282
        %1284 = vmatprep.mubr.bf16.mxu0 0
        %1285 = vmatmul.mubr.bf16.gmra.mrb[0].mxu0 %v1164
        %v1286 = vpop.f32.mrb[0].mxu0
        %v1287 = vadd.f32 %v1002, %v1286
        %v1288 = vpop.f32.mrb[0].mxu0
        %v1289 = vadd.f32 %v1004, %v1288
        %v1290 = vpop.f32.mrb[0].mxu0
        %v1291 = vadd.f32 %v1006, %v1290
        %v1292 = vpop.f32.mrb[0].mxu0
        %v1293 = vadd.f32 %v1008, %v1292
        %1294 = vmatprep.mubr.bf16.mxu0 0
        %1295 = vmatmul.mubr.bf16.gmra.mrb[0].mxu0 %v1166
        %v1296 = vpop.f32.mrb[0].mxu0
        %v1297 = vadd.f32 %v1012, %v1296
        %v1298 = vpop.f32.mrb[0].mxu0
        %v1299 = vadd.f32 %v1014, %v1298
        %v1300 = vpop.f32.mrb[0].mxu0
        %v1301 = vadd.f32 %v1016, %v1300
        %v1302 = vpop.f32.mrb[0].mxu0
        %v1303 = vadd.f32 %v1018, %v1302
        %1304 = vmatprep.mubr.bf16.mxu0 0
        %1305 = vmatmul.mubr.bf16.gmra.mrb[0].mxu0 %v1168
        %v1306 = vpop.f32.mrb[0].mxu0
        %v1307 = vadd.f32 %v1022, %v1306
        %v1308 = vpop.f32.mrb[0].mxu0
        %v1309 = vadd.f32 %v1024, %v1308
        %v1310 = vpop.f32.mrb[0].mxu0
        %v1311 = vadd.f32 %v1026, %v1310
        %v1312 = vpop.f32.mrb[0].mxu0
        %v1313 = vadd.f32 %v1028, %v1312
        %1314 = vmatprep.mubr.bf16.mxu0 0
        %1315 = vmatmul.mubr.bf16.gmra.mrb[0].mxu0 %v1170
        %v1316 = vpop.f32.mrb[0].mxu0
        %v1317 = vadd.f32 %v1032, %v1316
        %v1318 = vpop.f32.mrb[0].mxu0
        %v1319 = vadd.f32 %v1034, %v1318
        %v1320 = vpop.f32.mrb[0].mxu0
        %v1321 = vadd.f32 %v1036, %v1320
        %v1322 = vpop.f32.mrb[0].mxu0
        %v1323 = vadd.f32 %v1038, %v1322
        %1324 = vmatprep.mubr.bf16.mxu0 0
        %1325 = vmatmul.mubr.bf16.gmra.mrb[0].mxu0 %v1172
        %v1326 = vpop.f32.mrb[0].mxu0
        %v1327 = vadd.f32 %v1042, %v1326
        %v1328 = vpop.f32.mrb[0].mxu0
        %v1329 = vadd.f32 %v1044, %v1328
        %v1330 = vpop.f32.mrb[0].mxu0
        %v1331 = vadd.f32 %v1046, %v1330
        %v1332 = vpop.f32.mrb[0].mxu0
        %v1333 = vadd.f32 %v1048, %v1332
        %1334 = vmatprep.mubr.bf16.mxu0 0
        %1335 = vmatmul.mubr.bf16.gmra.mrb[0].mxu0 %v1174
        %v1336 = vpop.f32.mrb[0].mxu0
        %v1337 = vadd.f32 %v1052, %v1336
        %v1338 = vpop.f32.mrb[0].mxu0
        %v1339 = vadd.f32 %v1054, %v1338
        %v1340 = vpop.f32.mrb[0].mxu0
        %v1341 = vadd.f32 %v1056, %v1340
        %v1342 = vpop.f32.mrb[0].mxu0
        %v1343 = vadd.f32 %v1058, %v1342
        %1344 = vmatprep.mubr.bf16.mxu0 0
        %1345 = vmatmul.mubr.bf16.gmra.mrb[0].mxu0 %v1176
        %v1346 = vpop.f32.mrb[0].mxu0
        %v1347 = vadd.f32 %v1062, %v1346
        %v1348 = vpop.f32.mrb[0].mxu0
        %v1349 = vadd.f32 %v1064, %v1348
        %v1350 = vpop.f32.mrb[0].mxu0
        %v1351 = vadd.f32 %v1066, %v1350
        %v1352 = vpop.f32.mrb[0].mxu0
        %v1353 = vadd.f32 %v1068, %v1352
        %1354 = vmatprep.mubr.bf16.mxu0 0
        %1355 = vmatmul.mubr.bf16.gmra.mrb[0].mxu0 %v1178
        %v1356 = vpop.f32.mrb[0].mxu0
        %v1357 = vadd.f32 %v1072, %v1356
        %v1358 = vpop.f32.mrb[0].mxu0
        %v1359 = vadd.f32 %v1074, %v1358
        %v1360 = vpop.f32.mrb[0].mxu0
        %v1361 = vadd.f32 %v1076, %v1360
        %v1362 = vpop.f32.mrb[0].mxu0
        %v1363 = vadd.f32 %v1078, %v1362
        %1364 = vmatprep.mubr.bf16.mxu0 0
        %1365 = vmatmul.mubr.bf16.gmra.mrb[0].mxu0 %v1180
        %v1366 = vpop.f32.mrb[0].mxu0
        %v1367 = vadd.f32 %v1082, %v1366
        %v1368 = vpop.f32.mrb[0].mxu0
        %v1369 = vadd.f32 %v1084, %v1368
        %v1370 = vpop.f32.mrb[0].mxu0
        %v1371 = vadd.f32 %v1086, %v1370
        %v1372 = vpop.f32.mrb[0].mxu0
        %v1373 = vadd.f32 %v1088, %v1372
        %1374 = vdwg.mxu0
        %s1375 = scalar_lea.vmem %s1, 192
        %v1376 = vld [vmem:[%s1375] sm:$0xff]
        %v1377 = vld [vmem:[%s1375 + $0x8] sm:$0xff]
        %v1378 = vld [vmem:[%s1375 + $0x10] sm:$0xff]
        %v1379 = vld [vmem:[%s1375 + $0x18] sm:$0xff]
        %v1380 = vld [vmem:[%s1375 + $0x20] sm:$0xff]
        %v1381 = vld [vmem:[%s1375 + $0x28] sm:$0xff]
        %v1382 = vld [vmem:[%s1375 + $0x30] sm:$0xff]
        %v1383 = vld [vmem:[%s1375 + $0x38] sm:$0xff]
        %v1384 = vld [vmem:[%s1375 + $0x40] sm:$0xff]
        %v1385 = vld [vmem:[%s1375 + $0x48] sm:$0xff]
        %v1386 = vld [vmem:[%s1375 + $0x50] sm:$0xff]
        %v1387 = vld [vmem:[%s1375 + $0x58] sm:$0xff]
        %vm1388 = vcmask 1046528
        %v1389 = vrot.slane %v644, 1
        %v1390 = vrot.slane %v645, 1
        %v1391 = vsel %vm1388, %v1389, %v1390
        %v1392 = vrot.slane %v646, 1
        %v1393 = vsel %vm1388, %v1390, %v1392
        %v1394 = vrot.slane %v647, 1
        %v1395 = vsel %vm1388, %v1392, %v1394
        %v1396 = vrot.slane %v648, 1
        %v1397 = vsel %vm1388, %v1394, %v1396
        %v1398 = vrot.slane %v649, 1
        %v1399 = vsel %vm1388, %v1396, %v1398
        %v1400 = vrot.slane %v650, 1
        %v1401 = vsel %vm1388, %v1398, %v1400
        %v1402 = vrot.slane %v651, 1
        %v1403 = vsel %vm1388, %v1400, %v1402
        %v1404 = vrot.slane %v652, 1
        %v1405 = vsel %vm1388, %v1402, %v1404
        %v1406 = vrot.slane %v653, 1
        %v1407 = vsel %vm1388, %v1404, %v1406
        %v1408 = vrot.slane %v654, 1
        %v1409 = vsel %vm1388, %v1406, %v1408
        %v1410 = vrot.slane %v655, 1
        %v1411 = vsel %vm1388, %v1408, %v1410
        %v1412 = vrot.slane %v656, 1
        %v1413 = vsel %vm1388, %v1410, %v1412
        %v1414 = vrot.slane %v657, 1
        %v1415 = vsel %vm1388, %v1412, %v1414
        %v1416 = vrot.slane %v658, 1
        %v1417 = vsel %vm1388, %v1414, %v1416
        %v1418 = vrot.slane %v659, 1
        %v1419 = vsel %vm1388, %v1416, %v1418
        %v1432 = vunpack.c.l.b16 %v1376
        %v1433 = vunpack.c.h.b16 %v1376
        %v1434 = vunpack.c.l.b16 %v1377
        %v1435 = vunpack.c.h.b16 %v1377
        %v1436 = vunpack.c.l.b16 %v1378
        %v1437 = vunpack.c.h.b16 %v1378
        %v1438 = vunpack.c.l.b16 %v1379
        %v1439 = vunpack.c.h.b16 %v1379
        %v1440 = vunpack.c.l.b16 %v1380
        %v1441 = vunpack.c.h.b16 %v1380
        %v1442 = vunpack.c.l.b16 %v1381
        %v1443 = vunpack.c.h.b16 %v1381
        %v1444 = vunpack.c.l.b16 %v1382
        %v1445 = vunpack.c.h.b16 %v1382
        %v1446 = vunpack.c.l.b16 %v1383
        %v1447 = vunpack.c.h.b16 %v1383
        %v1448 = vunpack.c.l.b16 %v1384
        %v1449 = vunpack.c.h.b16 %v1384
        %v1450 = vunpack.c.l.b16 %v1385
        %v1451 = vunpack.c.h.b16 %v1385
        %v1452 = vunpack.c.l.b16 %v1386
        %v1453 = vunpack.c.h.b16 %v1386
        %v1454 = vunpack.c.l.b16 %v1387
        %v1455 = vunpack.c.h.b16 %v1387
        %v1456 = vpack.c.b16 %v1434, %v1432
        %v1457 = vpack.c.b16 %v1435, %v1433
        %v1458 = vpack.c.b16 %v1438, %v1436
        %v1459 = vpack.c.b16 %v1439, %v1437
        %v1460 = vpack.c.b16 %v1442, %v1440
        %v1461 = vpack.c.b16 %v1443, %v1441
        %v1462 = vpack.c.b16 %v1446, %v1444
        %v1463 = vpack.c.b16 %v1447, %v1445
        %v1464 = vpack.c.b16 %v1450, %v1448
        %v1465 = vpack.c.b16 %v1451, %v1449
        %v1466 = vpack.c.b16 %v1454, %v1452
        %v1467 = vpack.c.b16 %v1455, %v1453
        %v1481 = vsel %vm848, %v1391, 0
        %v1484 = vsel %vm848, %v1393, 0
        %v1487 = vsel %vm848, %v1395, 0
        %v1490 = vsel %vm848, %v1397, 0
        %v1493 = vsel %vm848, %v1399, 0
        %v1496 = vsel %vm848, %v1401, 0
        %v1499 = vsel %vm848, %v1403, 0
        %v1502 = vsel %vm848, %v1405, 0
        %v1505 = vsel %vm848, %v1407, 0
        %v1508 = vsel %vm848, %v1409, 0
        %v1511 = vsel %vm848, %v1411, 0
        %v1514 = vsel %vm848, %v1413, 0
        %v1517 = vsel %vm848, %v1415, 0
        %v1520 = vsel %vm848, %v1417, 0
        %v1523 = vsel %vm848, %v1419, 0
        %v1526 = vsel %vm848, %v1418, 0
        %1528 = vmatprep.subr.bf16.mxu0 %v1457
        %1529 = vmatpush1.bf16.msra.mxu0 %v1456
        %1530 = vmatprep.subr.bf16.mxu0 %v1459
        %1531 = vmatpush1.bf16.msra.mxu0 %v1458
        %1532 = vmatprep.subr.bf16.mxu0 %v1461
        %1533 = vmatpush1.bf16.msra.mxu0 %v1460
        %1534 = vmatprep.subr.bf16.mxu0 %v1463
        %1535 = vmatpush1.bf16.msra.mxu0 %v1462
        %1536 = vmatprep.subr.bf16.mxu0 %v1465
        %1537 = vmatpush1.bf16.msra.mxu0 %v1464
        %1538 = vmatprep.subr.bf16.mxu0 %v1467
        %1539 = vmatpush1.bf16.msra.mxu0 %v1466
        %1540 = vmatprep.subr.bf16.mxu0 0
        %1541 = vmatpush1.bf16.msra.mxu0 0
        %1542 = vmatprep.subr.bf16.mxu0 0
        %1543 = vmatpush1.bf16.msra.mxu0 0
        %1544 = vmatprep.subr.bf16.mxu0 0
        %1545 = vmatpush1.bf16.msra.mxu0 0
        %1546 = vmatprep.subr.bf16.mxu0 0
        %1547 = vmatpush1.bf16.msra.mxu0 0
        %1548 = vmatprep.subr.bf16.mxu0 0
        %1549 = vmatpush1.bf16.msra.mxu0 0
        %1550 = vmatprep.subr.bf16.mxu0 0
        %1551 = vmatpush1.bf16.msra.mxu0 0
        %1552 = vmatprep.subr.bf16.mxu0 0
        %1553 = vmatpush1.bf16.msra.mxu0 0
        %1554 = vmatprep.subr.bf16.mxu0 0
        %1555 = vmatpush1.bf16.msra.mxu0 0
        %1556 = vmatprep.subr.bf16.mxu0 0
        %1557 = vmatpush1.bf16.msra.mxu0 0
        %1558 = vmatprep.subr.bf16.mxu0 0
        %1559 = vmatpush1.bf16.msra.mxu0 0
        %1560 = vmatprep.mubr.bf16.mxu0 0
        %1561 = vmatmul.mubr.bf16.gmra.mrb[0].mxu0 %v1481
        %v1562 = vpop.f32.mrb[0].mxu0
        %v1563 = vadd.f32 0.0, %v1562
        %v1564 = vpop.f32.mrb[0].mxu0
        %v1565 = vadd.f32 0.0, %v1564
        %v1566 = vpop.f32.mrb[0].mxu0
        %v1567 = vadd.f32 0.0, %v1566
        %v1568 = vpop.f32.mrb[0].mxu0
        %v1569 = vadd.f32 0.0, %v1568
        %1570 = vmatprep.mubr.bf16.mxu0 0
        %1571 = vmatmul.mubr.bf16.gmra.mrb[0].mxu0 %v1484
        %v1572 = vpop.f32.mrb[0].mxu0
        %v1573 = vadd.f32 0.0, %v1572
        %v1574 = vpop.f32.mrb[0].mxu0
        %v1575 = vadd.f32 0.0, %v1574
        %v1576 = vpop.f32.mrb[0].mxu0
        %v1577 = vadd.f32 0.0, %v1576
        %v1578 = vpop.f32.mrb[0].mxu0
        %v1579 = vadd.f32 0.0, %v1578
        %1580 = vmatprep.mubr.bf16.mxu0 0
        %1581 = vmatmul.mubr.bf16.gmra.mrb[0].mxu0 %v1487
        %v1582 = vpop.f32.mrb[0].mxu0
        %v1583 = vadd.f32 0.0, %v1582
        %v1584 = vpop.f32.mrb[0].mxu0
        %v1585 = vadd.f32 0.0, %v1584
        %v1586 = vpop.f32.mrb[0].mxu0
        %v1587 = vadd.f32 0.0, %v1586
        %v1588 = vpop.f32.mrb[0].mxu0
        %v1589 = vadd.f32 0.0, %v1588
        %1590 = vmatprep.mubr.bf16.mxu0 0
        %1591 = vmatmul.mubr.bf16.gmra.mrb[0].mxu0 %v1490
        %v1592 = vpop.f32.mrb[0].mxu0
        %v1593 = vadd.f32 0.0, %v1592
        %v1594 = vpop.f32.mrb[0].mxu0
        %v1595 = vadd.f32 0.0, %v1594
        %v1596 = vpop.f32.mrb[0].mxu0
        %v1597 = vadd.f32 0.0, %v1596
        %v1598 = vpop.f32.mrb[0].mxu0
        %v1599 = vadd.f32 0.0, %v1598
        %1600 = vmatprep.mubr.bf16.mxu0 0
        %1601 = vmatmul.mubr.bf16.gmra.mrb[0].mxu0 %v1493
        %v1602 = vpop.f32.mrb[0].mxu0
        %v1603 = vadd.f32 0.0, %v1602
        %v1604 = vpop.f32.mrb[0].mxu0
        %v1605 = vadd.f32 0.0, %v1604
        %v1606 = vpop.f32.mrb[0].mxu0
        %v1607 = vadd.f32 0.0, %v1606
        %v1608 = vpop.f32.mrb[0].mxu0
        %v1609 = vadd.f32 0.0, %v1608
        %1610 = vmatprep.mubr.bf16.mxu0 0
        %1611 = vmatmul.mubr.bf16.gmra.mrb[0].mxu0 %v1496
        %v1612 = vpop.f32.mrb[0].mxu0
        %v1613 = vadd.f32 0.0, %v1612
        %v1614 = vpop.f32.mrb[0].mxu0
        %v1615 = vadd.f32 0.0, %v1614
        %v1616 = vpop.f32.mrb[0].mxu0
        %v1617 = vadd.f32 0.0, %v1616
        %v1618 = vpop.f32.mrb[0].mxu0
        %v1619 = vadd.f32 0.0, %v1618
        %1620 = vmatprep.mubr.bf16.mxu0 0
        %1621 = vmatmul.mubr.bf16.gmra.mrb[0].mxu0 %v1499
        %v1622 = vpop.f32.mrb[0].mxu0
        %v1623 = vadd.f32 0.0, %v1622
        %v1624 = vpop.f32.mrb[0].mxu0
        %v1625 = vadd.f32 0.0, %v1624
        %v1626 = vpop.f32.mrb[0].mxu0
        %v1627 = vadd.f32 0.0, %v1626
        %v1628 = vpop.f32.mrb[0].mxu0
        %v1629 = vadd.f32 0.0, %v1628
        %1630 = vmatprep.mubr.bf16.mxu0 0
        %1631 = vmatmul.mubr.bf16.gmra.mrb[0].mxu0 %v1502
        %v1632 = vpop.f32.mrb[0].mxu0
        %v1633 = vadd.f32 0.0, %v1632
        %v1634 = vpop.f32.mrb[0].mxu0
        %v1635 = vadd.f32 0.0, %v1634
        %v1636 = vpop.f32.mrb[0].mxu0
        %v1637 = vadd.f32 0.0, %v1636
        %v1638 = vpop.f32.mrb[0].mxu0
        %v1639 = vadd.f32 0.0, %v1638
        %1640 = vmatprep.mubr.bf16.mxu0 0
        %1641 = vmatmul.mubr.bf16.gmra.mrb[0].mxu0 %v1505
        %v1642 = vpop.f32.mrb[0].mxu0
        %v1643 = vadd.f32 0.0, %v1642
        %v1644 = vpop.f32.mrb[0].mxu0
        %v1645 = vadd.f32 0.0, %v1644
        %v1646 = vpop.f32.mrb[0].mxu0
        %v1647 = vadd.f32 0.0, %v1646
        %v1648 = vpop.f32.mrb[0].mxu0
        %v1649 = vadd.f32 0.0, %v1648
        %1650 = vmatprep.mubr.bf16.mxu0 0
        %1651 = vmatmul.mubr.bf16.gmra.mrb[0].mxu0 %v1508
        %v1652 = vpop.f32.mrb[0].mxu0
        %v1653 = vadd.f32 0.0, %v1652
        %v1654 = vpop.f32.mrb[0].mxu0
        %v1655 = vadd.f32 0.0, %v1654
        %v1656 = vpop.f32.mrb[0].mxu0
        %v1657 = vadd.f32 0.0, %v1656
        %v1658 = vpop.f32.mrb[0].mxu0
        %v1659 = vadd.f32 0.0, %v1658
        %1660 = vmatprep.mubr.bf16.mxu0 0
        %1661 = vmatmul.mubr.bf16.gmra.mrb[0].mxu0 %v1511
        %v1662 = vpop.f32.mrb[0].mxu0
        %v1663 = vadd.f32 0.0, %v1662
        %v1664 = vpop.f32.mrb[0].mxu0
        %v1665 = vadd.f32 0.0, %v1664
        %v1666 = vpop.f32.mrb[0].mxu0
        %v1667 = vadd.f32 0.0, %v1666
        %v1668 = vpop.f32.mrb[0].mxu0
        %v1669 = vadd.f32 0.0, %v1668
        %1670 = vmatprep.mubr.bf16.mxu0 0
        %1671 = vmatmul.mubr.bf16.gmra.mrb[0].mxu0 %v1514
        %v1672 = vpop.f32.mrb[0].mxu0
        %v1673 = vadd.f32 0.0, %v1672
        %v1674 = vpop.f32.mrb[0].mxu0
        %v1675 = vadd.f32 0.0, %v1674
        %v1676 = vpop.f32.mrb[0].mxu0
        %v1677 = vadd.f32 0.0, %v1676
        %v1678 = vpop.f32.mrb[0].mxu0
        %v1679 = vadd.f32 0.0, %v1678
        %1680 = vmatprep.mubr.bf16.mxu0 0
        %1681 = vmatmul.mubr.bf16.gmra.mrb[0].mxu0 %v1517
        %v1682 = vpop.f32.mrb[0].mxu0
        %v1683 = vadd.f32 0.0, %v1682
        %v1684 = vpop.f32.mrb[0].mxu0
        %v1685 = vadd.f32 0.0, %v1684
        %v1686 = vpop.f32.mrb[0].mxu0
        %v1687 = vadd.f32 0.0, %v1686
        %v1688 = vpop.f32.mrb[0].mxu0
        %v1689 = vadd.f32 0.0, %v1688
        %1690 = vmatprep.mubr.bf16.mxu0 0
        %1691 = vmatmul.mubr.bf16.gmra.mrb[0].mxu0 %v1520
        %v1692 = vpop.f32.mrb[0].mxu0
        %v1693 = vadd.f32 0.0, %v1692
        %v1694 = vpop.f32.mrb[0].mxu0
        %v1695 = vadd.f32 0.0, %v1694
        %v1696 = vpop.f32.mrb[0].mxu0
        %v1697 = vadd.f32 0.0, %v1696
        %v1698 = vpop.f32.mrb[0].mxu0
        %v1699 = vadd.f32 0.0, %v1698
        %1700 = vmatprep.mubr.bf16.mxu0 0
        %1701 = vmatmul.mubr.bf16.gmra.mrb[0].mxu0 %v1523
        %v1702 = vpop.f32.mrb[0].mxu0
        %v1703 = vadd.f32 0.0, %v1702
        %v1704 = vpop.f32.mrb[0].mxu0
        %v1705 = vadd.f32 0.0, %v1704
        %v1706 = vpop.f32.mrb[0].mxu0
        %v1707 = vadd.f32 0.0, %v1706
        %v1708 = vpop.f32.mrb[0].mxu0
        %v1709 = vadd.f32 0.0, %v1708
        %1710 = vmatprep.mubr.bf16.mxu0 0
        %1711 = vmatmul.mubr.bf16.gmra.mrb[0].mxu0 %v1526
        %v1712 = vpop.f32.mrb[0].mxu0
        %v1713 = vadd.f32 0.0, %v1712
        %v1714 = vpop.f32.mrb[0].mxu0
        %v1715 = vadd.f32 0.0, %v1714
        %v1716 = vpop.f32.mrb[0].mxu0
        %v1717 = vadd.f32 0.0, %v1716
        %v1718 = vpop.f32.mrb[0].mxu0
        %v1719 = vadd.f32 0.0, %v1718
        %1720 = vdwg.mxu0
        %v1721 = vadd.f32 %v1217, %v1563
        %v1722 = vadd.f32 %v1219, %v1565
        %v1723 = vadd.f32 %v1221, %v1567
        %v1724 = vadd.f32 %v1223, %v1569
        %v1725 = vadd.f32 %v1227, %v1573
        %v1726 = vadd.f32 %v1229, %v1575
        %v1727 = vadd.f32 %v1231, %v1577
        %v1728 = vadd.f32 %v1233, %v1579
        %v1729 = vadd.f32 %v1237, %v1583
        %v1730 = vadd.f32 %v1239, %v1585
        %v1731 = vadd.f32 %v1241, %v1587
        %v1732 = vadd.f32 %v1243, %v1589
        %v1733 = vadd.f32 %v1247, %v1593
        %v1734 = vadd.f32 %v1249, %v1595
        %v1735 = vadd.f32 %v1251, %v1597
        %v1736 = vadd.f32 %v1253, %v1599
        %v1737 = vadd.f32 %v1257, %v1603
        %v1738 = vadd.f32 %v1259, %v1605
        %v1739 = vadd.f32 %v1261, %v1607
        %v1740 = vadd.f32 %v1263, %v1609
        %v1741 = vadd.f32 %v1267, %v1613
        %v1742 = vadd.f32 %v1269, %v1615
        %v1743 = vadd.f32 %v1271, %v1617
        %v1744 = vadd.f32 %v1273, %v1619
        %v1745 = vadd.f32 %v1277, %v1623
        %v1746 = vadd.f32 %v1279, %v1625
        %v1747 = vadd.f32 %v1281, %v1627
        %v1748 = vadd.f32 %v1283, %v1629
        %v1749 = vadd.f32 %v1287, %v1633
        %v1750 = vadd.f32 %v1289, %v1635
        %v1751 = vadd.f32 %v1291, %v1637
        %v1752 = vadd.f32 %v1293, %v1639
        %v1753 = vadd.f32 %v1297, %v1643
        %v1754 = vadd.f32 %v1299, %v1645
        %v1755 = vadd.f32 %v1301, %v1647
        %v1756 = vadd.f32 %v1303, %v1649
        %v1757 = vadd.f32 %v1307, %v1653
        %v1758 = vadd.f32 %v1309, %v1655
        %v1759 = vadd.f32 %v1311, %v1657
        %v1760 = vadd.f32 %v1313, %v1659
        %v1761 = vadd.f32 %v1317, %v1663
        %v1762 = vadd.f32 %v1319, %v1665
        %v1763 = vadd.f32 %v1321, %v1667
        %v1764 = vadd.f32 %v1323, %v1669
        %v1765 = vadd.f32 %v1327, %v1673
        %v1766 = vadd.f32 %v1329, %v1675
        %v1767 = vadd.f32 %v1331, %v1677
        %v1768 = vadd.f32 %v1333, %v1679
        %v1769 = vadd.f32 %v1337, %v1683
        %v1770 = vadd.f32 %v1339, %v1685
        %v1771 = vadd.f32 %v1341, %v1687
        %v1772 = vadd.f32 %v1343, %v1689
        %v1773 = vadd.f32 %v1347, %v1693
        %v1774 = vadd.f32 %v1349, %v1695
        %v1775 = vadd.f32 %v1351, %v1697
        %v1776 = vadd.f32 %v1353, %v1699
        %v1777 = vadd.f32 %v1357, %v1703
        %v1778 = vadd.f32 %v1359, %v1705
        %v1779 = vadd.f32 %v1361, %v1707
        %v1780 = vadd.f32 %v1363, %v1709
        %v1781 = vadd.f32 %v1367, %v1713
        %v1782 = vadd.f32 %v1369, %v1715
        %v1783 = vadd.f32 %v1371, %v1717
        %v1784 = vadd.f32 %v1373, %v1719
        %s1785 = scalar_lea.vmem %s1, 288
        %v1786 = vld [vmem:[%s1785] sm:$0xff]
        %v1787 = vld [vmem:[%s1785 + $0x8] sm:$0xff]
        %v1788 = vld [vmem:[%s1785 + $0x10] sm:$0xff]
        %v1789 = vld [vmem:[%s1785 + $0x18] sm:$0xff]
        %v1790 = vld [vmem:[%s1785 + $0x20] sm:$0xff]
        %v1791 = vld [vmem:[%s1785 + $0x28] sm:$0xff]
        %v1792 = vld [vmem:[%s1785 + $0x30] sm:$0xff]
        %v1793 = vld [vmem:[%s1785 + $0x38] sm:$0xff]
        %v1794 = vld [vmem:[%s1785 + $0x40] sm:$0xff]
        %v1795 = vld [vmem:[%s1785 + $0x48] sm:$0xff]
        %v1796 = vld [vmem:[%s1785 + $0x50] sm:$0xff]
        %v1797 = vld [vmem:[%s1785 + $0x58] sm:$0xff]
        %vm1798 = vsmask.f32 6400
        %v1799 = vrot.slane %v662, 1
        %v1800 = vrot.slane %v664, 2
        %v1801 = vor.u32 %v1799, %v1800
        %v1802 = vrot.slane %v673, 1
        %v1803 = vrot.slane %v669, 2
        %v1804 = vor.u32 %v1802, %v1803
        %v1805 = vsel %vm1798, %v1801, %v1804
        %v1806 = vrot.slane %v681, 1
        %v1807 = vrot.slane %v677, 2
        %v1808 = vor.u32 %v1806, %v1807
        %v1809 = vsel %vm1798, %v1804, %v1808
        %v1810 = vrot.slane %v689, 1
        %v1811 = vrot.slane %v685, 2
        %v1812 = vor.u32 %v1810, %v1811
        %v1813 = vsel %vm1798, %v1808, %v1812
        %v1814 = vrot.slane %v697, 1
        %v1815 = vrot.slane %v693, 2
        %v1816 = vor.u32 %v1814, %v1815
        %v1817 = vsel %vm1798, %v1812, %v1816
        %v1818 = vrot.slane %v705, 1
        %v1819 = vrot.slane %v701, 2
        %v1820 = vor.u32 %v1818, %v1819
        %v1821 = vsel %vm1798, %v1816, %v1820
        %v1822 = vrot.slane %v713, 1
        %v1823 = vrot.slane %v709, 2
        %v1824 = vor.u32 %v1822, %v1823
        %v1825 = vsel %vm1798, %v1820, %v1824
        %v1826 = vrot.slane %v721, 1
        %v1827 = vrot.slane %v717, 2
        %v1828 = vor.u32 %v1826, %v1827
        %v1829 = vsel %vm1798, %v1824, %v1828
        %v1830 = vrot.slane %v729, 1
        %v1831 = vrot.slane %v725, 2
        %v1832 = vor.u32 %v1830, %v1831
        %v1833 = vsel %vm1798, %v1828, %v1832
        %v1834 = vrot.slane %v737, 1
        %v1835 = vrot.slane %v733, 2
        %v1836 = vor.u32 %v1834, %v1835
        %v1837 = vsel %vm1798, %v1832, %v1836
        %v1838 = vrot.slane %v745, 1
        %v1839 = vrot.slane %v741, 2
        %v1840 = vor.u32 %v1838, %v1839
        %v1841 = vsel %vm1798, %v1836, %v1840
        %v1842 = vrot.slane %v753, 1
        %v1843 = vrot.slane %v749, 2
        %v1844 = vor.u32 %v1842, %v1843
        %v1845 = vsel %vm1798, %v1840, %v1844
        %v1846 = vrot.slane %v761, 1
        %v1847 = vrot.slane %v757, 2
        %v1848 = vor.u32 %v1846, %v1847
        %v1849 = vsel %vm1798, %v1844, %v1848
        %v1850 = vrot.slane %v769, 1
        %v1851 = vrot.slane %v765, 2
        %v1852 = vor.u32 %v1850, %v1851
        %v1853 = vsel %vm1798, %v1848, %v1852
        %v1854 = vrot.slane %v777, 1
        %v1855 = vrot.slane %v773, 2
        %v1856 = vor.u32 %v1854, %v1855
        %v1857 = vsel %vm1798, %v1852, %v1856
        %v1858 = vrot.slane %v785, 1
        %v1859 = vrot.slane %v781, 2
        %v1860 = vor.u32 %v1858, %v1859
        %v1861 = vsel %vm1798, %v1856, %v1860
        %v1874 = vunpack.c.l.b16 %v1786
        %v1875 = vunpack.c.h.b16 %v1786
        %v1876 = vunpack.c.l.b16 %v1787
        %v1877 = vunpack.c.h.b16 %v1787
        %v1878 = vunpack.c.l.b16 %v1788
        %v1879 = vunpack.c.h.b16 %v1788
        %v1880 = vunpack.c.l.b16 %v1789
        %v1881 = vunpack.c.h.b16 %v1789
        %v1882 = vunpack.c.l.b16 %v1790
        %v1883 = vunpack.c.h.b16 %v1790
        %v1884 = vunpack.c.l.b16 %v1791
        %v1885 = vunpack.c.h.b16 %v1791
        %v1886 = vunpack.c.l.b16 %v1792
        %v1887 = vunpack.c.h.b16 %v1792
        %v1888 = vunpack.c.l.b16 %v1793
        %v1889 = vunpack.c.h.b16 %v1793
        %v1890 = vunpack.c.l.b16 %v1794
        %v1891 = vunpack.c.h.b16 %v1794
        %v1892 = vunpack.c.l.b16 %v1795
        %v1893 = vunpack.c.h.b16 %v1795
        %v1894 = vunpack.c.l.b16 %v1796
        %v1895 = vunpack.c.h.b16 %v1796
        %v1896 = vunpack.c.l.b16 %v1797
        %v1897 = vunpack.c.h.b16 %v1797
        %v1898 = vpack.c.b16 %v1876, %v1874
        %v1899 = vpack.c.b16 %v1877, %v1875
        %v1900 = vpack.c.b16 %v1880, %v1878
        %v1901 = vpack.c.b16 %v1881, %v1879
        %v1902 = vpack.c.b16 %v1884, %v1882
        %v1903 = vpack.c.b16 %v1885, %v1883
        %v1904 = vpack.c.b16 %v1888, %v1886
        %v1905 = vpack.c.b16 %v1889, %v1887
        %v1906 = vpack.c.b16 %v1892, %v1890
        %v1907 = vpack.c.b16 %v1893, %v1891
        %v1908 = vpack.c.b16 %v1896, %v1894
        %v1909 = vpack.c.b16 %v1897, %v1895
        %v1923 = vsel %vm848, %v1805, 0
        %v1926 = vsel %vm848, %v1809, 0
        %v1929 = vsel %vm848, %v1813, 0
        %v1932 = vsel %vm848, %v1817, 0
        %v1935 = vsel %vm848, %v1821, 0
        %v1938 = vsel %vm848, %v1825, 0
        %v1941 = vsel %vm848, %v1829, 0
        %v1944 = vsel %vm848, %v1833, 0
        %v1947 = vsel %vm848, %v1837, 0
        %v1950 = vsel %vm848, %v1841, 0
        %v1953 = vsel %vm848, %v1845, 0
        %v1956 = vsel %vm848, %v1849, 0
        %v1959 = vsel %vm848, %v1853, 0
        %v1962 = vsel %vm848, %v1857, 0
        %v1965 = vsel %vm848, %v1861, 0
        %v1968 = vsel %vm848, %v1860, 0
        %1970 = vmatprep.subr.bf16.mxu0 %v1899
        %1971 = vmatpush1.bf16.msra.mxu0 %v1898
        %1972 = vmatprep.subr.bf16.mxu0 %v1901
        %1973 = vmatpush1.bf16.msra.mxu0 %v1900
        %1974 = vmatprep.subr.bf16.mxu0 %v1903
        %1975 = vmatpush1.bf16.msra.mxu0 %v1902
        %1976 = vmatprep.subr.bf16.mxu0 %v1905
        %1977 = vmatpush1.bf16.msra.mxu0 %v1904
        %1978 = vmatprep.subr.bf16.mxu0 %v1907
        %1979 = vmatpush1.bf16.msra.mxu0 %v1906
        %1980 = vmatprep.subr.bf16.mxu0 %v1909
        %1981 = vmatpush1.bf16.msra.mxu0 %v1908
        %1982 = vmatprep.subr.bf16.mxu0 0
        %1983 = vmatpush1.bf16.msra.mxu0 0
        %1984 = vmatprep.subr.bf16.mxu0 0
        %1985 = vmatpush1.bf16.msra.mxu0 0
        %1986 = vmatprep.subr.bf16.mxu0 0
        %1987 = vmatpush1.bf16.msra.mxu0 0
        %1988 = vmatprep.subr.bf16.mxu0 0
        %1989 = vmatpush1.bf16.msra.mxu0 0
        %1990 = vmatprep.subr.bf16.mxu0 0
        %1991 = vmatpush1.bf16.msra.mxu0 0
        %1992 = vmatprep.subr.bf16.mxu0 0
        %1993 = vmatpush1.bf16.msra.mxu0 0
        %1994 = vmatprep.subr.bf16.mxu0 0
        %1995 = vmatpush1.bf16.msra.mxu0 0
        %1996 = vmatprep.subr.bf16.mxu0 0
        %1997 = vmatpush1.bf16.msra.mxu0 0
        %1998 = vmatprep.subr.bf16.mxu0 0
        %1999 = vmatpush1.bf16.msra.mxu0 0
        %2000 = vmatprep.subr.bf16.mxu0 0
        %2001 = vmatpush1.bf16.msra.mxu0 0
        %2002 = vmatprep.mubr.bf16.mxu0 0
        %2003 = vmatmul.mubr.bf16.gmra.mrb[0].mxu0 %v1923
        %v2004 = vpop.f32.mrb[0].mxu0
        %v2005 = vadd.f32 0.0, %v2004
        %v2006 = vpop.f32.mrb[0].mxu0
        %v2007 = vadd.f32 0.0, %v2006
        %v2008 = vpop.f32.mrb[0].mxu0
        %v2009 = vadd.f32 0.0, %v2008
        %v2010 = vpop.f32.mrb[0].mxu0
        %v2011 = vadd.f32 0.0, %v2010
        %2012 = vmatprep.mubr.bf16.mxu0 0
        %2013 = vmatmul.mubr.bf16.gmra.mrb[0].mxu0 %v1926
        %v2014 = vpop.f32.mrb[0].mxu0
        %v2015 = vadd.f32 0.0, %v2014
        %v2016 = vpop.f32.mrb[0].mxu0
        %v2017 = vadd.f32 0.0, %v2016
        %v2018 = vpop.f32.mrb[0].mxu0
        %v2019 = vadd.f32 0.0, %v2018
        %v2020 = vpop.f32.mrb[0].mxu0
        %v2021 = vadd.f32 0.0, %v2020
        %2022 = vmatprep.mubr.bf16.mxu0 0
        %2023 = vmatmul.mubr.bf16.gmra.mrb[0].mxu0 %v1929
        %v2024 = vpop.f32.mrb[0].mxu0
        %v2025 = vadd.f32 0.0, %v2024
        %v2026 = vpop.f32.mrb[0].mxu0
        %v2027 = vadd.f32 0.0, %v2026
        %v2028 = vpop.f32.mrb[0].mxu0
        %v2029 = vadd.f32 0.0, %v2028
        %v2030 = vpop.f32.mrb[0].mxu0
        %v2031 = vadd.f32 0.0, %v2030
        %2032 = vmatprep.mubr.bf16.mxu0 0
        %2033 = vmatmul.mubr.bf16.gmra.mrb[0].mxu0 %v1932
        %v2034 = vpop.f32.mrb[0].mxu0
        %v2035 = vadd.f32 0.0, %v2034
        %v2036 = vpop.f32.mrb[0].mxu0
        %v2037 = vadd.f32 0.0, %v2036
        %v2038 = vpop.f32.mrb[0].mxu0
        %v2039 = vadd.f32 0.0, %v2038
        %v2040 = vpop.f32.mrb[0].mxu0
        %v2041 = vadd.f32 0.0, %v2040
        %2042 = vmatprep.mubr.bf16.mxu0 0
        %2043 = vmatmul.mubr.bf16.gmra.mrb[0].mxu0 %v1935
        %v2044 = vpop.f32.mrb[0].mxu0
        %v2045 = vadd.f32 0.0, %v2044
        %v2046 = vpop.f32.mrb[0].mxu0
        %v2047 = vadd.f32 0.0, %v2046
        %v2048 = vpop.f32.mrb[0].mxu0
        %v2049 = vadd.f32 0.0, %v2048
        %v2050 = vpop.f32.mrb[0].mxu0
        %v2051 = vadd.f32 0.0, %v2050
        %2052 = vmatprep.mubr.bf16.mxu0 0
        %2053 = vmatmul.mubr.bf16.gmra.mrb[0].mxu0 %v1938
        %v2054 = vpop.f32.mrb[0].mxu0
        %v2055 = vadd.f32 0.0, %v2054
        %v2056 = vpop.f32.mrb[0].mxu0
        %v2057 = vadd.f32 0.0, %v2056
        %v2058 = vpop.f32.mrb[0].mxu0
        %v2059 = vadd.f32 0.0, %v2058
        %v2060 = vpop.f32.mrb[0].mxu0
        %v2061 = vadd.f32 0.0, %v2060
        %2062 = vmatprep.mubr.bf16.mxu0 0
        %2063 = vmatmul.mubr.bf16.gmra.mrb[0].mxu0 %v1941
        %v2064 = vpop.f32.mrb[0].mxu0
        %v2065 = vadd.f32 0.0, %v2064
        %v2066 = vpop.f32.mrb[0].mxu0
        %v2067 = vadd.f32 0.0, %v2066
        %v2068 = vpop.f32.mrb[0].mxu0
        %v2069 = vadd.f32 0.0, %v2068
        %v2070 = vpop.f32.mrb[0].mxu0
        %v2071 = vadd.f32 0.0, %v2070
        %2072 = vmatprep.mubr.bf16.mxu0 0
        %2073 = vmatmul.mubr.bf16.gmra.mrb[0].mxu0 %v1944
        %v2074 = vpop.f32.mrb[0].mxu0
        %v2075 = vadd.f32 0.0, %v2074
        %v2076 = vpop.f32.mrb[0].mxu0
        %v2077 = vadd.f32 0.0, %v2076
        %v2078 = vpop.f32.mrb[0].mxu0
        %v2079 = vadd.f32 0.0, %v2078
        %v2080 = vpop.f32.mrb[0].mxu0
        %v2081 = vadd.f32 0.0, %v2080
        %2082 = vmatprep.mubr.bf16.mxu0 0
        %2083 = vmatmul.mubr.bf16.gmra.mrb[0].mxu0 %v1947
        %v2084 = vpop.f32.mrb[0].mxu0
        %v2085 = vadd.f32 0.0, %v2084
        %v2086 = vpop.f32.mrb[0].mxu0
        %v2087 = vadd.f32 0.0, %v2086
        %v2088 = vpop.f32.mrb[0].mxu0
        %v2089 = vadd.f32 0.0, %v2088
        %v2090 = vpop.f32.mrb[0].mxu0
        %v2091 = vadd.f32 0.0, %v2090
        %2092 = vmatprep.mubr.bf16.mxu0 0
        %2093 = vmatmul.mubr.bf16.gmra.mrb[0].mxu0 %v1950
        %v2094 = vpop.f32.mrb[0].mxu0
        %v2095 = vadd.f32 0.0, %v2094
        %v2096 = vpop.f32.mrb[0].mxu0
        %v2097 = vadd.f32 0.0, %v2096
        %v2098 = vpop.f32.mrb[0].mxu0
        %v2099 = vadd.f32 0.0, %v2098
        %v2100 = vpop.f32.mrb[0].mxu0
        %v2101 = vadd.f32 0.0, %v2100
        %2102 = vmatprep.mubr.bf16.mxu0 0
        %2103 = vmatmul.mubr.bf16.gmra.mrb[0].mxu0 %v1953
        %v2104 = vpop.f32.mrb[0].mxu0
        %v2105 = vadd.f32 0.0, %v2104
        %v2106 = vpop.f32.mrb[0].mxu0
        %v2107 = vadd.f32 0.0, %v2106
        %v2108 = vpop.f32.mrb[0].mxu0
        %v2109 = vadd.f32 0.0, %v2108
        %v2110 = vpop.f32.mrb[0].mxu0
        %v2111 = vadd.f32 0.0, %v2110
        %2112 = vmatprep.mubr.bf16.mxu0 0
        %2113 = vmatmul.mubr.bf16.gmra.mrb[0].mxu0 %v1956
        %v2114 = vpop.f32.mrb[0].mxu0
        %v2115 = vadd.f32 0.0, %v2114
        %v2116 = vpop.f32.mrb[0].mxu0
        %v2117 = vadd.f32 0.0, %v2116
        %v2118 = vpop.f32.mrb[0].mxu0
        %v2119 = vadd.f32 0.0, %v2118
        %v2120 = vpop.f32.mrb[0].mxu0
        %v2121 = vadd.f32 0.0, %v2120
        %2122 = vmatprep.mubr.bf16.mxu0 0
        %2123 = vmatmul.mubr.bf16.gmra.mrb[0].mxu0 %v1959
        %v2124 = vpop.f32.mrb[0].mxu0
        %v2125 = vadd.f32 0.0, %v2124
        %v2126 = vpop.f32.mrb[0].mxu0
        %v2127 = vadd.f32 0.0, %v2126
        %v2128 = vpop.f32.mrb[0].mxu0
        %v2129 = vadd.f32 0.0, %v2128
        %v2130 = vpop.f32.mrb[0].mxu0
        %v2131 = vadd.f32 0.0, %v2130
        %2132 = vmatprep.mubr.bf16.mxu0 0
        %2133 = vmatmul.mubr.bf16.gmra.mrb[0].mxu0 %v1962
        %v2134 = vpop.f32.mrb[0].mxu0
        %v2135 = vadd.f32 0.0, %v2134
        %v2136 = vpop.f32.mrb[0].mxu0
        %v2137 = vadd.f32 0.0, %v2136
        %v2138 = vpop.f32.mrb[0].mxu0
        %v2139 = vadd.f32 0.0, %v2138
        %v2140 = vpop.f32.mrb[0].mxu0
        %v2141 = vadd.f32 0.0, %v2140
        %2142 = vmatprep.mubr.bf16.mxu0 0
        %2143 = vmatmul.mubr.bf16.gmra.mrb[0].mxu0 %v1965
        %v2144 = vpop.f32.mrb[0].mxu0
        %v2145 = vadd.f32 0.0, %v2144
        %v2146 = vpop.f32.mrb[0].mxu0
        %v2147 = vadd.f32 0.0, %v2146
        %v2148 = vpop.f32.mrb[0].mxu0
        %v2149 = vadd.f32 0.0, %v2148
        %v2150 = vpop.f32.mrb[0].mxu0
        %v2151 = vadd.f32 0.0, %v2150
        %2152 = vmatprep.mubr.bf16.mxu0 0
        %2153 = vmatmul.mubr.bf16.gmra.mrb[0].mxu0 %v1968
        %v2154 = vpop.f32.mrb[0].mxu0
        %v2155 = vadd.f32 0.0, %v2154
        %v2156 = vpop.f32.mrb[0].mxu0
        %v2157 = vadd.f32 0.0, %v2156
        %v2158 = vpop.f32.mrb[0].mxu0
        %v2159 = vadd.f32 0.0, %v2158
        %v2160 = vpop.f32.mrb[0].mxu0
        %v2161 = vadd.f32 0.0, %v2160
        %2162 = vdwg.mxu0
        %v2163 = vadd.f32 %v1721, %v2005
        %v2164 = vadd.f32 %v1722, %v2007
        %v2165 = vadd.f32 %v1723, %v2009
        %v2166 = vadd.f32 %v1724, %v2011
        %v2167 = vadd.f32 %v1725, %v2015
        %v2168 = vadd.f32 %v1726, %v2017
        %v2169 = vadd.f32 %v1727, %v2019
        %v2170 = vadd.f32 %v1728, %v2021
        %v2171 = vadd.f32 %v1729, %v2025
        %v2172 = vadd.f32 %v1730, %v2027
        %v2173 = vadd.f32 %v1731, %v2029
        %v2174 = vadd.f32 %v1732, %v2031
        %v2175 = vadd.f32 %v1733, %v2035
        %v2176 = vadd.f32 %v1734, %v2037
        %v2177 = vadd.f32 %v1735, %v2039
        %v2178 = vadd.f32 %v1736, %v2041
        %v2179 = vadd.f32 %v1737, %v2045
        %v2180 = vadd.f32 %v1738, %v2047
        %v2181 = vadd.f32 %v1739, %v2049
        %v2182 = vadd.f32 %v1740, %v2051
        %v2183 = vadd.f32 %v1741, %v2055
        %v2184 = vadd.f32 %v1742, %v2057
        %v2185 = vadd.f32 %v1743, %v2059
        %v2186 = vadd.f32 %v1744, %v2061
        %v2187 = vadd.f32 %v1745, %v2065
        %v2188 = vadd.f32 %v1746, %v2067
        %v2189 = vadd.f32 %v1747, %v2069
        %v2190 = vadd.f32 %v1748, %v2071
        %v2191 = vadd.f32 %v1749, %v2075
        %v2192 = vadd.f32 %v1750, %v2077
        %v2193 = vadd.f32 %v1751, %v2079
        %v2194 = vadd.f32 %v1752, %v2081
        %v2195 = vadd.f32 %v1753, %v2085
        %v2196 = vadd.f32 %v1754, %v2087
        %v2197 = vadd.f32 %v1755, %v2089
        %v2198 = vadd.f32 %v1756, %v2091
        %v2199 = vadd.f32 %v1757, %v2095
        %v2200 = vadd.f32 %v1758, %v2097
        %v2201 = vadd.f32 %v1759, %v2099
        %v2202 = vadd.f32 %v1760, %v2101
        %v2203 = vadd.f32 %v1761, %v2105
        %v2204 = vadd.f32 %v1762, %v2107
        %v2205 = vadd.f32 %v1763, %v2109
        %v2206 = vadd.f32 %v1764, %v2111
        %v2207 = vadd.f32 %v1765, %v2115
        %v2208 = vadd.f32 %v1766, %v2117
        %v2209 = vadd.f32 %v1767, %v2119
        %v2210 = vadd.f32 %v1768, %v2121
        %v2211 = vadd.f32 %v1769, %v2125
        %v2212 = vadd.f32 %v1770, %v2127
        %v2213 = vadd.f32 %v1771, %v2129
        %v2214 = vadd.f32 %v1772, %v2131
        %v2215 = vadd.f32 %v1773, %v2135
        %v2216 = vadd.f32 %v1774, %v2137
        %v2217 = vadd.f32 %v1775, %v2139
        %v2218 = vadd.f32 %v1776, %v2141
        %v2219 = vadd.f32 %v1777, %v2145
        %v2220 = vadd.f32 %v1778, %v2147
        %v2221 = vadd.f32 %v1779, %v2149
        %v2222 = vadd.f32 %v1780, %v2151
        %v2223 = vadd.f32 %v1781, %v2155
        %v2224 = vadd.f32 %v1782, %v2157
        %v2225 = vadd.f32 %v1783, %v2159
        %v2226 = vadd.f32 %v1784, %v2161
        %s2227 = scalar_lea.vmem %s1, 384
        %v2228 = vld [vmem:[%s2227] sm:$0xff]
        %v2229 = vld [vmem:[%s2227 + $0x8] sm:$0xff]
        %v2230 = vld [vmem:[%s2227 + $0x10] sm:$0xff]
        %v2231 = vld [vmem:[%s2227 + $0x18] sm:$0xff]
        %v2232 = vld [vmem:[%s2227 + $0x20] sm:$0xff]
        %v2233 = vld [vmem:[%s2227 + $0x28] sm:$0xff]
        %v2234 = vld [vmem:[%s2227 + $0x30] sm:$0xff]
        %v2235 = vld [vmem:[%s2227 + $0x38] sm:$0xff]
        %v2236 = vld [vmem:[%s2227 + $0x40] sm:$0xff]
        %v2237 = vld [vmem:[%s2227 + $0x48] sm:$0xff]
        %v2238 = vld [vmem:[%s2227 + $0x50] sm:$0xff]
        %v2239 = vld [vmem:[%s2227 + $0x58] sm:$0xff]
        %vm2240 = vcmask 1045504
        %v2241 = vrot.slane %v644, 2
        %v2242 = vrot.slane %v645, 2
        %v2243 = vsel %vm2240, %v2241, %v2242
        %v2244 = vrot.slane %v646, 2
        %v2245 = vsel %vm2240, %v2242, %v2244
        %v2246 = vrot.slane %v647, 2
        %v2247 = vsel %vm2240, %v2244, %v2246
        %v2248 = vrot.slane %v648, 2
        %v2249 = vsel %vm2240, %v2246, %v2248
        %v2250 = vrot.slane %v649, 2
        %v2251 = vsel %vm2240, %v2248, %v2250
        %v2252 = vrot.slane %v650, 2
        %v2253 = vsel %vm2240, %v2250, %v2252
        %v2254 = vrot.slane %v651, 2
        %v2255 = vsel %vm2240, %v2252, %v2254
        %v2256 = vrot.slane %v652, 2
        %v2257 = vsel %vm2240, %v2254, %v2256
        %v2258 = vrot.slane %v653, 2
        %v2259 = vsel %vm2240, %v2256, %v2258
        %v2260 = vrot.slane %v654, 2
        %v2261 = vsel %vm2240, %v2258, %v2260
        %v2262 = vrot.slane %v655, 2
        %v2263 = vsel %vm2240, %v2260, %v2262
        %v2264 = vrot.slane %v656, 2
        %v2265 = vsel %vm2240, %v2262, %v2264
        %v2266 = vrot.slane %v657, 2
        %v2267 = vsel %vm2240, %v2264, %v2266
        %v2268 = vrot.slane %v658, 2
        %v2269 = vsel %vm2240, %v2266, %v2268
        %v2270 = vrot.slane %v659, 2
        %v2271 = vsel %vm2240, %v2268, %v2270
        %v2284 = vunpack.c.l.b16 %v2228
        %v2285 = vunpack.c.h.b16 %v2228
        %v2286 = vunpack.c.l.b16 %v2229
        %v2287 = vunpack.c.h.b16 %v2229
        %v2288 = vunpack.c.l.b16 %v2230
        %v2289 = vunpack.c.h.b16 %v2230
        %v2290 = vunpack.c.l.b16 %v2231
        %v2291 = vunpack.c.h.b16 %v2231
        %v2292 = vunpack.c.l.b16 %v2232
        %v2293 = vunpack.c.h.b16 %v2232
        %v2294 = vunpack.c.l.b16 %v2233
        %v2295 = vunpack.c.h.b16 %v2233
        %v2296 = vunpack.c.l.b16 %v2234
        %v2297 = vunpack.c.h.b16 %v2234
        %v2298 = vunpack.c.l.b16 %v2235
        %v2299 = vunpack.c.h.b16 %v2235
        %v2300 = vunpack.c.l.b16 %v2236
        %v2301 = vunpack.c.h.b16 %v2236
        %v2302 = vunpack.c.l.b16 %v2237
        %v2303 = vunpack.c.h.b16 %v2237
        %v2304 = vunpack.c.l.b16 %v2238
        %v2305 = vunpack.c.h.b16 %v2238
        %v2306 = vunpack.c.l.b16 %v2239
        %v2307 = vunpack.c.h.b16 %v2239
        %v2308 = vpack.c.b16 %v2286, %v2284
        %v2309 = vpack.c.b16 %v2287, %v2285
        %v2310 = vpack.c.b16 %v2290, %v2288
        %v2311 = vpack.c.b16 %v2291, %v2289
        %v2312 = vpack.c.b16 %v2294, %v2292
        %v2313 = vpack.c.b16 %v2295, %v2293
        %v2314 = vpack.c.b16 %v2298, %v2296
        %v2315 = vpack.c.b16 %v2299, %v2297
        %v2316 = vpack.c.b16 %v2302, %v2300
        %v2317 = vpack.c.b16 %v2303, %v2301
        %v2318 = vpack.c.b16 %v2306, %v2304
        %v2319 = vpack.c.b16 %v2307, %v2305
        %v2333 = vsel %vm848, %v2243, 0
        %v2336 = vsel %vm848, %v2245, 0
        %v2339 = vsel %vm848, %v2247, 0
        %v2342 = vsel %vm848, %v2249, 0
        %v2345 = vsel %vm848, %v2251, 0
        %v2348 = vsel %vm848, %v2253, 0
        %v2351 = vsel %vm848, %v2255, 0
        %v2354 = vsel %vm848, %v2257, 0
        %v2357 = vsel %vm848, %v2259, 0
        %v2360 = vsel %vm848, %v2261, 0
        %v2363 = vsel %vm848, %v2263, 0
        %v2366 = vsel %vm848, %v2265, 0
        %v2369 = vsel %vm848, %v2267, 0
        %v2372 = vsel %vm848, %v2269, 0
        %v2375 = vsel %vm848, %v2271, 0
        %v2378 = vsel %vm848, %v2270, 0
        %2380 = vmatprep.subr.bf16.mxu0 %v2309
        %2381 = vmatpush1.bf16.msra.mxu0 %v2308
        %2382 = vmatprep.subr.bf16.mxu0 %v2311
        %2383 = vmatpush1.bf16.msra.mxu0 %v2310
        %2384 = vmatprep.subr.bf16.mxu0 %v2313
        %2385 = vmatpush1.bf16.msra.mxu0 %v2312
        %2386 = vmatprep.subr.bf16.mxu0 %v2315
        %2387 = vmatpush1.bf16.msra.mxu0 %v2314
        %2388 = vmatprep.subr.bf16.mxu0 %v2317
        %2389 = vmatpush1.bf16.msra.mxu0 %v2316
        %2390 = vmatprep.subr.bf16.mxu0 %v2319
        %2391 = vmatpush1.bf16.msra.mxu0 %v2318
        %2392 = vmatprep.subr.bf16.mxu0 0
        %2393 = vmatpush1.bf16.msra.mxu0 0
        %2394 = vmatprep.subr.bf16.mxu0 0
        %2395 = vmatpush1.bf16.msra.mxu0 0
        %2396 = vmatprep.subr.bf16.mxu0 0
        %2397 = vmatpush1.bf16.msra.mxu0 0
        %2398 = vmatprep.subr.bf16.mxu0 0
        %2399 = vmatpush1.bf16.msra.mxu0 0
        %2400 = vmatprep.subr.bf16.mxu0 0
        %2401 = vmatpush1.bf16.msra.mxu0 0
        %2402 = vmatprep.subr.bf16.mxu0 0
        %2403 = vmatpush1.bf16.msra.mxu0 0
        %2404 = vmatprep.subr.bf16.mxu0 0
        %2405 = vmatpush1.bf16.msra.mxu0 0
        %2406 = vmatprep.subr.bf16.mxu0 0
        %2407 = vmatpush1.bf16.msra.mxu0 0
        %2408 = vmatprep.subr.bf16.mxu0 0
        %2409 = vmatpush1.bf16.msra.mxu0 0
        %2410 = vmatprep.subr.bf16.mxu0 0
        %2411 = vmatpush1.bf16.msra.mxu0 0
        %2412 = vmatprep.mubr.bf16.mxu0 0
        %2413 = vmatmul.mubr.bf16.gmra.mrb[0].mxu0 %v2333
        %v2414 = vpop.f32.mrb[0].mxu0
        %v2415 = vadd.f32 0.0, %v2414
        %v2416 = vpop.f32.mrb[0].mxu0
        %v2417 = vadd.f32 0.0, %v2416
        %v2418 = vpop.f32.mrb[0].mxu0
        %v2419 = vadd.f32 0.0, %v2418
        %v2420 = vpop.f32.mrb[0].mxu0
        %v2421 = vadd.f32 0.0, %v2420
        %2422 = vmatprep.mubr.bf16.mxu0 0
        %2423 = vmatmul.mubr.bf16.gmra.mrb[0].mxu0 %v2336
        %v2424 = vpop.f32.mrb[0].mxu0
        %v2425 = vadd.f32 0.0, %v2424
        %v2426 = vpop.f32.mrb[0].mxu0
        %v2427 = vadd.f32 0.0, %v2426
        %v2428 = vpop.f32.mrb[0].mxu0
        %v2429 = vadd.f32 0.0, %v2428
        %v2430 = vpop.f32.mrb[0].mxu0
        %v2431 = vadd.f32 0.0, %v2430
        %2432 = vmatprep.mubr.bf16.mxu0 0
        %2433 = vmatmul.mubr.bf16.gmra.mrb[0].mxu0 %v2339
        %v2434 = vpop.f32.mrb[0].mxu0
        %v2435 = vadd.f32 0.0, %v2434
        %v2436 = vpop.f32.mrb[0].mxu0
        %v2437 = vadd.f32 0.0, %v2436
        %v2438 = vpop.f32.mrb[0].mxu0
        %v2439 = vadd.f32 0.0, %v2438
        %v2440 = vpop.f32.mrb[0].mxu0
        %v2441 = vadd.f32 0.0, %v2440
        %2442 = vmatprep.mubr.bf16.mxu0 0
        %2443 = vmatmul.mubr.bf16.gmra.mrb[0].mxu0 %v2342
        %v2444 = vpop.f32.mrb[0].mxu0
        %v2445 = vadd.f32 0.0, %v2444
        %v2446 = vpop.f32.mrb[0].mxu0
        %v2447 = vadd.f32 0.0, %v2446
        %v2448 = vpop.f32.mrb[0].mxu0
        %v2449 = vadd.f32 0.0, %v2448
        %v2450 = vpop.f32.mrb[0].mxu0
        %v2451 = vadd.f32 0.0, %v2450
        %2452 = vmatprep.mubr.bf16.mxu0 0
        %2453 = vmatmul.mubr.bf16.gmra.mrb[0].mxu0 %v2345
        %v2454 = vpop.f32.mrb[0].mxu0
        %v2455 = vadd.f32 0.0, %v2454
        %v2456 = vpop.f32.mrb[0].mxu0
        %v2457 = vadd.f32 0.0, %v2456
        %v2458 = vpop.f32.mrb[0].mxu0
        %v2459 = vadd.f32 0.0, %v2458
        %v2460 = vpop.f32.mrb[0].mxu0
        %v2461 = vadd.f32 0.0, %v2460
        %2462 = vmatprep.mubr.bf16.mxu0 0
        %2463 = vmatmul.mubr.bf16.gmra.mrb[0].mxu0 %v2348
        %v2464 = vpop.f32.mrb[0].mxu0
        %v2465 = vadd.f32 0.0, %v2464
        %v2466 = vpop.f32.mrb[0].mxu0
        %v2467 = vadd.f32 0.0, %v2466
        %v2468 = vpop.f32.mrb[0].mxu0
        %v2469 = vadd.f32 0.0, %v2468
        %v2470 = vpop.f32.mrb[0].mxu0
        %v2471 = vadd.f32 0.0, %v2470
        %2472 = vmatprep.mubr.bf16.mxu0 0
        %2473 = vmatmul.mubr.bf16.gmra.mrb[0].mxu0 %v2351
        %v2474 = vpop.f32.mrb[0].mxu0
        %v2475 = vadd.f32 0.0, %v2474
        %v2476 = vpop.f32.mrb[0].mxu0
        %v2477 = vadd.f32 0.0, %v2476
        %v2478 = vpop.f32.mrb[0].mxu0
        %v2479 = vadd.f32 0.0, %v2478
        %v2480 = vpop.f32.mrb[0].mxu0
        %v2481 = vadd.f32 0.0, %v2480
        %2482 = vmatprep.mubr.bf16.mxu0 0
        %2483 = vmatmul.mubr.bf16.gmra.mrb[0].mxu0 %v2354
        %v2484 = vpop.f32.mrb[0].mxu0
        %v2485 = vadd.f32 0.0, %v2484
        %v2486 = vpop.f32.mrb[0].mxu0
        %v2487 = vadd.f32 0.0, %v2486
        %v2488 = vpop.f32.mrb[0].mxu0
        %v2489 = vadd.f32 0.0, %v2488
        %v2490 = vpop.f32.mrb[0].mxu0
        %v2491 = vadd.f32 0.0, %v2490
        %2492 = vmatprep.mubr.bf16.mxu0 0
        %2493 = vmatmul.mubr.bf16.gmra.mrb[0].mxu0 %v2357
        %v2494 = vpop.f32.mrb[0].mxu0
        %v2495 = vadd.f32 0.0, %v2494
        %v2496 = vpop.f32.mrb[0].mxu0
        %v2497 = vadd.f32 0.0, %v2496
        %v2498 = vpop.f32.mrb[0].mxu0
        %v2499 = vadd.f32 0.0, %v2498
        %v2500 = vpop.f32.mrb[0].mxu0
        %v2501 = vadd.f32 0.0, %v2500
        %2502 = vmatprep.mubr.bf16.mxu0 0
        %2503 = vmatmul.mubr.bf16.gmra.mrb[0].mxu0 %v2360
        %v2504 = vpop.f32.mrb[0].mxu0
        %v2505 = vadd.f32 0.0, %v2504
        %v2506 = vpop.f32.mrb[0].mxu0
        %v2507 = vadd.f32 0.0, %v2506
        %v2508 = vpop.f32.mrb[0].mxu0
        %v2509 = vadd.f32 0.0, %v2508
        %v2510 = vpop.f32.mrb[0].mxu0
        %v2511 = vadd.f32 0.0, %v2510
        %2512 = vmatprep.mubr.bf16.mxu0 0
        %2513 = vmatmul.mubr.bf16.gmra.mrb[0].mxu0 %v2363
        %v2514 = vpop.f32.mrb[0].mxu0
        %v2515 = vadd.f32 0.0, %v2514
        %v2516 = vpop.f32.mrb[0].mxu0
        %v2517 = vadd.f32 0.0, %v2516
        %v2518 = vpop.f32.mrb[0].mxu0
        %v2519 = vadd.f32 0.0, %v2518
        %v2520 = vpop.f32.mrb[0].mxu0
        %v2521 = vadd.f32 0.0, %v2520
        %2522 = vmatprep.mubr.bf16.mxu0 0
        %2523 = vmatmul.mubr.bf16.gmra.mrb[0].mxu0 %v2366
        %v2524 = vpop.f32.mrb[0].mxu0
        %v2525 = vadd.f32 0.0, %v2524
        %v2526 = vpop.f32.mrb[0].mxu0
        %v2527 = vadd.f32 0.0, %v2526
        %v2528 = vpop.f32.mrb[0].mxu0
        %v2529 = vadd.f32 0.0, %v2528
        %v2530 = vpop.f32.mrb[0].mxu0
        %v2531 = vadd.f32 0.0, %v2530
        %2532 = vmatprep.mubr.bf16.mxu0 0
        %2533 = vmatmul.mubr.bf16.gmra.mrb[0].mxu0 %v2369
        %v2534 = vpop.f32.mrb[0].mxu0
        %v2535 = vadd.f32 0.0, %v2534
        %v2536 = vpop.f32.mrb[0].mxu0
        %v2537 = vadd.f32 0.0, %v2536
        %v2538 = vpop.f32.mrb[0].mxu0
        %v2539 = vadd.f32 0.0, %v2538
        %v2540 = vpop.f32.mrb[0].mxu0
        %v2541 = vadd.f32 0.0, %v2540
        %2542 = vmatprep.mubr.bf16.mxu0 0
        %2543 = vmatmul.mubr.bf16.gmra.mrb[0].mxu0 %v2372
        %v2544 = vpop.f32.mrb[0].mxu0
        %v2545 = vadd.f32 0.0, %v2544
        %v2546 = vpop.f32.mrb[0].mxu0
        %v2547 = vadd.f32 0.0, %v2546
        %v2548 = vpop.f32.mrb[0].mxu0
        %v2549 = vadd.f32 0.0, %v2548
        %v2550 = vpop.f32.mrb[0].mxu0
        %v2551 = vadd.f32 0.0, %v2550
        %2552 = vmatprep.mubr.bf16.mxu0 0
        %2553 = vmatmul.mubr.bf16.gmra.mrb[0].mxu0 %v2375
        %v2554 = vpop.f32.mrb[0].mxu0
        %v2555 = vadd.f32 0.0, %v2554
        %v2556 = vpop.f32.mrb[0].mxu0
        %v2557 = vadd.f32 0.0, %v2556
        %v2558 = vpop.f32.mrb[0].mxu0
        %v2559 = vadd.f32 0.0, %v2558
        %v2560 = vpop.f32.mrb[0].mxu0
        %v2561 = vadd.f32 0.0, %v2560
        %2562 = vmatprep.mubr.bf16.mxu0 0
        %2563 = vmatmul.mubr.bf16.gmra.mrb[0].mxu0 %v2378
        %v2564 = vpop.f32.mrb[0].mxu0
        %v2565 = vadd.f32 0.0, %v2564
        %v2566 = vpop.f32.mrb[0].mxu0
        %v2567 = vadd.f32 0.0, %v2566
        %v2568 = vpop.f32.mrb[0].mxu0
        %v2569 = vadd.f32 0.0, %v2568
        %v2570 = vpop.f32.mrb[0].mxu0
        %v2571 = vadd.f32 0.0, %v2570
        %2572 = vdwg.mxu0
        %v2573 = vadd.f32 %v2163, %v2415
        %v2574 = vadd.f32 %v2164, %v2417
        %v2575 = vadd.f32 %v2165, %v2419
        %v2576 = vadd.f32 %v2166, %v2421
        %v2577 = vadd.f32 %v2167, %v2425
        %v2578 = vadd.f32 %v2168, %v2427
        %v2579 = vadd.f32 %v2169, %v2429
        %v2580 = vadd.f32 %v2170, %v2431
        %v2581 = vadd.f32 %v2171, %v2435
        %v2582 = vadd.f32 %v2172, %v2437
        %v2583 = vadd.f32 %v2173, %v2439
        %v2584 = vadd.f32 %v2174, %v2441
        %v2585 = vadd.f32 %v2175, %v2445
        %v2586 = vadd.f32 %v2176, %v2447
        %v2587 = vadd.f32 %v2177, %v2449
        %v2588 = vadd.f32 %v2178, %v2451
        %v2589 = vadd.f32 %v2179, %v2455
        %v2590 = vadd.f32 %v2180, %v2457
        %v2591 = vadd.f32 %v2181, %v2459
        %v2592 = vadd.f32 %v2182, %v2461
        %v2593 = vadd.f32 %v2183, %v2465
        %v2594 = vadd.f32 %v2184, %v2467
        %v2595 = vadd.f32 %v2185, %v2469
        %v2596 = vadd.f32 %v2186, %v2471
        %v2597 = vadd.f32 %v2187, %v2475
        %v2598 = vadd.f32 %v2188, %v2477
        %v2599 = vadd.f32 %v2189, %v2479
        %v2600 = vadd.f32 %v2190, %v2481
        %v2601 = vadd.f32 %v2191, %v2485
        %v2602 = vadd.f32 %v2192, %v2487
        %v2603 = vadd.f32 %v2193, %v2489
        %v2604 = vadd.f32 %v2194, %v2491
        %v2605 = vadd.f32 %v2195, %v2495
        %v2606 = vadd.f32 %v2196, %v2497
        %v2607 = vadd.f32 %v2197, %v2499
        %v2608 = vadd.f32 %v2198, %v2501
        %v2609 = vadd.f32 %v2199, %v2505
        %v2610 = vadd.f32 %v2200, %v2507
        %v2611 = vadd.f32 %v2201, %v2509
        %v2612 = vadd.f32 %v2202, %v2511
        %v2613 = vadd.f32 %v2203, %v2515
        %v2614 = vadd.f32 %v2204, %v2517
        %v2615 = vadd.f32 %v2205, %v2519
        %v2616 = vadd.f32 %v2206, %v2521
        %v2617 = vadd.f32 %v2207, %v2525
        %v2618 = vadd.f32 %v2208, %v2527
        %v2619 = vadd.f32 %v2209, %v2529
        %v2620 = vadd.f32 %v2210, %v2531
        %v2621 = vadd.f32 %v2211, %v2535
        %v2622 = vadd.f32 %v2212, %v2537
        %v2623 = vadd.f32 %v2213, %v2539
        %v2624 = vadd.f32 %v2214, %v2541
        %v2625 = vadd.f32 %v2215, %v2545
        %v2626 = vadd.f32 %v2216, %v2547
        %v2627 = vadd.f32 %v2217, %v2549
        %v2628 = vadd.f32 %v2218, %v2551
        %v2629 = vadd.f32 %v2219, %v2555
        %v2630 = vadd.f32 %v2220, %v2557
        %v2631 = vadd.f32 %v2221, %v2559
        %v2632 = vadd.f32 %v2222, %v2561
        %v2633 = vadd.f32 %v2223, %v2565
        %v2634 = vadd.f32 %v2224, %v2567
        %v2635 = vadd.f32 %v2225, %v2569
        %v2636 = vadd.f32 %v2226, %v2571
        %v2637 = vld [vmem:[%s2] sm:$0x3]
        %v2639 = vlaneseq
        %v2640 = vshrl.u32 %v2639, 7
        %v2641 = vsub.s32 0, %v2640
        %v2642 = vrot.slane %v2637, %v2641
        %v2643 = vlaneseq
        %v2644 = vshrl.u32 %v2643, 7
        %v2645 = vsub.s32 1, %v2644
        %v2646 = vrot.slane %v2637, %v2645
        %v2649 = vadd.f32 %v2573, %v2642
        %v2650 = vadd.f32 %v2574, %v2646
        %v2651 = vadd.f32 %v2575, %v2642
        %v2652 = vadd.f32 %v2576, %v2646
        %v2653 = vadd.f32 %v2577, %v2642
        %v2654 = vadd.f32 %v2578, %v2646
        %v2655 = vadd.f32 %v2579, %v2642
        %v2656 = vadd.f32 %v2580, %v2646
        %v2657 = vadd.f32 %v2581, %v2642
        %v2658 = vadd.f32 %v2582, %v2646
        %v2659 = vadd.f32 %v2583, %v2642
        %v2660 = vadd.f32 %v2584, %v2646
        %v2661 = vadd.f32 %v2585, %v2642
        %v2662 = vadd.f32 %v2586, %v2646
        %v2663 = vadd.f32 %v2587, %v2642
        %v2664 = vadd.f32 %v2588, %v2646
        %v2665 = vadd.f32 %v2589, %v2642
        %v2666 = vadd.f32 %v2590, %v2646
        %v2667 = vadd.f32 %v2591, %v2642
        %v2668 = vadd.f32 %v2592, %v2646
        %v2669 = vadd.f32 %v2593, %v2642
        %v2670 = vadd.f32 %v2594, %v2646
        %v2671 = vadd.f32 %v2595, %v2642
        %v2672 = vadd.f32 %v2596, %v2646
        %v2673 = vadd.f32 %v2597, %v2642
        %v2674 = vadd.f32 %v2598, %v2646
        %v2675 = vadd.f32 %v2599, %v2642
        %v2676 = vadd.f32 %v2600, %v2646
        %v2677 = vadd.f32 %v2601, %v2642
        %v2678 = vadd.f32 %v2602, %v2646
        %v2679 = vadd.f32 %v2603, %v2642
        %v2680 = vadd.f32 %v2604, %v2646
        %v2681 = vadd.f32 %v2605, %v2642
        %v2682 = vadd.f32 %v2606, %v2646
        %v2683 = vadd.f32 %v2607, %v2642
        %v2684 = vadd.f32 %v2608, %v2646
        %v2685 = vadd.f32 %v2609, %v2642
        %v2686 = vadd.f32 %v2610, %v2646
        %v2687 = vadd.f32 %v2611, %v2642
        %v2688 = vadd.f32 %v2612, %v2646
        %v2689 = vadd.f32 %v2613, %v2642
        %v2690 = vadd.f32 %v2614, %v2646
        %v2691 = vadd.f32 %v2615, %v2642
        %v2692 = vadd.f32 %v2616, %v2646
        %v2693 = vadd.f32 %v2617, %v2642
        %v2694 = vadd.f32 %v2618, %v2646
        %v2695 = vadd.f32 %v2619, %v2642
        %v2696 = vadd.f32 %v2620, %v2646
        %v2697 = vadd.f32 %v2621, %v2642
        %v2698 = vadd.f32 %v2622, %v2646
        %v2699 = vadd.f32 %v2623, %v2642
        %v2700 = vadd.f32 %v2624, %v2646
        %v2701 = vadd.f32 %v2625, %v2642
        %v2702 = vadd.f32 %v2626, %v2646
        %v2703 = vadd.f32 %v2627, %v2642
        %v2704 = vadd.f32 %v2628, %v2646
        %v2705 = vadd.f32 %v2629, %v2642
        %v2706 = vadd.f32 %v2630, %v2646
        %v2707 = vadd.f32 %v2631, %v2642
        %v2708 = vadd.f32 %v2632, %v2646
        %v2709 = vadd.f32 %v2633, %v2642
        %v2710 = vadd.f32 %v2634, %v2646
        %v2711 = vadd.f32 %v2635, %v2642
        %v2712 = vadd.f32 %v2636, %v2646
        %v2713 = vmax.f32 %v2649, 0.0
        %v2714 = vmax.f32 %v2650, 0.0
        %v2715 = vmax.f32 %v2651, 0.0
        %v2716 = vmax.f32 %v2652, 0.0
        %v2717 = vmax.f32 %v2653, 0.0
        %v2718 = vmax.f32 %v2654, 0.0
        %v2719 = vmax.f32 %v2655, 0.0
        %v2720 = vmax.f32 %v2656, 0.0
        %v2721 = vmax.f32 %v2657, 0.0
        %v2722 = vmax.f32 %v2658, 0.0
        %v2723 = vmax.f32 %v2659, 0.0
        %v2724 = vmax.f32 %v2660, 0.0
        %v2725 = vmax.f32 %v2661, 0.0
        %v2726 = vmax.f32 %v2662, 0.0
        %v2727 = vmax.f32 %v2663, 0.0
        %v2728 = vmax.f32 %v2664, 0.0
        %v2729 = vmax.f32 %v2665, 0.0
        %v2730 = vmax.f32 %v2666, 0.0
        %v2731 = vmax.f32 %v2667, 0.0
        %v2732 = vmax.f32 %v2668, 0.0
        %v2733 = vmax.f32 %v2669, 0.0
        %v2734 = vmax.f32 %v2670, 0.0
        %v2735 = vmax.f32 %v2671, 0.0
        %v2736 = vmax.f32 %v2672, 0.0
        %v2737 = vmax.f32 %v2673, 0.0
        %v2738 = vmax.f32 %v2674, 0.0
        %v2739 = vmax.f32 %v2675, 0.0
        %v2740 = vmax.f32 %v2676, 0.0
        %v2741 = vmax.f32 %v2677, 0.0
        %v2742 = vmax.f32 %v2678, 0.0
        %v2743 = vmax.f32 %v2679, 0.0
        %v2744 = vmax.f32 %v2680, 0.0
        %v2745 = vmax.f32 %v2681, 0.0
        %v2746 = vmax.f32 %v2682, 0.0
        %v2747 = vmax.f32 %v2683, 0.0
        %v2748 = vmax.f32 %v2684, 0.0
        %v2749 = vmax.f32 %v2685, 0.0
        %v2750 = vmax.f32 %v2686, 0.0
        %v2751 = vmax.f32 %v2687, 0.0
        %v2752 = vmax.f32 %v2688, 0.0
        %v2753 = vmax.f32 %v2689, 0.0
        %v2754 = vmax.f32 %v2690, 0.0
        %v2755 = vmax.f32 %v2691, 0.0
        %v2756 = vmax.f32 %v2692, 0.0
        %v2757 = vmax.f32 %v2693, 0.0
        %v2758 = vmax.f32 %v2694, 0.0
        %v2759 = vmax.f32 %v2695, 0.0
        %v2760 = vmax.f32 %v2696, 0.0
        %v2761 = vmax.f32 %v2697, 0.0
        %v2762 = vmax.f32 %v2698, 0.0
        %v2763 = vmax.f32 %v2699, 0.0
        %v2764 = vmax.f32 %v2700, 0.0
        %v2765 = vmax.f32 %v2701, 0.0
        %v2766 = vmax.f32 %v2702, 0.0
        %v2767 = vmax.f32 %v2703, 0.0
        %v2768 = vmax.f32 %v2704, 0.0
        %v2769 = vmax.f32 %v2705, 0.0
        %v2770 = vmax.f32 %v2706, 0.0
        %v2771 = vmax.f32 %v2707, 0.0
        %v2772 = vmax.f32 %v2708, 0.0
        %v2773 = vmax.f32 %v2709, 0.0
        %v2774 = vmax.f32 %v2710, 0.0
        %v2775 = vmax.f32 %v2711, 0.0
        %v2776 = vmax.f32 %v2712, 0.0
        %v2777 = vpack.c.bf16 %v2715, %v2713
        %v2778 = vpack.c.bf16 %v2716, %v2714
        %v2779 = vpack.c.bf16 %v2719, %v2717
        %v2780 = vpack.c.bf16 %v2720, %v2718
        %v2781 = vpack.c.bf16 %v2723, %v2721
        %v2782 = vpack.c.bf16 %v2724, %v2722
        %v2783 = vpack.c.bf16 %v2727, %v2725
        %v2784 = vpack.c.bf16 %v2728, %v2726
        %v2785 = vpack.c.bf16 %v2731, %v2729
        %v2786 = vpack.c.bf16 %v2732, %v2730
        %v2787 = vpack.c.bf16 %v2735, %v2733
        %v2788 = vpack.c.bf16 %v2736, %v2734
        %v2789 = vpack.c.bf16 %v2739, %v2737
        %v2790 = vpack.c.bf16 %v2740, %v2738
        %v2791 = vpack.c.bf16 %v2743, %v2741
        %v2792 = vpack.c.bf16 %v2744, %v2742
        %v2793 = vpack.c.bf16 %v2747, %v2745
        %v2794 = vpack.c.bf16 %v2748, %v2746
        %v2795 = vpack.c.bf16 %v2751, %v2749
        %v2796 = vpack.c.bf16 %v2752, %v2750
        %v2797 = vpack.c.bf16 %v2755, %v2753
        %v2798 = vpack.c.bf16 %v2756, %v2754
        %v2799 = vpack.c.bf16 %v2759, %v2757
        %v2800 = vpack.c.bf16 %v2760, %v2758
        %v2801 = vpack.c.bf16 %v2763, %v2761
        %v2802 = vpack.c.bf16 %v2764, %v2762
        %v2803 = vpack.c.bf16 %v2767, %v2765
        %v2804 = vpack.c.bf16 %v2768, %v2766
        %v2805 = vpack.c.bf16 %v2771, %v2769
        %v2806 = vpack.c.bf16 %v2772, %v2770
        %v2807 = vpack.c.bf16 %v2775, %v2773
        %v2808 = vpack.c.bf16 %v2776, %v2774
        %v2809 = vld [vmem:[%s3] sm:$0xff]
        %v2810 = vld [vmem:[%s3 + $0x8] sm:$0xff]
        %v2811 = vld [vmem:[%s3 + $0x10] sm:$0xff]
        %v2812 = vld [vmem:[%s3 + $0x18] sm:$0xff]
        %v2813 = vld [vmem:[%s3 + $0x20] sm:$0xff]
        %v2814 = vld [vmem:[%s3 + $0x28] sm:$0xff]
        %v2815 = vld [vmem:[%s3 + $0x30] sm:$0xff]
        %v2816 = vld [vmem:[%s3 + $0x38] sm:$0xff]
        %v2817 = vld [vmem:[%s3 + $0x40] sm:$0xff]
        %v2818 = vld [vmem:[%s3 + $0x48] sm:$0xff]
        %v2819 = vld [vmem:[%s3 + $0x50] sm:$0xff]
        %v2820 = vld [vmem:[%s3 + $0x58] sm:$0xff]
        %v2821 = vld [vmem:[%s3 + $0x60] sm:$0xff]
        %v2822 = vld [vmem:[%s3 + $0x68] sm:$0xff]
        %v2837 = vunpack.c.l.b16 %v2809
        %v2838 = vunpack.c.h.b16 %v2809
        %v2839 = vunpack.c.l.b16 %v2810
        %v2840 = vunpack.c.h.b16 %v2810
        %v2841 = vunpack.c.l.b16 %v2811
        %v2842 = vunpack.c.h.b16 %v2811
        %v2843 = vunpack.c.l.b16 %v2812
        %v2844 = vunpack.c.h.b16 %v2812
        %v2845 = vunpack.c.l.b16 %v2813
        %v2846 = vunpack.c.h.b16 %v2813
        %v2847 = vunpack.c.l.b16 %v2814
        %v2848 = vunpack.c.h.b16 %v2814
        %v2849 = vunpack.c.l.b16 %v2815
        %v2850 = vunpack.c.h.b16 %v2815
        %v2851 = vunpack.c.l.b16 %v2816
        %v2852 = vunpack.c.h.b16 %v2816
        %v2853 = vunpack.c.l.b16 %v2817
        %v2854 = vunpack.c.h.b16 %v2817
        %v2855 = vunpack.c.l.b16 %v2818
        %v2856 = vunpack.c.h.b16 %v2818
        %v2857 = vunpack.c.l.b16 %v2819
        %v2858 = vunpack.c.h.b16 %v2819
        %v2859 = vunpack.c.l.b16 %v2820
        %v2860 = vunpack.c.h.b16 %v2820
        %v2861 = vunpack.c.l.b16 %v2821
        %v2862 = vunpack.c.h.b16 %v2821
        %v2863 = vunpack.c.l.b16 %v2822
        %v2864 = vunpack.c.h.b16 %v2822
        %v2865 = vpack.c.b16 %v2839, %v2837
        %v2866 = vpack.c.b16 %v2840, %v2838
        %v2867 = vpack.c.b16 %v2843, %v2841
        %v2868 = vpack.c.b16 %v2844, %v2842
        %v2869 = vpack.c.b16 %v2847, %v2845
        %v2870 = vpack.c.b16 %v2848, %v2846
        %v2871 = vpack.c.b16 %v2851, %v2849
        %v2872 = vpack.c.b16 %v2852, %v2850
        %v2873 = vpack.c.b16 %v2855, %v2853
        %v2874 = vpack.c.b16 %v2856, %v2854
        %v2875 = vpack.c.b16 %v2859, %v2857
        %v2876 = vpack.c.b16 %v2860, %v2858
        %v2877 = vpack.c.b16 %v2863, %v2861
        %v2878 = vpack.c.b16 %v2864, %v2862
        %vm2886 = vcmask 1014784
        %v2888 = vsel %vm2886, %v2866, 0
        %v2891 = vsel %vm2886, %v2868, 0
        %v2894 = vsel %vm2886, %v2870, 0
        %v2897 = vsel %vm2886, %v2872, 0
        %v2900 = vsel %vm2886, %v2874, 0
        %v2903 = vsel %vm2886, %v2876, 0
        %v2906 = vsel %vm2886, %v2878, 0
        %vm2908 = vcmask 1045504
        %v2910 = vsel %vm2908, %v2807, 0
        %v2913 = vsel %vm2908, %v2808, 0
        %2915 = vmatprep.subr.bf16.mxu0 %v2778
        %2916 = vmatpush1.bf16.msra.mxu0 %v2777
        %2917 = vmatprep.subr.bf16.mxu0 %v2780
        %2918 = vmatpush1.bf16.msra.mxu0 %v2779
        %2919 = vmatprep.subr.bf16.mxu0 %v2782
        %2920 = vmatpush1.bf16.msra.mxu0 %v2781
        %2921 = vmatprep.subr.bf16.mxu0 %v2784
        %2922 = vmatpush1.bf16.msra.mxu0 %v2783
        %2923 = vmatprep.subr.bf16.mxu0 %v2786
        %2924 = vmatpush1.bf16.msra.mxu0 %v2785
        %2925 = vmatprep.subr.bf16.mxu0 %v2788
        %2926 = vmatpush1.bf16.msra.mxu0 %v2787
        %2927 = vmatprep.subr.bf16.mxu0 %v2790
        %2928 = vmatpush1.bf16.msra.mxu0 %v2789
        %2929 = vmatprep.subr.bf16.mxu0 %v2792
        %2930 = vmatpush1.bf16.msra.mxu0 %v2791
        %2931 = vmatprep.subr.bf16.mxu0 %v2794
        %2932 = vmatpush1.bf16.msra.mxu0 %v2793
        %2933 = vmatprep.subr.bf16.mxu0 %v2796
        %2934 = vmatpush1.bf16.msra.mxu0 %v2795
        %2935 = vmatprep.subr.bf16.mxu0 %v2798
        %2936 = vmatpush1.bf16.msra.mxu0 %v2797
        %2937 = vmatprep.subr.bf16.mxu0 %v2800
        %2938 = vmatpush1.bf16.msra.mxu0 %v2799
        %2939 = vmatprep.subr.bf16.mxu0 %v2802
        %2940 = vmatpush1.bf16.msra.mxu0 %v2801
        %2941 = vmatprep.subr.bf16.mxu0 %v2804
        %2942 = vmatpush1.bf16.msra.mxu0 %v2803
        %2943 = vmatprep.subr.bf16.mxu0 %v2806
        %2944 = vmatpush1.bf16.msra.mxu0 %v2805
        %2945 = vmatprep.subr.bf16.mxu0 %v2913
        %2946 = vmatpush1.bf16.msra.mxu0 %v2910
        %2947 = vmatprep.mubr.bf16.mxu0 %v2888
        %2948 = vmatmul.mubr.bf16.gmra.mrb[0].mxu0 %v2865
        %v2949 = vpop.f32.mrb[0].mxu0
        %v2950 = vadd.f32 0.0, %v2949
        %v2951 = vpop.f32.mrb[0].mxu0
        %v2952 = vadd.f32 0.0, %v2951
        %v2953 = vpop.f32.mrb[0].mxu0
        %v2954 = vadd.f32 0.0, %v2953
        %v2955 = vpop.f32.mrb[0].mxu0
        %v2956 = vadd.f32 0.0, %v2955
        %2957 = vmatprep.mubr.bf16.mxu0 %v2891
        %2958 = vmatmul.mubr.bf16.gmra.mrb[0].mxu0 %v2867
        %v2959 = vpop.f32.mrb[0].mxu0
        %v2960 = vadd.f32 0.0, %v2959
        %v2961 = vpop.f32.mrb[0].mxu0
        %v2962 = vadd.f32 0.0, %v2961
        %v2963 = vpop.f32.mrb[0].mxu0
        %v2964 = vadd.f32 0.0, %v2963
        %v2965 = vpop.f32.mrb[0].mxu0
        %v2966 = vadd.f32 0.0, %v2965
        %2967 = vmatprep.mubr.bf16.mxu0 %v2894
        %2968 = vmatmul.mubr.bf16.gmra.mrb[0].mxu0 %v2869
        %v2969 = vpop.f32.mrb[0].mxu0
        %v2970 = vadd.f32 0.0, %v2969
        %v2971 = vpop.f32.mrb[0].mxu0
        %v2972 = vadd.f32 0.0, %v2971
        %v2973 = vpop.f32.mrb[0].mxu0
        %v2974 = vadd.f32 0.0, %v2973
        %v2975 = vpop.f32.mrb[0].mxu0
        %v2976 = vadd.f32 0.0, %v2975
        %2977 = vmatprep.mubr.bf16.mxu0 %v2897
        %2978 = vmatmul.mubr.bf16.gmra.mrb[0].mxu0 %v2871
        %v2979 = vpop.f32.mrb[0].mxu0
        %v2980 = vadd.f32 0.0, %v2979
        %v2981 = vpop.f32.mrb[0].mxu0
        %v2982 = vadd.f32 0.0, %v2981
        %v2983 = vpop.f32.mrb[0].mxu0
        %v2984 = vadd.f32 0.0, %v2983
        %v2985 = vpop.f32.mrb[0].mxu0
        %v2986 = vadd.f32 0.0, %v2985
        %2987 = vmatprep.mubr.bf16.mxu0 %v2900
        %2988 = vmatmul.mubr.bf16.gmra.mrb[0].mxu0 %v2873
        %v2989 = vpop.f32.mrb[0].mxu0
        %v2990 = vadd.f32 0.0, %v2989
        %v2991 = vpop.f32.mrb[0].mxu0
        %v2992 = vadd.f32 0.0, %v2991
        %v2993 = vpop.f32.mrb[0].mxu0
        %v2994 = vadd.f32 0.0, %v2993
        %v2995 = vpop.f32.mrb[0].mxu0
        %v2996 = vadd.f32 0.0, %v2995
        %2997 = vmatprep.mubr.bf16.mxu0 %v2903
        %2998 = vmatmul.mubr.bf16.gmra.mrb[0].mxu0 %v2875
        %v2999 = vpop.f32.mrb[0].mxu0
        %v3000 = vadd.f32 0.0, %v2999
        %v3001 = vpop.f32.mrb[0].mxu0
        %v3002 = vadd.f32 0.0, %v3001
        %v3003 = vpop.f32.mrb[0].mxu0
        %v3004 = vadd.f32 0.0, %v3003
        %v3005 = vpop.f32.mrb[0].mxu0
        %v3006 = vadd.f32 0.0, %v3005
        %3007 = vmatprep.mubr.bf16.mxu0 %v2906
        %3008 = vmatmul.mubr.bf16.gmra.mrb[0].mxu0 %v2877
        %v3009 = vpop.f32.mrb[0].mxu0
        %v3010 = vadd.f32 0.0, %v3009
        %v3011 = vpop.f32.mrb[0].mxu0
        %v3012 = vadd.f32 0.0, %v3011
        %v3013 = vpop.f32.mrb[0].mxu0
        %v3014 = vadd.f32 0.0, %v3013
        %v3015 = vpop.f32.mrb[0].mxu0
        %v3016 = vadd.f32 0.0, %v3015
        %3017 = vdwg.mxu0
        %s3018 = scalar_lea.vmem %s3, 112
        %v3019 = vld [vmem:[%s3018] sm:$0xff]
        %v3020 = vld [vmem:[%s3018 + $0x8] sm:$0xff]
        %v3021 = vld [vmem:[%s3018 + $0x10] sm:$0xff]
        %v3022 = vld [vmem:[%s3018 + $0x18] sm:$0xff]
        %v3023 = vld [vmem:[%s3018 + $0x20] sm:$0xff]
        %v3024 = vld [vmem:[%s3018 + $0x28] sm:$0xff]
        %v3025 = vld [vmem:[%s3018 + $0x30] sm:$0xff]
        %v3026 = vld [vmem:[%s3018 + $0x38] sm:$0xff]
        %v3027 = vld [vmem:[%s3018 + $0x40] sm:$0xff]
        %v3028 = vld [vmem:[%s3018 + $0x48] sm:$0xff]
        %v3029 = vld [vmem:[%s3018 + $0x50] sm:$0xff]
        %v3030 = vld [vmem:[%s3018 + $0x58] sm:$0xff]
        %v3031 = vld [vmem:[%s3018 + $0x60] sm:$0xff]
        %v3032 = vld [vmem:[%s3018 + $0x68] sm:$0xff]
        %v3047 = vunpack.c.l.b16 %v3019
        %v3048 = vunpack.c.h.b16 %v3019
        %v3049 = vunpack.c.l.b16 %v3020
        %v3050 = vunpack.c.h.b16 %v3020
        %v3051 = vunpack.c.l.b16 %v3021
        %v3052 = vunpack.c.h.b16 %v3021
        %v3053 = vunpack.c.l.b16 %v3022
        %v3054 = vunpack.c.h.b16 %v3022
        %v3055 = vunpack.c.l.b16 %v3023
        %v3056 = vunpack.c.h.b16 %v3023
        %v3057 = vunpack.c.l.b16 %v3024
        %v3058 = vunpack.c.h.b16 %v3024
        %v3059 = vunpack.c.l.b16 %v3025
        %v3060 = vunpack.c.h.b16 %v3025
        %v3061 = vunpack.c.l.b16 %v3026
        %v3062 = vunpack.c.h.b16 %v3026
        %v3063 = vunpack.c.l.b16 %v3027
        %v3064 = vunpack.c.h.b16 %v3027
        %v3065 = vunpack.c.l.b16 %v3028
        %v3066 = vunpack.c.h.b16 %v3028
        %v3067 = vunpack.c.l.b16 %v3029
        %v3068 = vunpack.c.h.b16 %v3029
        %v3069 = vunpack.c.l.b16 %v3030
        %v3070 = vunpack.c.h.b16 %v3030
        %v3071 = vunpack.c.l.b16 %v3031
        %v3072 = vunpack.c.h.b16 %v3031
        %v3073 = vunpack.c.l.b16 %v3032
        %v3074 = vunpack.c.h.b16 %v3032
        %v3075 = vpack.c.b16 %v3049, %v3047
        %v3076 = vpack.c.b16 %v3050, %v3048
        %v3077 = vpack.c.b16 %v3053, %v3051
        %v3078 = vpack.c.b16 %v3054, %v3052
        %v3079 = vpack.c.b16 %v3057, %v3055
        %v3080 = vpack.c.b16 %v3058, %v3056
        %v3081 = vpack.c.b16 %v3061, %v3059
        %v3082 = vpack.c.b16 %v3062, %v3060
        %v3083 = vpack.c.b16 %v3065, %v3063
        %v3084 = vpack.c.b16 %v3066, %v3064
        %v3085 = vpack.c.b16 %v3069, %v3067
        %v3086 = vpack.c.b16 %v3070, %v3068
        %v3087 = vpack.c.b16 %v3073, %v3071
        %v3088 = vpack.c.b16 %v3074, %v3072
        %v3097 = vsel %vm2886, %v3076, 0
        %v3100 = vsel %vm2886, %v3078, 0
        %v3103 = vsel %vm2886, %v3080, 0
        %v3106 = vsel %vm2886, %v3082, 0
        %v3109 = vsel %vm2886, %v3084, 0
        %v3112 = vsel %vm2886, %v3086, 0
        %v3115 = vsel %vm2886, %v3088, 0
        %3117 = vmatprep.subr.bf16.mxu0 %v2778
        %3118 = vmatpush1.bf16.msra.mxu0 %v2777
        %3119 = vmatprep.subr.bf16.mxu0 %v2780
        %3120 = vmatpush1.bf16.msra.mxu0 %v2779
        %3121 = vmatprep.subr.bf16.mxu0 %v2782
        %3122 = vmatpush1.bf16.msra.mxu0 %v2781
        %3123 = vmatprep.subr.bf16.mxu0 %v2784
        %3124 = vmatpush1.bf16.msra.mxu0 %v2783
        %3125 = vmatprep.subr.bf16.mxu0 %v2786
        %3126 = vmatpush1.bf16.msra.mxu0 %v2785
        %3127 = vmatprep.subr.bf16.mxu0 %v2788
        %3128 = vmatpush1.bf16.msra.mxu0 %v2787
        %3129 = vmatprep.subr.bf16.mxu0 %v2790
        %3130 = vmatpush1.bf16.msra.mxu0 %v2789
        %3131 = vmatprep.subr.bf16.mxu0 %v2792
        %3132 = vmatpush1.bf16.msra.mxu0 %v2791
        %3133 = vmatprep.subr.bf16.mxu0 %v2794
        %3134 = vmatpush1.bf16.msra.mxu0 %v2793
        %3135 = vmatprep.subr.bf16.mxu0 %v2796
        %3136 = vmatpush1.bf16.msra.mxu0 %v2795
        %3137 = vmatprep.subr.bf16.mxu0 %v2798
        %3138 = vmatpush1.bf16.msra.mxu0 %v2797
        %3139 = vmatprep.subr.bf16.mxu0 %v2800
        %3140 = vmatpush1.bf16.msra.mxu0 %v2799
        %3141 = vmatprep.subr.bf16.mxu0 %v2802
        %3142 = vmatpush1.bf16.msra.mxu0 %v2801
        %3143 = vmatprep.subr.bf16.mxu0 %v2804
        %3144 = vmatpush1.bf16.msra.mxu0 %v2803
        %3145 = vmatprep.subr.bf16.mxu0 %v2806
        %3146 = vmatpush1.bf16.msra.mxu0 %v2805
        %3147 = vmatprep.subr.bf16.mxu0 %v2913
        %3148 = vmatpush1.bf16.msra.mxu0 %v2910
        %3149 = vmatprep.mubr.bf16.mxu0 %v3097
        %3150 = vmatmul.mubr.bf16.gmra.mrb[0].mxu0 %v3075
        %v3151 = vpop.f32.mrb[0].mxu0
        %v3152 = vadd.f32 0.0, %v3151
        %v3153 = vpop.f32.mrb[0].mxu0
        %v3154 = vadd.f32 0.0, %v3153
        %v3155 = vpop.f32.mrb[0].mxu0
        %v3156 = vadd.f32 0.0, %v3155
        %v3157 = vpop.f32.mrb[0].mxu0
        %v3158 = vadd.f32 0.0, %v3157
        %3159 = vmatprep.mubr.bf16.mxu0 %v3100
        %3160 = vmatmul.mubr.bf16.gmra.mrb[0].mxu0 %v3077
        %v3161 = vpop.f32.mrb[0].mxu0
        %v3162 = vadd.f32 0.0, %v3161
        %v3163 = vpop.f32.mrb[0].mxu0
        %v3164 = vadd.f32 0.0, %v3163
        %v3165 = vpop.f32.mrb[0].mxu0
        %v3166 = vadd.f32 0.0, %v3165
        %v3167 = vpop.f32.mrb[0].mxu0
        %v3168 = vadd.f32 0.0, %v3167
        %3169 = vmatprep.mubr.bf16.mxu0 %v3103
        %3170 = vmatmul.mubr.bf16.gmra.mrb[0].mxu0 %v3079
        %v3171 = vpop.f32.mrb[0].mxu0
        %v3172 = vadd.f32 0.0, %v3171
        %v3173 = vpop.f32.mrb[0].mxu0
        %v3174 = vadd.f32 0.0, %v3173
        %v3175 = vpop.f32.mrb[0].mxu0
        %v3176 = vadd.f32 0.0, %v3175
        %v3177 = vpop.f32.mrb[0].mxu0
        %v3178 = vadd.f32 0.0, %v3177
        %3179 = vmatprep.mubr.bf16.mxu0 %v3106
        %3180 = vmatmul.mubr.bf16.gmra.mrb[0].mxu0 %v3081
        %v3181 = vpop.f32.mrb[0].mxu0
        %v3182 = vadd.f32 0.0, %v3181
        %v3183 = vpop.f32.mrb[0].mxu0
        %v3184 = vadd.f32 0.0, %v3183
        %v3185 = vpop.f32.mrb[0].mxu0
        %v3186 = vadd.f32 0.0, %v3185
        %v3187 = vpop.f32.mrb[0].mxu0
        %v3188 = vadd.f32 0.0, %v3187
        %3189 = vmatprep.mubr.bf16.mxu0 %v3109
        %3190 = vmatmul.mubr.bf16.gmra.mrb[0].mxu0 %v3083
        %v3191 = vpop.f32.mrb[0].mxu0
        %v3192 = vadd.f32 0.0, %v3191
        %v3193 = vpop.f32.mrb[0].mxu0
        %v3194 = vadd.f32 0.0, %v3193
        %v3195 = vpop.f32.mrb[0].mxu0
        %v3196 = vadd.f32 0.0, %v3195
        %v3197 = vpop.f32.mrb[0].mxu0
        %v3198 = vadd.f32 0.0, %v3197
        %3199 = vmatprep.mubr.bf16.mxu0 %v3112
        %3200 = vmatmul.mubr.bf16.gmra.mrb[0].mxu0 %v3085
        %v3201 = vpop.f32.mrb[0].mxu0
        %v3202 = vadd.f32 0.0, %v3201
        %v3203 = vpop.f32.mrb[0].mxu0
        %v3204 = vadd.f32 0.0, %v3203
        %v3205 = vpop.f32.mrb[0].mxu0
        %v3206 = vadd.f32 0.0, %v3205
        %v3207 = vpop.f32.mrb[0].mxu0
        %v3208 = vadd.f32 0.0, %v3207
        %3209 = vmatprep.mubr.bf16.mxu0 %v3115
        %3210 = vmatmul.mubr.bf16.gmra.mrb[0].mxu0 %v3087
        %v3211 = vpop.f32.mrb[0].mxu0
        %v3212 = vadd.f32 0.0, %v3211
        %v3213 = vpop.f32.mrb[0].mxu0
        %v3214 = vadd.f32 0.0, %v3213
        %v3215 = vpop.f32.mrb[0].mxu0
        %v3216 = vadd.f32 0.0, %v3215
        %v3217 = vpop.f32.mrb[0].mxu0
        %v3218 = vadd.f32 0.0, %v3217
        %3219 = vdwg.mxu0
        %v3220 = vmax.f32 %v2950, %v3152
        %v3221 = vmax.f32 %v2952, %v3154
        %v3222 = vmax.f32 %v2954, %v3156
        %v3223 = vmax.f32 %v2956, %v3158
        %v3224 = vmax.f32 %v2960, %v3162
        %v3225 = vmax.f32 %v2962, %v3164
        %v3226 = vmax.f32 %v2964, %v3166
        %v3227 = vmax.f32 %v2966, %v3168
        %v3228 = vmax.f32 %v2970, %v3172
        %v3229 = vmax.f32 %v2972, %v3174
        %v3230 = vmax.f32 %v2974, %v3176
        %v3231 = vmax.f32 %v2976, %v3178
        %v3232 = vmax.f32 %v2980, %v3182
        %v3233 = vmax.f32 %v2982, %v3184
        %v3234 = vmax.f32 %v2984, %v3186
        %v3235 = vmax.f32 %v2986, %v3188
        %v3236 = vmax.f32 %v2990, %v3192
        %v3237 = vmax.f32 %v2992, %v3194
        %v3238 = vmax.f32 %v2994, %v3196
        %v3239 = vmax.f32 %v2996, %v3198
        %v3240 = vmax.f32 %v3000, %v3202
        %v3241 = vmax.f32 %v3002, %v3204
        %v3242 = vmax.f32 %v3004, %v3206
        %v3243 = vmax.f32 %v3006, %v3208
        %v3244 = vmax.f32 %v3010, %v3212
        %v3245 = vmax.f32 %v3012, %v3214
        %v3246 = vmax.f32 %v3014, %v3216
        %v3247 = vmax.f32 %v3016, %v3218
        %v3248 = vpack.c.bf16 %v3222, %v3220
        %v3249 = vpack.c.bf16 %v3223, %v3221
        %v3250 = vpack.c.bf16 %v3226, %v3224
        %v3251 = vpack.c.bf16 %v3227, %v3225
        %v3252 = vpack.c.bf16 %v3230, %v3228
        %v3253 = vpack.c.bf16 %v3231, %v3229
        %v3254 = vpack.c.bf16 %v3234, %v3232
        %v3255 = vpack.c.bf16 %v3235, %v3233
        %v3256 = vpack.c.bf16 %v3238, %v3236
        %v3257 = vpack.c.bf16 %v3239, %v3237
        %v3258 = vpack.c.bf16 %v3242, %v3240
        %v3259 = vpack.c.bf16 %v3243, %v3241
        %v3260 = vpack.c.bf16 %v3246, %v3244
        %v3261 = vpack.c.bf16 %v3247, %v3245
        %v3262 = vld [vmem:[%s4] sm:$0xf]
        %v3263 = vld [vmem:[%s4 + $0x4] sm:$0xf]
        %v3264 = vld [vmem:[%s4 + $0x8] sm:$0xf]
        %v3265 = vld [vmem:[%s4 + $0xc] sm:$0xf]
        %v3266 = vld [vmem:[%s4 + $0x10] sm:$0xf]
        %v3267 = vld [vmem:[%s4 + $0x14] sm:$0xf]
        %v3268 = vld [vmem:[%s4 + $0x18] sm:$0xf]
        %v3269 = vld [vmem:[%s4 + $0x1c] sm:$0xf]
        %v3270 = vld [vmem:[%s4 + $0x20] sm:$0xf]
        %v3271 = vld [vmem:[%s4 + $0x24] sm:$0xf]
        %v3272 = vld [vmem:[%s4 + $0x28] sm:$0xf]
        %v3273 = vld [vmem:[%s4 + $0x2c] sm:$0xf]
        %v3274 = vld [vmem:[%s4 + $0x30] sm:$0xf]
        %v3275 = vld [vmem:[%s4 + $0x34] sm:$0xf]
        %v3276 = vld [vmem:[%s4 + $0x38] sm:$0xf]
        %v3277 = vld [vmem:[%s4 + $0x3c] sm:$0xf]
        %v3278 = vld [vmem:[%s4 + $0x40] sm:$0xf]
        %v3279 = vld [vmem:[%s4 + $0x44] sm:$0xf]
        %v3280 = vld [vmem:[%s4 + $0x48] sm:$0xf]
        %v3281 = vld [vmem:[%s4 + $0x4c] sm:$0xf]
        %v3282 = vld [vmem:[%s4 + $0x50] sm:$0xf]
        %v3304 = vunpack.c.l.b16 %v3262
        %v3305 = vunpack.c.l.b16 %v3263
        %v3306 = vunpack.c.l.b16 %v3264
        %v3307 = vunpack.c.l.b16 %v3265
        %v3308 = vunpack.c.l.b16 %v3266
        %v3309 = vunpack.c.l.b16 %v3267
        %v3310 = vunpack.c.l.b16 %v3268
        %v3311 = vunpack.c.l.b16 %v3269
        %v3312 = vunpack.c.l.b16 %v3270
        %v3313 = vunpack.c.l.b16 %v3271
        %v3314 = vunpack.c.l.b16 %v3272
        %v3315 = vunpack.c.l.b16 %v3273
        %v3316 = vunpack.c.l.b16 %v3274
        %v3317 = vunpack.c.l.b16 %v3275
        %v3318 = vunpack.c.l.b16 %v3276
        %v3319 = vunpack.c.l.b16 %v3277
        %v3320 = vunpack.c.l.b16 %v3278
        %v3321 = vunpack.c.l.b16 %v3279
        %v3322 = vunpack.c.l.b16 %v3280
        %v3323 = vunpack.c.l.b16 %v3281
        %v3324 = vunpack.c.l.b16 %v3282
        %v3325 = vpack.c.b16 %v3305, %v3304
        %v3326 = vpack.c.b16 %v3307, %v3306
        %v3327 = vpack.c.b16 %v3309, %v3308
        %v3328 = vpack.c.b16 %v3311, %v3310
        %v3329 = vpack.c.b16 %v3313, %v3312
        %v3330 = vpack.c.b16 %v3315, %v3314
        %v3331 = vpack.c.b16 %v3317, %v3316
        %v3332 = vpack.c.b16 %v3319, %v3318
        %v3333 = vpack.c.b16 %v3321, %v3320
        %v3334 = vpack.c.b16 %v3323, %v3322
        %v3335 = vpack.c.b16 %v3324, %v3324
        %vm3346 = vcmask 326656
        %v3348 = vsel %vm3346, %v3249, 0
        %v3351 = vsel %vm3346, %v3251, 0
        %v3354 = vsel %vm3346, %v3253, 0
        %v3357 = vsel %vm3346, %v3255, 0
        %v3360 = vsel %vm3346, %v3257, 0
        %v3363 = vsel %vm3346, %v3259, 0
        %v3366 = vsel %vm3346, %v3261, 0
        %vm3368 = vcmask 1043456
        %v3370 = vsel %vm3368, %v3335, 0
        %3372 = vmatprep.subr.bf16.mxu0 0
        %3373 = vmatpush1.bf16.msra.mxu0 %v3325
        %3374 = vmatprep.subr.bf16.mxu0 0
        %3375 = vmatpush1.bf16.msra.mxu0 %v3326
        %3376 = vmatprep.subr.bf16.mxu0 0
        %3377 = vmatpush1.bf16.msra.mxu0 %v3327
        %3378 = vmatprep.subr.bf16.mxu0 0
        %3379 = vmatpush1.bf16.msra.mxu0 %v3328
        %3380 = vmatprep.subr.bf16.mxu0 0
        %3381 = vmatpush1.bf16.msra.mxu0 %v3329
        %3382 = vmatprep.subr.bf16.mxu0 0
        %3383 = vmatpush1.bf16.msra.mxu0 %v3330
        %3384 = vmatprep.subr.bf16.mxu0 0
        %3385 = vmatpush1.bf16.msra.mxu0 %v3331
        %3386 = vmatprep.subr.bf16.mxu0 0
        %3387 = vmatpush1.bf16.msra.mxu0 %v3332
        %3388 = vmatprep.subr.bf16.mxu0 0
        %3389 = vmatpush1.bf16.msra.mxu0 %v3333
        %3390 = vmatprep.subr.bf16.mxu0 0
        %3391 = vmatpush1.bf16.msra.mxu0 %v3334
        %3392 = vmatprep.subr.bf16.mxu0 0
        %3393 = vmatpush1.bf16.msra.mxu0 %v3370
        %3394 = vmatprep.subr.bf16.mxu0 0
        %3395 = vmatpush1.bf16.msra.mxu0 0
        %3396 = vmatprep.subr.bf16.mxu0 0
        %3397 = vmatpush1.bf16.msra.mxu0 0
        %3398 = vmatprep.subr.bf16.mxu0 0
        %3399 = vmatpush1.bf16.msra.mxu0 0
        %3400 = vmatprep.subr.bf16.mxu0 0
        %3401 = vmatpush1.bf16.msra.mxu0 0
        %3402 = vmatprep.subr.bf16.mxu0 0
        %3403 = vmatpush1.bf16.msra.mxu0 0
        %3404 = vmatprep.mubr.bf16.mxu0 %v3348
        %3405 = vmatmul.mubr.bf16.gmra.mrb[0].mxu0 %v3248
        %v3406 = vpop.f32.mrb[0].mxu0
        %v3407 = vadd.f32 0.0, %v3406
        %v3408 = vpop.f32.mrb[0].mxu0
        %v3409 = vpop.f32.mrb[0].mxu0
        %v3410 = vadd.f32 0.0, %v3409
        %v3411 = vpop.f32.mrb[0].mxu0
        %3412 = vmatprep.mubr.bf16.mxu0 %v3351
        %3413 = vmatmul.mubr.bf16.gmra.mrb[0].mxu0 %v3250
        %v3414 = vpop.f32.mrb[0].mxu0
        %v3415 = vadd.f32 0.0, %v3414
        %v3416 = vpop.f32.mrb[0].mxu0
        %v3417 = vpop.f32.mrb[0].mxu0
        %v3418 = vadd.f32 0.0, %v3417
        %v3419 = vpop.f32.mrb[0].mxu0
        %3420 = vmatprep.mubr.bf16.mxu0 %v3354
        %3421 = vmatmul.mubr.bf16.gmra.mrb[0].mxu0 %v3252
        %v3422 = vpop.f32.mrb[0].mxu0
        %v3423 = vadd.f32 0.0, %v3422
        %v3424 = vpop.f32.mrb[0].mxu0
        %v3425 = vpop.f32.mrb[0].mxu0
        %v3426 = vadd.f32 0.0, %v3425
        %v3427 = vpop.f32.mrb[0].mxu0
        %3428 = vmatprep.mubr.bf16.mxu0 %v3357
        %3429 = vmatmul.mubr.bf16.gmra.mrb[0].mxu0 %v3254
        %v3430 = vpop.f32.mrb[0].mxu0
        %v3431 = vadd.f32 0.0, %v3430
        %v3432 = vpop.f32.mrb[0].mxu0
        %v3433 = vpop.f32.mrb[0].mxu0
        %v3434 = vadd.f32 0.0, %v3433
        %v3435 = vpop.f32.mrb[0].mxu0
        %3436 = vmatprep.mubr.bf16.mxu0 %v3360
        %3437 = vmatmul.mubr.bf16.gmra.mrb[0].mxu0 %v3256
        %v3438 = vpop.f32.mrb[0].mxu0
        %v3439 = vadd.f32 0.0, %v3438
        %v3440 = vpop.f32.mrb[0].mxu0
        %v3441 = vpop.f32.mrb[0].mxu0
        %v3442 = vadd.f32 0.0, %v3441
        %v3443 = vpop.f32.mrb[0].mxu0
        %3444 = vmatprep.mubr.bf16.mxu0 %v3363
        %3445 = vmatmul.mubr.bf16.gmra.mrb[0].mxu0 %v3258
        %v3446 = vpop.f32.mrb[0].mxu0
        %v3447 = vadd.f32 0.0, %v3446
        %v3448 = vpop.f32.mrb[0].mxu0
        %v3449 = vpop.f32.mrb[0].mxu0
        %v3450 = vadd.f32 0.0, %v3449
        %v3451 = vpop.f32.mrb[0].mxu0
        %3452 = vmatprep.mubr.bf16.mxu0 %v3366
        %3453 = vmatmul.mubr.bf16.gmra.mrb[0].mxu0 %v3260
        %v3454 = vpop.f32.mrb[0].mxu0
        %v3455 = vadd.f32 0.0, %v3454
        %v3456 = vpop.f32.mrb[0].mxu0
        %v3457 = vpop.f32.mrb[0].mxu0
        %v3458 = vadd.f32 0.0, %v3457
        %v3459 = vpop.f32.mrb[0].mxu0
        %3460 = vdwg.mxu0
        %s3461 = scalar_lea.vmem %s4, 84
        %v3462 = vld [vmem:[%s3461] sm:$0xf]
        %v3463 = vld [vmem:[%s3461 + $0x4] sm:$0xf]
        %v3464 = vld [vmem:[%s3461 + $0x8] sm:$0xf]
        %v3465 = vld [vmem:[%s3461 + $0xc] sm:$0xf]
        %v3466 = vld [vmem:[%s3461 + $0x10] sm:$0xf]
        %v3467 = vld [vmem:[%s3461 + $0x14] sm:$0xf]
        %v3468 = vld [vmem:[%s3461 + $0x18] sm:$0xf]
        %v3469 = vld [vmem:[%s3461 + $0x1c] sm:$0xf]
        %v3470 = vld [vmem:[%s3461 + $0x20] sm:$0xf]
        %v3471 = vld [vmem:[%s3461 + $0x24] sm:$0xf]
        %v3472 = vld [vmem:[%s3461 + $0x28] sm:$0xf]
        %v3473 = vld [vmem:[%s3461 + $0x2c] sm:$0xf]
        %v3474 = vld [vmem:[%s3461 + $0x30] sm:$0xf]
        %v3475 = vld [vmem:[%s3461 + $0x34] sm:$0xf]
        %v3476 = vld [vmem:[%s3461 + $0x38] sm:$0xf]
        %v3477 = vld [vmem:[%s3461 + $0x3c] sm:$0xf]
        %v3478 = vld [vmem:[%s3461 + $0x40] sm:$0xf]
        %v3479 = vld [vmem:[%s3461 + $0x44] sm:$0xf]
        %v3480 = vld [vmem:[%s3461 + $0x48] sm:$0xf]
        %v3481 = vld [vmem:[%s3461 + $0x4c] sm:$0xf]
        %v3482 = vld [vmem:[%s3461 + $0x50] sm:$0xf]
        %v3504 = vunpack.c.l.b16 %v3462
        %v3505 = vunpack.c.l.b16 %v3463
        %v3506 = vunpack.c.l.b16 %v3464
        %v3507 = vunpack.c.l.b16 %v3465
        %v3508 = vunpack.c.l.b16 %v3466
        %v3509 = vunpack.c.l.b16 %v3467
        %v3510 = vunpack.c.l.b16 %v3468
        %v3511 = vunpack.c.l.b16 %v3469
        %v3512 = vunpack.c.l.b16 %v3470
        %v3513 = vunpack.c.l.b16 %v3471
        %v3514 = vunpack.c.l.b16 %v3472
        %v3515 = vunpack.c.l.b16 %v3473
        %v3516 = vunpack.c.l.b16 %v3474
        %v3517 = vunpack.c.l.b16 %v3475
        %v3518 = vunpack.c.l.b16 %v3476
        %v3519 = vunpack.c.l.b16 %v3477
        %v3520 = vunpack.c.l.b16 %v3478
        %v3521 = vunpack.c.l.b16 %v3479
        %v3522 = vunpack.c.l.b16 %v3480
        %v3523 = vunpack.c.l.b16 %v3481
        %v3524 = vunpack.c.l.b16 %v3482
        %v3525 = vpack.c.b16 %v3505, %v3504
        %v3526 = vpack.c.b16 %v3507, %v3506
        %v3527 = vpack.c.b16 %v3509, %v3508
        %v3528 = vpack.c.b16 %v3511, %v3510
        %v3529 = vpack.c.b16 %v3513, %v3512
        %v3530 = vpack.c.b16 %v3515, %v3514
        %v3531 = vpack.c.b16 %v3517, %v3516
        %v3532 = vpack.c.b16 %v3519, %v3518
        %v3533 = vpack.c.b16 %v3521, %v3520
        %v3534 = vpack.c.b16 %v3523, %v3522
        %v3535 = vpack.c.b16 %v3524, %v3524
        %v3547 = vsel %vm3368, %v3535, 0
        %3549 = vmatprep.subr.bf16.mxu0 0
        %3550 = vmatpush1.bf16.msra.mxu0 %v3525
        %3551 = vmatprep.subr.bf16.mxu0 0
        %3552 = vmatpush1.bf16.msra.mxu0 %v3526
        %3553 = vmatprep.subr.bf16.mxu0 0
        %3554 = vmatpush1.bf16.msra.mxu0 %v3527
        %3555 = vmatprep.subr.bf16.mxu0 0
        %3556 = vmatpush1.bf16.msra.mxu0 %v3528
        %3557 = vmatprep.subr.bf16.mxu0 0
        %3558 = vmatpush1.bf16.msra.mxu0 %v3529
        %3559 = vmatprep.subr.bf16.mxu0 0
        %3560 = vmatpush1.bf16.msra.mxu0 %v3530
        %3561 = vmatprep.subr.bf16.mxu0 0
        %3562 = vmatpush1.bf16.msra.mxu0 %v3531
        %3563 = vmatprep.subr.bf16.mxu0 0
        %3564 = vmatpush1.bf16.msra.mxu0 %v3532
        %3565 = vmatprep.subr.bf16.mxu0 0
        %3566 = vmatpush1.bf16.msra.mxu0 %v3533
        %3567 = vmatprep.subr.bf16.mxu0 0
        %3568 = vmatpush1.bf16.msra.mxu0 %v3534
        %3569 = vmatprep.subr.bf16.mxu0 0
        %3570 = vmatpush1.bf16.msra.mxu0 %v3547
        %3571 = vmatprep.subr.bf16.mxu0 0
        %3572 = vmatpush1.bf16.msra.mxu0 0
        %3573 = vmatprep.subr.bf16.mxu0 0
        %3574 = vmatpush1.bf16.msra.mxu0 0
        %3575 = vmatprep.subr.bf16.mxu0 0
        %3576 = vmatpush1.bf16.msra.mxu0 0
        %3577 = vmatprep.subr.bf16.mxu0 0
        %3578 = vmatpush1.bf16.msra.mxu0 0
        %3579 = vmatprep.subr.bf16.mxu0 0
        %3580 = vmatpush1.bf16.msra.mxu0 0
        %3581 = vmatprep.mubr.bf16.mxu0 %v3348
        %3582 = vmatmul.mubr.bf16.gmra.mrb[0].mxu0 %v3248
        %v3583 = vpop.f32.mrb[0].mxu0
        %v3584 = vadd.f32 0.0, %v3583
        %v3585 = vpop.f32.mrb[0].mxu0
        %v3586 = vpop.f32.mrb[0].mxu0
        %v3587 = vadd.f32 0.0, %v3586
        %v3588 = vpop.f32.mrb[0].mxu0
        %3589 = vmatprep.mubr.bf16.mxu0 %v3351
        %3590 = vmatmul.mubr.bf16.gmra.mrb[0].mxu0 %v3250
        %v3591 = vpop.f32.mrb[0].mxu0
        %v3592 = vadd.f32 0.0, %v3591
        %v3593 = vpop.f32.mrb[0].mxu0
        %v3594 = vpop.f32.mrb[0].mxu0
        %v3595 = vadd.f32 0.0, %v3594
        %v3596 = vpop.f32.mrb[0].mxu0
        %3597 = vmatprep.mubr.bf16.mxu0 %v3354
        %3598 = vmatmul.mubr.bf16.gmra.mrb[0].mxu0 %v3252
        %v3599 = vpop.f32.mrb[0].mxu0
        %v3600 = vadd.f32 0.0, %v3599
        %v3601 = vpop.f32.mrb[0].mxu0
        %v3602 = vpop.f32.mrb[0].mxu0
        %v3603 = vadd.f32 0.0, %v3602
        %v3604 = vpop.f32.mrb[0].mxu0
        %3605 = vmatprep.mubr.bf16.mxu0 %v3357
        %3606 = vmatmul.mubr.bf16.gmra.mrb[0].mxu0 %v3254
        %v3607 = vpop.f32.mrb[0].mxu0
        %v3608 = vadd.f32 0.0, %v3607
        %v3609 = vpop.f32.mrb[0].mxu0
        %v3610 = vpop.f32.mrb[0].mxu0
        %v3611 = vadd.f32 0.0, %v3610
        %v3612 = vpop.f32.mrb[0].mxu0
        %3613 = vmatprep.mubr.bf16.mxu0 %v3360
        %3614 = vmatmul.mubr.bf16.gmra.mrb[0].mxu0 %v3256
        %v3615 = vpop.f32.mrb[0].mxu0
        %v3616 = vadd.f32 0.0, %v3615
        %v3617 = vpop.f32.mrb[0].mxu0
        %v3618 = vpop.f32.mrb[0].mxu0
        %v3619 = vadd.f32 0.0, %v3618
        %v3620 = vpop.f32.mrb[0].mxu0
        %3621 = vmatprep.mubr.bf16.mxu0 %v3363
        %3622 = vmatmul.mubr.bf16.gmra.mrb[0].mxu0 %v3258
        %v3623 = vpop.f32.mrb[0].mxu0
        %v3624 = vadd.f32 0.0, %v3623
        %v3625 = vpop.f32.mrb[0].mxu0
        %v3626 = vpop.f32.mrb[0].mxu0
        %v3627 = vadd.f32 0.0, %v3626
        %v3628 = vpop.f32.mrb[0].mxu0
        %3629 = vmatprep.mubr.bf16.mxu0 %v3366
        %3630 = vmatmul.mubr.bf16.gmra.mrb[0].mxu0 %v3260
        %v3631 = vpop.f32.mrb[0].mxu0
        %v3632 = vadd.f32 0.0, %v3631
        %v3633 = vpop.f32.mrb[0].mxu0
        %v3634 = vpop.f32.mrb[0].mxu0
        %v3635 = vadd.f32 0.0, %v3634
        %v3636 = vpop.f32.mrb[0].mxu0
        %3637 = vdwg.mxu0
        %v3638 = vmax.f32 %v3407, %v3584
        %v3639 = vmax.f32 %v3410, %v3587
        %v3640 = vmax.f32 %v3415, %v3592
        %v3641 = vmax.f32 %v3418, %v3595
        %v3642 = vmax.f32 %v3423, %v3600
        %v3643 = vmax.f32 %v3426, %v3603
        %v3644 = vmax.f32 %v3431, %v3608
        %v3645 = vmax.f32 %v3434, %v3611
        %v3646 = vmax.f32 %v3439, %v3616
        %v3647 = vmax.f32 %v3442, %v3619
        %v3648 = vmax.f32 %v3447, %v3624
        %v3649 = vmax.f32 %v3450, %v3627
        %v3650 = vmax.f32 %v3455, %v3632
        %v3651 = vmax.f32 %v3458, %v3635
        %v3652 = vpack.c.bf16 %v3639, %v3638
        %v3653 = vpack.c.bf16 %v3641, %v3640
        %v3654 = vpack.c.bf16 %v3643, %v3642
        %v3655 = vpack.c.bf16 %v3645, %v3644
        %v3656 = vpack.c.bf16 %v3647, %v3646
        %v3657 = vpack.c.bf16 %v3649, %v3648
        %v3658 = vpack.c.bf16 %v3651, %v3650
        %v3659 = vld [vmem:[%s5] sm:$0xff]
        %v3660 = vld [vmem:[%s5 + $0x8] sm:$0xff]
        %v3661 = vld [vmem:[%s5 + $0x10] sm:$0xff]
        %v3662 = vld [vmem:[%s5 + $0x18] sm:$0xff]
        %v3663 = vld [vmem:[%s5 + $0x20] sm:$0xff]
        %v3664 = vld [vmem:[%s5 + $0x28] sm:$0xff]
        %v3665 = vld [vmem:[%s5 + $0x30] sm:$0xff]
        %v3666 = vld [vmem:[%s5 + $0x38] sm:$0xff]
        %v3667 = vld [vmem:[%s5 + $0x40] sm:$0xff]
        %v3668 = vld [vmem:[%s5 + $0x48] sm:$0xff]
        %v3669 = vld [vmem:[%s5 + $0x50] sm:$0x33]
        %s3670 = scalar_lea.vmem %s5, 88
        %v3671 = vld [vmem:[%s3670] sm:$0xff]
        %v3672 = vld [vmem:[%s3670 + $0x8] sm:$0xff]
        %v3673 = vld [vmem:[%s3670 + $0x10] sm:$0xff]
        %v3674 = vld [vmem:[%s3670 + $0x18] sm:$0xff]
        %v3675 = vld [vmem:[%s3670 + $0x20] sm:$0xff]
        %v3676 = vld [vmem:[%s3670 + $0x28] sm:$0xff]
        %v3677 = vld [vmem:[%s3670 + $0x30] sm:$0xff]
        %v3678 = vld [vmem:[%s3670 + $0x38] sm:$0xff]
        %v3679 = vld [vmem:[%s3670 + $0x40] sm:$0xff]
        %v3680 = vld [vmem:[%s3670 + $0x48] sm:$0xff]
        %v3681 = vld [vmem:[%s3670 + $0x50] sm:$0x33]
        %v3683 = vshrl.u32 %v3652, 16
        %v3685 = vshll.u32 %v3652, 16
        %v3687 = vrot.slane %v3685, 1
        %v3688 = vor.u32 %v3683, %v3687
        %v3690 = vshll.u32 %v3653, 16
        %v3692 = vrot.slane %v3690, 1
        %v3693 = vsel %vm660, %v3688, %v3692
        %v3694 = vshrl.u32 %v3653, 16
        %v3696 = vor.u32 %v3694, %v3692
        %v3698 = vshll.u32 %v3654, 16
        %v3700 = vrot.slane %v3698, 1
        %v3701 = vsel %vm660, %v3696, %v3700
        %v3702 = vshrl.u32 %v3654, 16
        %v3704 = vor.u32 %v3702, %v3700
        %v3706 = vshll.u32 %v3655, 16
        %v3708 = vrot.slane %v3706, 1
        %v3709 = vsel %vm660, %v3704, %v3708
        %v3710 = vshrl.u32 %v3655, 16
        %v3712 = vor.u32 %v3710, %v3708
        %v3714 = vshll.u32 %v3656, 16
        %v3716 = vrot.slane %v3714, 1
        %v3717 = vsel %vm660, %v3712, %v3716
        %v3718 = vshrl.u32 %v3656, 16
        %v3720 = vor.u32 %v3718, %v3716
        %v3722 = vshll.u32 %v3657, 16
        %v3724 = vrot.slane %v3722, 1
        %v3725 = vsel %vm660, %v3720, %v3724
        %v3726 = vshrl.u32 %v3657, 16
        %v3728 = vor.u32 %v3726, %v3724
        %v3730 = vshll.u32 %v3658, 16
        %v3732 = vrot.slane %v3730, 1
        %v3733 = vsel %vm660, %v3728, %v3732
        %v3734 = vshrl.u32 %v3658, 16
        %v3736 = vor.u32 %v3734, %v3732
        %v3748 = vunpack.c.l.b16 %v3671
        %v3749 = vunpack.c.h.b16 %v3671
        %v3750 = vunpack.c.l.b16 %v3672
        %v3751 = vunpack.c.h.b16 %v3672
        %v3752 = vunpack.c.l.b16 %v3673
        %v3753 = vunpack.c.h.b16 %v3673
        %v3754 = vunpack.c.l.b16 %v3674
        %v3755 = vunpack.c.h.b16 %v3674
        %v3756 = vunpack.c.l.b16 %v3675
        %v3757 = vunpack.c.h.b16 %v3675
        %v3758 = vunpack.c.l.b16 %v3676
        %v3759 = vunpack.c.h.b16 %v3676
        %v3760 = vunpack.c.l.b16 %v3677
        %v3761 = vunpack.c.h.b16 %v3677
        %v3762 = vunpack.c.l.b16 %v3678
        %v3763 = vunpack.c.h.b16 %v3678
        %v3764 = vunpack.c.l.b16 %v3679
        %v3765 = vunpack.c.h.b16 %v3679
        %v3766 = vunpack.c.l.b16 %v3680
        %v3767 = vunpack.c.h.b16 %v3680
        %v3768 = vunpack.c.l.b16 %v3681
        %v3769 = vunpack.c.h.b16 %v3681
        %v3770 = vpack.c.b16 %v3750, %v3748
        %v3771 = vpack.c.b16 %v3751, %v3749
        %v3772 = vpack.c.b16 %v3754, %v3752
        %v3773 = vpack.c.b16 %v3755, %v3753
        %v3774 = vpack.c.b16 %v3758, %v3756
        %v3775 = vpack.c.b16 %v3759, %v3757
        %v3776 = vpack.c.b16 %v3762, %v3760
        %v3777 = vpack.c.b16 %v3763, %v3761
        %v3778 = vpack.c.b16 %v3766, %v3764
        %v3779 = vpack.c.b16 %v3767, %v3765
        %v3780 = vpack.c.b16 %v3768, %v3768
        %v3781 = vpack.c.b16 %v3769, %v3769
        %vm3792 = vcmask 687104
        %v3794 = vsel %vm3792, %v3693, 0
        %v3797 = vsel %vm3792, %v3701, 0
        %v3800 = vsel %vm3792, %v3709, 0
        %v3803 = vsel %vm3792, %v3717, 0
        %v3806 = vsel %vm3792, %v3725, 0
        %v3809 = vsel %vm3792, %v3733, 0
        %v3812 = vsel %vm3792, %v3736, 0
        %vm3814 = vcmask 1041408
        %v3816 = vsel %vm3814, %v3780, 0
        %v3819 = vsel %vm3814, %v3781, 0
        %3821 = vmatprep.subr.bf16.mxu0 %v3771
        %3822 = vmatpush1.bf16.msra.mxu0 %v3770
        %3823 = vmatprep.subr.bf16.mxu0 %v3773
        %3824 = vmatpush1.bf16.msra.mxu0 %v3772
        %3825 = vmatprep.subr.bf16.mxu0 %v3775
        %3826 = vmatpush1.bf16.msra.mxu0 %v3774
        %3827 = vmatprep.subr.bf16.mxu0 %v3777
        %3828 = vmatpush1.bf16.msra.mxu0 %v3776
        %3829 = vmatprep.subr.bf16.mxu0 %v3779
        %3830 = vmatpush1.bf16.msra.mxu0 %v3778
        %3831 = vmatprep.subr.bf16.mxu0 %v3819
        %3832 = vmatpush1.bf16.msra.mxu0 %v3816
        %3833 = vmatprep.subr.bf16.mxu0 0
        %3834 = vmatpush1.bf16.msra.mxu0 0
        %3835 = vmatprep.subr.bf16.mxu0 0
        %3836 = vmatpush1.bf16.msra.mxu0 0
        %3837 = vmatprep.subr.bf16.mxu0 0
        %3838 = vmatpush1.bf16.msra.mxu0 0
        %3839 = vmatprep.subr.bf16.mxu0 0
        %3840 = vmatpush1.bf16.msra.mxu0 0
        %3841 = vmatprep.subr.bf16.mxu0 0
        %3842 = vmatpush1.bf16.msra.mxu0 0
        %3843 = vmatprep.subr.bf16.mxu0 0
        %3844 = vmatpush1.bf16.msra.mxu0 0
        %3845 = vmatprep.subr.bf16.mxu0 0
        %3846 = vmatpush1.bf16.msra.mxu0 0
        %3847 = vmatprep.subr.bf16.mxu0 0
        %3848 = vmatpush1.bf16.msra.mxu0 0
        %3849 = vmatprep.subr.bf16.mxu0 0
        %3850 = vmatpush1.bf16.msra.mxu0 0
        %3851 = vmatprep.subr.bf16.mxu0 0
        %3852 = vmatpush1.bf16.msra.mxu0 0
        %3853 = vmatprep.mubr.bf16.mxu0 0
        %3854 = vmatmul.mubr.bf16.gmra.mrb[0].mxu0 %v3794
        %v3855 = vpop.f32.mrb[0].mxu0
        %v3856 = vadd.f32 0.0, %v3855
        %v3857 = vpop.f32.mrb[0].mxu0
        %v3858 = vadd.f32 0.0, %v3857
        %v3859 = vpop.f32.mrb[0].mxu0
        %v3860 = vadd.f32 0.0, %v3859
        %v3861 = vpop.f32.mrb[0].mxu0
        %v3862 = vadd.f32 0.0, %v3861
        %3863 = vmatprep.mubr.bf16.mxu0 0
        %3864 = vmatmul.mubr.bf16.gmra.mrb[0].mxu0 %v3797
        %v3865 = vpop.f32.mrb[0].mxu0
        %v3866 = vadd.f32 0.0, %v3865
        %v3867 = vpop.f32.mrb[0].mxu0
        %v3868 = vadd.f32 0.0, %v3867
        %v3869 = vpop.f32.mrb[0].mxu0
        %v3870 = vadd.f32 0.0, %v3869
        %v3871 = vpop.f32.mrb[0].mxu0
        %v3872 = vadd.f32 0.0, %v3871
        %3873 = vmatprep.mubr.bf16.mxu0 0
        %3874 = vmatmul.mubr.bf16.gmra.mrb[0].mxu0 %v3800
        %v3875 = vpop.f32.mrb[0].mxu0
        %v3876 = vadd.f32 0.0, %v3875
        %v3877 = vpop.f32.mrb[0].mxu0
        %v3878 = vadd.f32 0.0, %v3877
        %v3879 = vpop.f32.mrb[0].mxu0
        %v3880 = vadd.f32 0.0, %v3879
        %v3881 = vpop.f32.mrb[0].mxu0
        %v3882 = vadd.f32 0.0, %v3881
        %3883 = vmatprep.mubr.bf16.mxu0 0
        %3884 = vmatmul.mubr.bf16.gmra.mrb[0].mxu0 %v3803
        %v3885 = vpop.f32.mrb[0].mxu0
        %v3886 = vadd.f32 0.0, %v3885
        %v3887 = vpop.f32.mrb[0].mxu0
        %v3888 = vadd.f32 0.0, %v3887
        %v3889 = vpop.f32.mrb[0].mxu0
        %v3890 = vadd.f32 0.0, %v3889
        %v3891 = vpop.f32.mrb[0].mxu0
        %v3892 = vadd.f32 0.0, %v3891
        %3893 = vmatprep.mubr.bf16.mxu0 0
        %3894 = vmatmul.mubr.bf16.gmra.mrb[0].mxu0 %v3806
        %v3895 = vpop.f32.mrb[0].mxu0
        %v3896 = vadd.f32 0.0, %v3895
        %v3897 = vpop.f32.mrb[0].mxu0
        %v3898 = vadd.f32 0.0, %v3897
        %v3899 = vpop.f32.mrb[0].mxu0
        %v3900 = vadd.f32 0.0, %v3899
        %v3901 = vpop.f32.mrb[0].mxu0
        %v3902 = vadd.f32 0.0, %v3901
        %3903 = vmatprep.mubr.bf16.mxu0 0
        %3904 = vmatmul.mubr.bf16.gmra.mrb[0].mxu0 %v3809
        %v3905 = vpop.f32.mrb[0].mxu0
        %v3906 = vadd.f32 0.0, %v3905
        %v3907 = vpop.f32.mrb[0].mxu0
        %v3908 = vadd.f32 0.0, %v3907
        %v3909 = vpop.f32.mrb[0].mxu0
        %v3910 = vadd.f32 0.0, %v3909
        %v3911 = vpop.f32.mrb[0].mxu0
        %v3912 = vadd.f32 0.0, %v3911
        %3913 = vmatprep.mubr.bf16.mxu0 0
        %3914 = vmatmul.mubr.bf16.gmra.mrb[0].mxu0 %v3812
        %v3915 = vpop.f32.mrb[0].mxu0
        %v3916 = vadd.f32 0.0, %v3915
        %v3917 = vpop.f32.mrb[0].mxu0
        %v3918 = vadd.f32 0.0, %v3917
        %v3919 = vpop.f32.mrb[0].mxu0
        %v3920 = vadd.f32 0.0, %v3919
        %v3921 = vpop.f32.mrb[0].mxu0
        %v3922 = vadd.f32 0.0, %v3921
        %3923 = vdwg.mxu0
        %v3935 = vunpack.c.l.b16 %v3659
        %v3936 = vunpack.c.h.b16 %v3659
        %v3937 = vunpack.c.l.b16 %v3660
        %v3938 = vunpack.c.h.b16 %v3660
        %v3939 = vunpack.c.l.b16 %v3661
        %v3940 = vunpack.c.h.b16 %v3661
        %v3941 = vunpack.c.l.b16 %v3662
        %v3942 = vunpack.c.h.b16 %v3662
        %v3943 = vunpack.c.l.b16 %v3663
        %v3944 = vunpack.c.h.b16 %v3663
        %v3945 = vunpack.c.l.b16 %v3664
        %v3946 = vunpack.c.h.b16 %v3664
        %v3947 = vunpack.c.l.b16 %v3665
        %v3948 = vunpack.c.h.b16 %v3665
        %v3949 = vunpack.c.l.b16 %v3666
        %v3950 = vunpack.c.h.b16 %v3666
        %v3951 = vunpack.c.l.b16 %v3667
        %v3952 = vunpack.c.h.b16 %v3667
        %v3953 = vunpack.c.l.b16 %v3668
        %v3954 = vunpack.c.h.b16 %v3668
        %v3955 = vunpack.c.l.b16 %v3669
        %v3956 = vunpack.c.h.b16 %v3669
        %v3957 = vpack.c.b16 %v3937, %v3935
        %v3958 = vpack.c.b16 %v3938, %v3936
        %v3959 = vpack.c.b16 %v3941, %v3939
        %v3960 = vpack.c.b16 %v3942, %v3940
        %v3961 = vpack.c.b16 %v3945, %v3943
        %v3962 = vpack.c.b16 %v3946, %v3944
        %v3963 = vpack.c.b16 %v3949, %v3947
        %v3964 = vpack.c.b16 %v3950, %v3948
        %v3965 = vpack.c.b16 %v3953, %v3951
        %v3966 = vpack.c.b16 %v3954, %v3952
        %v3967 = vpack.c.b16 %v3955, %v3955
        %v3968 = vpack.c.b16 %v3956, %v3956
        %v3979 = vsel %vm3792, %v3652, 0
        %v3981 = vsel %vm3792, %v3653, 0
        %v3983 = vsel %vm3792, %v3654, 0
        %v3985 = vsel %vm3792, %v3655, 0
        %v3987 = vsel %vm3792, %v3656, 0
        %v3989 = vsel %vm3792, %v3657, 0
        %v3991 = vsel %vm3792, %v3658, 0
        %v3994 = vsel %vm3814, %v3967, 0
        %v3997 = vsel %vm3814, %v3968, 0
        %3999 = vmatprep.subr.bf16.mxu0 %v3958
        %4000 = vmatpush1.bf16.msra.mxu0 %v3957
        %4001 = vmatprep.subr.bf16.mxu0 %v3960
        %4002 = vmatpush1.bf16.msra.mxu0 %v3959
        %4003 = vmatprep.subr.bf16.mxu0 %v3962
        %4004 = vmatpush1.bf16.msra.mxu0 %v3961
        %4005 = vmatprep.subr.bf16.mxu0 %v3964
        %4006 = vmatpush1.bf16.msra.mxu0 %v3963
        %4007 = vmatprep.subr.bf16.mxu0 %v3966
        %4008 = vmatpush1.bf16.msra.mxu0 %v3965
        %4009 = vmatprep.subr.bf16.mxu0 %v3997
        %4010 = vmatpush1.bf16.msra.mxu0 %v3994
        %4011 = vmatprep.subr.bf16.mxu0 0
        %4012 = vmatpush1.bf16.msra.mxu0 0
        %4013 = vmatprep.subr.bf16.mxu0 0
        %4014 = vmatpush1.bf16.msra.mxu0 0
        %4015 = vmatprep.subr.bf16.mxu0 0
        %4016 = vmatpush1.bf16.msra.mxu0 0
        %4017 = vmatprep.subr.bf16.mxu0 0
        %4018 = vmatpush1.bf16.msra.mxu0 0
        %4019 = vmatprep.subr.bf16.mxu0 0
        %4020 = vmatpush1.bf16.msra.mxu0 0
        %4021 = vmatprep.subr.bf16.mxu0 0
        %4022 = vmatpush1.bf16.msra.mxu0 0
        %4023 = vmatprep.subr.bf16.mxu0 0
        %4024 = vmatpush1.bf16.msra.mxu0 0
        %4025 = vmatprep.subr.bf16.mxu0 0
        %4026 = vmatpush1.bf16.msra.mxu0 0
        %4027 = vmatprep.subr.bf16.mxu0 0
        %4028 = vmatpush1.bf16.msra.mxu0 0
        %4029 = vmatprep.subr.bf16.mxu0 0
        %4030 = vmatpush1.bf16.msra.mxu0 0
        %4031 = vmatprep.mubr.bf16.mxu0 0
        %4032 = vmatmul.mubr.bf16.gmra.mrb[0].mxu0 %v3979
        %v4033 = vpop.f32.mrb[0].mxu0
        %v4034 = vadd.f32 %v3856, %v4033
        %v4035 = vpop.f32.mrb[0].mxu0
        %v4036 = vadd.f32 %v3858, %v4035
        %v4037 = vpop.f32.mrb[0].mxu0
        %v4038 = vadd.f32 %v3860, %v4037
        %v4039 = vpop.f32.mrb[0].mxu0
        %v4040 = vadd.f32 %v3862, %v4039
        %4041 = vmatprep.mubr.bf16.mxu0 0
        %4042 = vmatmul.mubr.bf16.gmra.mrb[0].mxu0 %v3981
        %v4043 = vpop.f32.mrb[0].mxu0
        %v4044 = vadd.f32 %v3866, %v4043
        %v4045 = vpop.f32.mrb[0].mxu0
        %v4046 = vadd.f32 %v3868, %v4045
        %v4047 = vpop.f32.mrb[0].mxu0
        %v4048 = vadd.f32 %v3870, %v4047
        %v4049 = vpop.f32.mrb[0].mxu0
        %v4050 = vadd.f32 %v3872, %v4049
        %4051 = vmatprep.mubr.bf16.mxu0 0
        %4052 = vmatmul.mubr.bf16.gmra.mrb[0].mxu0 %v3983
        %v4053 = vpop.f32.mrb[0].mxu0
        %v4054 = vadd.f32 %v3876, %v4053
        %v4055 = vpop.f32.mrb[0].mxu0
        %v4056 = vadd.f32 %v3878, %v4055
        %v4057 = vpop.f32.mrb[0].mxu0
        %v4058 = vadd.f32 %v3880, %v4057
        %v4059 = vpop.f32.mrb[0].mxu0
        %v4060 = vadd.f32 %v3882, %v4059
        %4061 = vmatprep.mubr.bf16.mxu0 0
        %4062 = vmatmul.mubr.bf16.gmra.mrb[0].mxu0 %v3985
        %v4063 = vpop.f32.mrb[0].mxu0
        %v4064 = vadd.f32 %v3886, %v4063
        %v4065 = vpop.f32.mrb[0].mxu0
        %v4066 = vadd.f32 %v3888, %v4065
        %v4067 = vpop.f32.mrb[0].mxu0
        %v4068 = vadd.f32 %v3890, %v4067
        %v4069 = vpop.f32.mrb[0].mxu0
        %v4070 = vadd.f32 %v3892, %v4069
        %4071 = vmatprep.mubr.bf16.mxu0 0
        %4072 = vmatmul.mubr.bf16.gmra.mrb[0].mxu0 %v3987
        %v4073 = vpop.f32.mrb[0].mxu0
        %v4074 = vadd.f32 %v3896, %v4073
        %v4075 = vpop.f32.mrb[0].mxu0
        %v4076 = vadd.f32 %v3898, %v4075
        %v4077 = vpop.f32.mrb[0].mxu0
        %v4078 = vadd.f32 %v3900, %v4077
        %v4079 = vpop.f32.mrb[0].mxu0
        %v4080 = vadd.f32 %v3902, %v4079
        %4081 = vmatprep.mubr.bf16.mxu0 0
        %4082 = vmatmul.mubr.bf16.gmra.mrb[0].mxu0 %v3989
        %v4083 = vpop.f32.mrb[0].mxu0
        %v4084 = vadd.f32 %v3906, %v4083
        %v4085 = vpop.f32.mrb[0].mxu0
        %v4086 = vadd.f32 %v3908, %v4085
        %v4087 = vpop.f32.mrb[0].mxu0
        %v4088 = vadd.f32 %v3910, %v4087
        %v4089 = vpop.f32.mrb[0].mxu0
        %v4090 = vadd.f32 %v3912, %v4089
        %4091 = vmatprep.mubr.bf16.mxu0 0
        %4092 = vmatmul.mubr.bf16.gmra.mrb[0].mxu0 %v3991
        %v4093 = vpop.f32.mrb[0].mxu0
        %v4094 = vadd.f32 %v3916, %v4093
        %v4095 = vpop.f32.mrb[0].mxu0
        %v4096 = vadd.f32 %v3918, %v4095
        %v4097 = vpop.f32.mrb[0].mxu0
        %v4098 = vadd.f32 %v3920, %v4097
        %v4099 = vpop.f32.mrb[0].mxu0
        %v4100 = vadd.f32 %v3922, %v4099
        %4101 = vdwg.mxu0
        %s4102 = scalar_lea.vmem %s5, 176
        %v4103 = vld [vmem:[%s4102] sm:$0xff]
        %v4104 = vld [vmem:[%s4102 + $0x8] sm:$0xff]
        %v4105 = vld [vmem:[%s4102 + $0x10] sm:$0xff]
        %v4106 = vld [vmem:[%s4102 + $0x18] sm:$0xff]
        %v4107 = vld [vmem:[%s4102 + $0x20] sm:$0xff]
        %v4108 = vld [vmem:[%s4102 + $0x28] sm:$0xff]
        %v4109 = vld [vmem:[%s4102 + $0x30] sm:$0xff]
        %v4110 = vld [vmem:[%s4102 + $0x38] sm:$0xff]
        %v4111 = vld [vmem:[%s4102 + $0x40] sm:$0xff]
        %v4112 = vld [vmem:[%s4102 + $0x48] sm:$0xff]
        %v4113 = vld [vmem:[%s4102 + $0x50] sm:$0x33]
        %v4121 = vrot.slane %v3652, 1
        %v4122 = vrot.slane %v3653, 1
        %v4123 = vsel %vm1388, %v4121, %v4122
        %v4124 = vrot.slane %v3654, 1
        %v4125 = vsel %vm1388, %v4122, %v4124
        %v4126 = vrot.slane %v3655, 1
        %v4127 = vsel %vm1388, %v4124, %v4126
        %v4128 = vrot.slane %v3656, 1
        %v4129 = vsel %vm1388, %v4126, %v4128
        %v4130 = vrot.slane %v3657, 1
        %v4131 = vsel %vm1388, %v4128, %v4130
        %v4132 = vrot.slane %v3658, 1
        %v4133 = vsel %vm1388, %v4130, %v4132
        %v4145 = vunpack.c.l.b16 %v4103
        %v4146 = vunpack.c.h.b16 %v4103
        %v4147 = vunpack.c.l.b16 %v4104
        %v4148 = vunpack.c.h.b16 %v4104
        %v4149 = vunpack.c.l.b16 %v4105
        %v4150 = vunpack.c.h.b16 %v4105
        %v4151 = vunpack.c.l.b16 %v4106
        %v4152 = vunpack.c.h.b16 %v4106
        %v4153 = vunpack.c.l.b16 %v4107
        %v4154 = vunpack.c.h.b16 %v4107
        %v4155 = vunpack.c.l.b16 %v4108
        %v4156 = vunpack.c.h.b16 %v4108
        %v4157 = vunpack.c.l.b16 %v4109
        %v4158 = vunpack.c.h.b16 %v4109
        %v4159 = vunpack.c.l.b16 %v4110
        %v4160 = vunpack.c.h.b16 %v4110
        %v4161 = vunpack.c.l.b16 %v4111
        %v4162 = vunpack.c.h.b16 %v4111
        %v4163 = vunpack.c.l.b16 %v4112
        %v4164 = vunpack.c.h.b16 %v4112
        %v4165 = vunpack.c.l.b16 %v4113
        %v4166 = vunpack.c.h.b16 %v4113
        %v4167 = vpack.c.b16 %v4147, %v4145
        %v4168 = vpack.c.b16 %v4148, %v4146
        %v4169 = vpack.c.b16 %v4151, %v4149
        %v4170 = vpack.c.b16 %v4152, %v4150
        %v4171 = vpack.c.b16 %v4155, %v4153
        %v4172 = vpack.c.b16 %v4156, %v4154
        %v4173 = vpack.c.b16 %v4159, %v4157
        %v4174 = vpack.c.b16 %v4160, %v4158
        %v4175 = vpack.c.b16 %v4163, %v4161
        %v4176 = vpack.c.b16 %v4164, %v4162
        %v4177 = vpack.c.b16 %v4165, %v4165
        %v4178 = vpack.c.b16 %v4166, %v4166
        %v4190 = vsel %vm3792, %v4123, 0
        %v4193 = vsel %vm3792, %v4125, 0
        %v4196 = vsel %vm3792, %v4127, 0
        %v4199 = vsel %vm3792, %v4129, 0
        %v4202 = vsel %vm3792, %v4131, 0
        %v4205 = vsel %vm3792, %v4133, 0
        %v4208 = vsel %vm3792, %v4132, 0
        %v4211 = vsel %vm3814, %v4177, 0
        %v4214 = vsel %vm3814, %v4178, 0
        %4216 = vmatprep.subr.bf16.mxu0 %v4168
        %4217 = vmatpush1.bf16.msra.mxu0 %v4167
        %4218 = vmatprep.subr.bf16.mxu0 %v4170
        %4219 = vmatpush1.bf16.msra.mxu0 %v4169
        %4220 = vmatprep.subr.bf16.mxu0 %v4172
        %4221 = vmatpush1.bf16.msra.mxu0 %v4171
        %4222 = vmatprep.subr.bf16.mxu0 %v4174
        %4223 = vmatpush1.bf16.msra.mxu0 %v4173
        %4224 = vmatprep.subr.bf16.mxu0 %v4176
        %4225 = vmatpush1.bf16.msra.mxu0 %v4175
        %4226 = vmatprep.subr.bf16.mxu0 %v4214
        %4227 = vmatpush1.bf16.msra.mxu0 %v4211
        %4228 = vmatprep.subr.bf16.mxu0 0
        %4229 = vmatpush1.bf16.msra.mxu0 0
        %4230 = vmatprep.subr.bf16.mxu0 0
        %4231 = vmatpush1.bf16.msra.mxu0 0
        %4232 = vmatprep.subr.bf16.mxu0 0
        %4233 = vmatpush1.bf16.msra.mxu0 0
        %4234 = vmatprep.subr.bf16.mxu0 0
        %4235 = vmatpush1.bf16.msra.mxu0 0
        %4236 = vmatprep.subr.bf16.mxu0 0
        %4237 = vmatpush1.bf16.msra.mxu0 0
        %4238 = vmatprep.subr.bf16.mxu0 0
        %4239 = vmatpush1.bf16.msra.mxu0 0
        %4240 = vmatprep.subr.bf16.mxu0 0
        %4241 = vmatpush1.bf16.msra.mxu0 0
        %4242 = vmatprep.subr.bf16.mxu0 0
        %4243 = vmatpush1.bf16.msra.mxu0 0
        %4244 = vmatprep.subr.bf16.mxu0 0
        %4245 = vmatpush1.bf16.msra.mxu0 0
        %4246 = vmatprep.subr.bf16.mxu0 0
        %4247 = vmatpush1.bf16.msra.mxu0 0
        %4248 = vmatprep.mubr.bf16.mxu0 0
        %4249 = vmatmul.mubr.bf16.gmra.mrb[0].mxu0 %v4190
        %v4250 = vpop.f32.mrb[0].mxu0
        %v4251 = vadd.f32 0.0, %v4250
        %v4252 = vpop.f32.mrb[0].mxu0
        %v4253 = vadd.f32 0.0, %v4252
        %v4254 = vpop.f32.mrb[0].mxu0
        %v4255 = vadd.f32 0.0, %v4254
        %v4256 = vpop.f32.mrb[0].mxu0
        %v4257 = vadd.f32 0.0, %v4256
        %4258 = vmatprep.mubr.bf16.mxu0 0
        %4259 = vmatmul.mubr.bf16.gmra.mrb[0].mxu0 %v4193
        %v4260 = vpop.f32.mrb[0].mxu0
        %v4261 = vadd.f32 0.0, %v4260
        %v4262 = vpop.f32.mrb[0].mxu0
        %v4263 = vadd.f32 0.0, %v4262
        %v4264 = vpop.f32.mrb[0].mxu0
        %v4265 = vadd.f32 0.0, %v4264
        %v4266 = vpop.f32.mrb[0].mxu0
        %v4267 = vadd.f32 0.0, %v4266
        %4268 = vmatprep.mubr.bf16.mxu0 0
        %4269 = vmatmul.mubr.bf16.gmra.mrb[0].mxu0 %v4196
        %v4270 = vpop.f32.mrb[0].mxu0
        %v4271 = vadd.f32 0.0, %v4270
        %v4272 = vpop.f32.mrb[0].mxu0
        %v4273 = vadd.f32 0.0, %v4272
        %v4274 = vpop.f32.mrb[0].mxu0
        %v4275 = vadd.f32 0.0, %v4274
        %v4276 = vpop.f32.mrb[0].mxu0
        %v4277 = vadd.f32 0.0, %v4276
        %4278 = vmatprep.mubr.bf16.mxu0 0
        %4279 = vmatmul.mubr.bf16.gmra.mrb[0].mxu0 %v4199
        %v4280 = vpop.f32.mrb[0].mxu0
        %v4281 = vadd.f32 0.0, %v4280
        %v4282 = vpop.f32.mrb[0].mxu0
        %v4283 = vadd.f32 0.0, %v4282
        %v4284 = vpop.f32.mrb[0].mxu0
        %v4285 = vadd.f32 0.0, %v4284
        %v4286 = vpop.f32.mrb[0].mxu0
        %v4287 = vadd.f32 0.0, %v4286
        %4288 = vmatprep.mubr.bf16.mxu0 0
        %4289 = vmatmul.mubr.bf16.gmra.mrb[0].mxu0 %v4202
        %v4290 = vpop.f32.mrb[0].mxu0
        %v4291 = vadd.f32 0.0, %v4290
        %v4292 = vpop.f32.mrb[0].mxu0
        %v4293 = vadd.f32 0.0, %v4292
        %v4294 = vpop.f32.mrb[0].mxu0
        %v4295 = vadd.f32 0.0, %v4294
        %v4296 = vpop.f32.mrb[0].mxu0
        %v4297 = vadd.f32 0.0, %v4296
        %4298 = vmatprep.mubr.bf16.mxu0 0
        %4299 = vmatmul.mubr.bf16.gmra.mrb[0].mxu0 %v4205
        %v4300 = vpop.f32.mrb[0].mxu0
        %v4301 = vadd.f32 0.0, %v4300
        %v4302 = vpop.f32.mrb[0].mxu0
        %v4303 = vadd.f32 0.0, %v4302
        %v4304 = vpop.f32.mrb[0].mxu0
        %v4305 = vadd.f32 0.0, %v4304
        %v4306 = vpop.f32.mrb[0].mxu0
        %v4307 = vadd.f32 0.0, %v4306
        %4308 = vmatprep.mubr.bf16.mxu0 0
        %4309 = vmatmul.mubr.bf16.gmra.mrb[0].mxu0 %v4208
        %v4310 = vpop.f32.mrb[0].mxu0
        %v4311 = vadd.f32 0.0, %v4310
        %v4312 = vpop.f32.mrb[0].mxu0
        %v4313 = vadd.f32 0.0, %v4312
        %v4314 = vpop.f32.mrb[0].mxu0
        %v4315 = vadd.f32 0.0, %v4314
        %v4316 = vpop.f32.mrb[0].mxu0
        %v4317 = vadd.f32 0.0, %v4316
        %4318 = vdwg.mxu0
        %v4319 = vadd.f32 %v4034, %v4251
        %v4320 = vadd.f32 %v4036, %v4253
        %v4321 = vadd.f32 %v4038, %v4255
        %v4322 = vadd.f32 %v4040, %v4257
        %v4323 = vadd.f32 %v4044, %v4261
        %v4324 = vadd.f32 %v4046, %v4263
        %v4325 = vadd.f32 %v4048, %v4265
        %v4326 = vadd.f32 %v4050, %v4267
        %v4327 = vadd.f32 %v4054, %v4271
        %v4328 = vadd.f32 %v4056, %v4273
        %v4329 = vadd.f32 %v4058, %v4275
        %v4330 = vadd.f32 %v4060, %v4277
        %v4331 = vadd.f32 %v4064, %v4281
        %v4332 = vadd.f32 %v4066, %v4283
        %v4333 = vadd.f32 %v4068, %v4285
        %v4334 = vadd.f32 %v4070, %v4287
        %v4335 = vadd.f32 %v4074, %v4291
        %v4336 = vadd.f32 %v4076, %v4293
        %v4337 = vadd.f32 %v4078, %v4295
        %v4338 = vadd.f32 %v4080, %v4297
        %v4339 = vadd.f32 %v4084, %v4301
        %v4340 = vadd.f32 %v4086, %v4303
        %v4341 = vadd.f32 %v4088, %v4305
        %v4342 = vadd.f32 %v4090, %v4307
        %v4343 = vadd.f32 %v4094, %v4311
        %v4344 = vadd.f32 %v4096, %v4313
        %v4345 = vadd.f32 %v4098, %v4315
        %v4346 = vadd.f32 %v4100, %v4317
        %s4347 = scalar_lea.vmem %s5, 264
        %v4348 = vld [vmem:[%s4347] sm:$0xff]
        %v4349 = vld [vmem:[%s4347 + $0x8] sm:$0xff]
        %v4350 = vld [vmem:[%s4347 + $0x10] sm:$0xff]
        %v4351 = vld [vmem:[%s4347 + $0x18] sm:$0xff]
        %v4352 = vld [vmem:[%s4347 + $0x20] sm:$0xff]
        %v4353 = vld [vmem:[%s4347 + $0x28] sm:$0xff]
        %v4354 = vld [vmem:[%s4347 + $0x30] sm:$0xff]
        %v4355 = vld [vmem:[%s4347 + $0x38] sm:$0xff]
        %v4356 = vld [vmem:[%s4347 + $0x40] sm:$0xff]
        %v4357 = vld [vmem:[%s4347 + $0x48] sm:$0xff]
        %v4358 = vld [vmem:[%s4347 + $0x50] sm:$0x33]
        %v4359 = vrot.slane %v3683, 1
        %v4360 = vrot.slane %v3685, 2
        %v4361 = vor.u32 %v4359, %v4360
        %v4362 = vrot.slane %v3694, 1
        %v4363 = vrot.slane %v3690, 2
        %v4364 = vor.u32 %v4362, %v4363
        %v4365 = vsel %vm1798, %v4361, %v4364
        %v4366 = vrot.slane %v3702, 1
        %v4367 = vrot.slane %v3698, 2
        %v4368 = vor.u32 %v4366, %v4367
        %v4369 = vsel %vm1798, %v4364, %v4368
        %v4370 = vrot.slane %v3710, 1
        %v4371 = vrot.slane %v3706, 2
        %v4372 = vor.u32 %v4370, %v4371
        %v4373 = vsel %vm1798, %v4368, %v4372
        %v4374 = vrot.slane %v3718, 1
        %v4375 = vrot.slane %v3714, 2
        %v4376 = vor.u32 %v4374, %v4375
        %v4377 = vsel %vm1798, %v4372, %v4376
        %v4378 = vrot.slane %v3726, 1
        %v4379 = vrot.slane %v3722, 2
        %v4380 = vor.u32 %v4378, %v4379
        %v4381 = vsel %vm1798, %v4376, %v4380
        %v4382 = vrot.slane %v3734, 1
        %v4383 = vrot.slane %v3730, 2
        %v4384 = vor.u32 %v4382, %v4383
        %v4385 = vsel %vm1798, %v4380, %v4384
        %v4397 = vunpack.c.l.b16 %v4348
        %v4398 = vunpack.c.h.b16 %v4348
        %v4399 = vunpack.c.l.b16 %v4349
        %v4400 = vunpack.c.h.b16 %v4349
        %v4401 = vunpack.c.l.b16 %v4350
        %v4402 = vunpack.c.h.b16 %v4350
        %v4403 = vunpack.c.l.b16 %v4351
        %v4404 = vunpack.c.h.b16 %v4351
        %v4405 = vunpack.c.l.b16 %v4352
        %v4406 = vunpack.c.h.b16 %v4352
        %v4407 = vunpack.c.l.b16 %v4353
        %v4408 = vunpack.c.h.b16 %v4353
        %v4409 = vunpack.c.l.b16 %v4354
        %v4410 = vunpack.c.h.b16 %v4354
        %v4411 = vunpack.c.l.b16 %v4355
        %v4412 = vunpack.c.h.b16 %v4355
        %v4413 = vunpack.c.l.b16 %v4356
        %v4414 = vunpack.c.h.b16 %v4356
        %v4415 = vunpack.c.l.b16 %v4357
        %v4416 = vunpack.c.h.b16 %v4357
        %v4417 = vunpack.c.l.b16 %v4358
        %v4418 = vunpack.c.h.b16 %v4358
        %v4419 = vpack.c.b16 %v4399, %v4397
        %v4420 = vpack.c.b16 %v4400, %v4398
        %v4421 = vpack.c.b16 %v4403, %v4401
        %v4422 = vpack.c.b16 %v4404, %v4402
        %v4423 = vpack.c.b16 %v4407, %v4405
        %v4424 = vpack.c.b16 %v4408, %v4406
        %v4425 = vpack.c.b16 %v4411, %v4409
        %v4426 = vpack.c.b16 %v4412, %v4410
        %v4427 = vpack.c.b16 %v4415, %v4413
        %v4428 = vpack.c.b16 %v4416, %v4414
        %v4429 = vpack.c.b16 %v4417, %v4417
        %v4430 = vpack.c.b16 %v4418, %v4418
        %v4442 = vsel %vm3792, %v4365, 0
        %v4445 = vsel %vm3792, %v4369, 0
        %v4448 = vsel %vm3792, %v4373, 0
        %v4451 = vsel %vm3792, %v4377, 0
        %v4454 = vsel %vm3792, %v4381, 0
        %v4457 = vsel %vm3792, %v4385, 0
        %v4460 = vsel %vm3792, %v4384, 0
        %v4463 = vsel %vm3814, %v4429, 0
        %v4466 = vsel %vm3814, %v4430, 0
        %4468 = vmatprep.subr.bf16.mxu0 %v4420
        %4469 = vmatpush1.bf16.msra.mxu0 %v4419
        %4470 = vmatprep.subr.bf16.mxu0 %v4422
        %4471 = vmatpush1.bf16.msra.mxu0 %v4421
        %4472 = vmatprep.subr.bf16.mxu0 %v4424
        %4473 = vmatpush1.bf16.msra.mxu0 %v4423
        %4474 = vmatprep.subr.bf16.mxu0 %v4426
        %4475 = vmatpush1.bf16.msra.mxu0 %v4425
        %4476 = vmatprep.subr.bf16.mxu0 %v4428
        %4477 = vmatpush1.bf16.msra.mxu0 %v4427
        %4478 = vmatprep.subr.bf16.mxu0 %v4466
        %4479 = vmatpush1.bf16.msra.mxu0 %v4463
        %4480 = vmatprep.subr.bf16.mxu0 0
        %4481 = vmatpush1.bf16.msra.mxu0 0
        %4482 = vmatprep.subr.bf16.mxu0 0
        %4483 = vmatpush1.bf16.msra.mxu0 0
        %4484 = vmatprep.subr.bf16.mxu0 0
        %4485 = vmatpush1.bf16.msra.mxu0 0
        %4486 = vmatprep.subr.bf16.mxu0 0
        %4487 = vmatpush1.bf16.msra.mxu0 0
        %4488 = vmatprep.subr.bf16.mxu0 0
        %4489 = vmatpush1.bf16.msra.mxu0 0
        %4490 = vmatprep.subr.bf16.mxu0 0
        %4491 = vmatpush1.bf16.msra.mxu0 0
        %4492 = vmatprep.subr.bf16.mxu0 0
        %4493 = vmatpush1.bf16.msra.mxu0 0
        %4494 = vmatprep.subr.bf16.mxu0 0
        %4495 = vmatpush1.bf16.msra.mxu0 0
        %4496 = vmatprep.subr.bf16.mxu0 0
        %4497 = vmatpush1.bf16.msra.mxu0 0
        %4498 = vmatprep.subr.bf16.mxu0 0
        %4499 = vmatpush1.bf16.msra.mxu0 0
        %4500 = vmatprep.mubr.bf16.mxu0 0
        %4501 = vmatmul.mubr.bf16.gmra.mrb[0].mxu0 %v4442
        %v4502 = vpop.f32.mrb[0].mxu0
        %v4503 = vadd.f32 0.0, %v4502
        %v4504 = vpop.f32.mrb[0].mxu0
        %v4505 = vadd.f32 0.0, %v4504
        %v4506 = vpop.f32.mrb[0].mxu0
        %v4507 = vadd.f32 0.0, %v4506
        %v4508 = vpop.f32.mrb[0].mxu0
        %v4509 = vadd.f32 0.0, %v4508
        %4510 = vmatprep.mubr.bf16.mxu0 0
        %4511 = vmatmul.mubr.bf16.gmra.mrb[0].mxu0 %v4445
        %v4512 = vpop.f32.mrb[0].mxu0
        %v4513 = vadd.f32 0.0, %v4512
        %v4514 = vpop.f32.mrb[0].mxu0
        %v4515 = vadd.f32 0.0, %v4514
        %v4516 = vpop.f32.mrb[0].mxu0
        %v4517 = vadd.f32 0.0, %v4516
        %v4518 = vpop.f32.mrb[0].mxu0
        %v4519 = vadd.f32 0.0, %v4518
        %4520 = vmatprep.mubr.bf16.mxu0 0
        %4521 = vmatmul.mubr.bf16.gmra.mrb[0].mxu0 %v4448
        %v4522 = vpop.f32.mrb[0].mxu0
        %v4523 = vadd.f32 0.0, %v4522
        %v4524 = vpop.f32.mrb[0].mxu0
        %v4525 = vadd.f32 0.0, %v4524
        %v4526 = vpop.f32.mrb[0].mxu0
        %v4527 = vadd.f32 0.0, %v4526
        %v4528 = vpop.f32.mrb[0].mxu0
        %v4529 = vadd.f32 0.0, %v4528
        %4530 = vmatprep.mubr.bf16.mxu0 0
        %4531 = vmatmul.mubr.bf16.gmra.mrb[0].mxu0 %v4451
        %v4532 = vpop.f32.mrb[0].mxu0
        %v4533 = vadd.f32 0.0, %v4532
        %v4534 = vpop.f32.mrb[0].mxu0
        %v4535 = vadd.f32 0.0, %v4534
        %v4536 = vpop.f32.mrb[0].mxu0
        %v4537 = vadd.f32 0.0, %v4536
        %v4538 = vpop.f32.mrb[0].mxu0
        %v4539 = vadd.f32 0.0, %v4538
        %4540 = vmatprep.mubr.bf16.mxu0 0
        %4541 = vmatmul.mubr.bf16.gmra.mrb[0].mxu0 %v4454
        %v4542 = vpop.f32.mrb[0].mxu0
        %v4543 = vadd.f32 0.0, %v4542
        %v4544 = vpop.f32.mrb[0].mxu0
        %v4545 = vadd.f32 0.0, %v4544
        %v4546 = vpop.f32.mrb[0].mxu0
        %v4547 = vadd.f32 0.0, %v4546
        %v4548 = vpop.f32.mrb[0].mxu0
        %v4549 = vadd.f32 0.0, %v4548
        %4550 = vmatprep.mubr.bf16.mxu0 0
        %4551 = vmatmul.mubr.bf16.gmra.mrb[0].mxu0 %v4457
        %v4552 = vpop.f32.mrb[0].mxu0
        %v4553 = vadd.f32 0.0, %v4552
        %v4554 = vpop.f32.mrb[0].mxu0
        %v4555 = vadd.f32 0.0, %v4554
        %v4556 = vpop.f32.mrb[0].mxu0
        %v4557 = vadd.f32 0.0, %v4556
        %v4558 = vpop.f32.mrb[0].mxu0
        %v4559 = vadd.f32 0.0, %v4558
        %4560 = vmatprep.mubr.bf16.mxu0 0
        %4561 = vmatmul.mubr.bf16.gmra.mrb[0].mxu0 %v4460
        %v4562 = vpop.f32.mrb[0].mxu0
        %v4563 = vadd.f32 0.0, %v4562
        %v4564 = vpop.f32.mrb[0].mxu0
        %v4565 = vadd.f32 0.0, %v4564
        %v4566 = vpop.f32.mrb[0].mxu0
        %v4567 = vadd.f32 0.0, %v4566
        %v4568 = vpop.f32.mrb[0].mxu0
        %v4569 = vadd.f32 0.0, %v4568
        %4570 = vdwg.mxu0
        %v4571 = vadd.f32 %v4319, %v4503
        %v4572 = vadd.f32 %v4320, %v4505
        %v4573 = vadd.f32 %v4321, %v4507
        %v4574 = vadd.f32 %v4322, %v4509
        %v4575 = vadd.f32 %v4323, %v4513
        %v4576 = vadd.f32 %v4324, %v4515
        %v4577 = vadd.f32 %v4325, %v4517
        %v4578 = vadd.f32 %v4326, %v4519
        %v4579 = vadd.f32 %v4327, %v4523
        %v4580 = vadd.f32 %v4328, %v4525
        %v4581 = vadd.f32 %v4329, %v4527
        %v4582 = vadd.f32 %v4330, %v4529
        %v4583 = vadd.f32 %v4331, %v4533
        %v4584 = vadd.f32 %v4332, %v4535
        %v4585 = vadd.f32 %v4333, %v4537
        %v4586 = vadd.f32 %v4334, %v4539
        %v4587 = vadd.f32 %v4335, %v4543
        %v4588 = vadd.f32 %v4336, %v4545
        %v4589 = vadd.f32 %v4337, %v4547
        %v4590 = vadd.f32 %v4338, %v4549
        %v4591 = vadd.f32 %v4339, %v4553
        %v4592 = vadd.f32 %v4340, %v4555
        %v4593 = vadd.f32 %v4341, %v4557
        %v4594 = vadd.f32 %v4342, %v4559
        %v4595 = vadd.f32 %v4343, %v4563
        %v4596 = vadd.f32 %v4344, %v4565
        %v4597 = vadd.f32 %v4345, %v4567
        %v4598 = vadd.f32 %v4346, %v4569
        %s4599 = scalar_lea.vmem %s5, 352
        %v4600 = vld [vmem:[%s4599] sm:$0xff]
        %v4601 = vld [vmem:[%s4599 + $0x8] sm:$0xff]
        %v4602 = vld [vmem:[%s4599 + $0x10] sm:$0xff]
        %v4603 = vld [vmem:[%s4599 + $0x18] sm:$0xff]
        %v4604 = vld [vmem:[%s4599 + $0x20] sm:$0xff]
        %v4605 = vld [vmem:[%s4599 + $0x28] sm:$0xff]
        %v4606 = vld [vmem:[%s4599 + $0x30] sm:$0xff]
        %v4607 = vld [vmem:[%s4599 + $0x38] sm:$0xff]
        %v4608 = vld [vmem:[%s4599 + $0x40] sm:$0xff]
        %v4609 = vld [vmem:[%s4599 + $0x48] sm:$0xff]
        %v4610 = vld [vmem:[%s4599 + $0x50] sm:$0x33]
        %v4611 = vrot.slane %v3652, 2
        %v4612 = vrot.slane %v3653, 2
        %v4613 = vsel %vm2240, %v4611, %v4612
        %v4614 = vrot.slane %v3654, 2
        %v4615 = vsel %vm2240, %v4612, %v4614
        %v4616 = vrot.slane %v3655, 2
        %v4617 = vsel %vm2240, %v4614, %v4616
        %v4618 = vrot.slane %v3656, 2
        %v4619 = vsel %vm2240, %v4616, %v4618
        %v4620 = vrot.slane %v3657, 2
        %v4621 = vsel %vm2240, %v4618, %v4620
        %v4622 = vrot.slane %v3658, 2
        %v4623 = vsel %vm2240, %v4620, %v4622
        %v4635 = vunpack.c.l.b16 %v4600
        %v4636 = vunpack.c.h.b16 %v4600
        %v4637 = vunpack.c.l.b16 %v4601
        %v4638 = vunpack.c.h.b16 %v4601
        %v4639 = vunpack.c.l.b16 %v4602
        %v4640 = vunpack.c.h.b16 %v4602
        %v4641 = vunpack.c.l.b16 %v4603
        %v4642 = vunpack.c.h.b16 %v4603
        %v4643 = vunpack.c.l.b16 %v4604
        %v4644 = vunpack.c.h.b16 %v4604
        %v4645 = vunpack.c.l.b16 %v4605
        %v4646 = vunpack.c.h.b16 %v4605
        %v4647 = vunpack.c.l.b16 %v4606
        %v4648 = vunpack.c.h.b16 %v4606
        %v4649 = vunpack.c.l.b16 %v4607
        %v4650 = vunpack.c.h.b16 %v4607
        %v4651 = vunpack.c.l.b16 %v4608
        %v4652 = vunpack.c.h.b16 %v4608
        %v4653 = vunpack.c.l.b16 %v4609
        %v4654 = vunpack.c.h.b16 %v4609
        %v4655 = vunpack.c.l.b16 %v4610
        %v4656 = vunpack.c.h.b16 %v4610
        %v4657 = vpack.c.b16 %v4637, %v4635
        %v4658 = vpack.c.b16 %v4638, %v4636
        %v4659 = vpack.c.b16 %v4641, %v4639
        %v4660 = vpack.c.b16 %v4642, %v4640
        %v4661 = vpack.c.b16 %v4645, %v4643
        %v4662 = vpack.c.b16 %v4646, %v4644
        %v4663 = vpack.c.b16 %v4649, %v4647
        %v4664 = vpack.c.b16 %v4650, %v4648
        %v4665 = vpack.c.b16 %v4653, %v4651
        %v4666 = vpack.c.b16 %v4654, %v4652
        %v4667 = vpack.c.b16 %v4655, %v4655
        %v4668 = vpack.c.b16 %v4656, %v4656
        %v4680 = vsel %vm3792, %v4613, 0
        %v4683 = vsel %vm3792, %v4615, 0
        %v4686 = vsel %vm3792, %v4617, 0
        %v4689 = vsel %vm3792, %v4619, 0
        %v4692 = vsel %vm3792, %v4621, 0
        %v4695 = vsel %vm3792, %v4623, 0
        %v4698 = vsel %vm3792, %v4622, 0
        %v4701 = vsel %vm3814, %v4667, 0
        %v4704 = vsel %vm3814, %v4668, 0
        %4706 = vmatprep.subr.bf16.mxu0 %v4658
        %4707 = vmatpush1.bf16.msra.mxu0 %v4657
        %4708 = vmatprep.subr.bf16.mxu0 %v4660
        %4709 = vmatpush1.bf16.msra.mxu0 %v4659
        %4710 = vmatprep.subr.bf16.mxu0 %v4662
        %4711 = vmatpush1.bf16.msra.mxu0 %v4661
        %4712 = vmatprep.subr.bf16.mxu0 %v4664
        %4713 = vmatpush1.bf16.msra.mxu0 %v4663
        %4714 = vmatprep.subr.bf16.mxu0 %v4666
        %4715 = vmatpush1.bf16.msra.mxu0 %v4665
        %4716 = vmatprep.subr.bf16.mxu0 %v4704
        %4717 = vmatpush1.bf16.msra.mxu0 %v4701
        %4718 = vmatprep.subr.bf16.mxu0 0
        %4719 = vmatpush1.bf16.msra.mxu0 0
        %4720 = vmatprep.subr.bf16.mxu0 0
        %4721 = vmatpush1.bf16.msra.mxu0 0
        %4722 = vmatprep.subr.bf16.mxu0 0
        %4723 = vmatpush1.bf16.msra.mxu0 0
        %4724 = vmatprep.subr.bf16.mxu0 0
        %4725 = vmatpush1.bf16.msra.mxu0 0
        %4726 = vmatprep.subr.bf16.mxu0 0
        %4727 = vmatpush1.bf16.msra.mxu0 0
        %4728 = vmatprep.subr.bf16.mxu0 0
        %4729 = vmatpush1.bf16.msra.mxu0 0
        %4730 = vmatprep.subr.bf16.mxu0 0
        %4731 = vmatpush1.bf16.msra.mxu0 0
        %4732 = vmatprep.subr.bf16.mxu0 0
        %4733 = vmatpush1.bf16.msra.mxu0 0
        %4734 = vmatprep.subr.bf16.mxu0 0
        %4735 = vmatpush1.bf16.msra.mxu0 0
        %4736 = vmatprep.subr.bf16.mxu0 0
        %4737 = vmatpush1.bf16.msra.mxu0 0
        %4738 = vmatprep.mubr.bf16.mxu0 0
        %4739 = vmatmul.mubr.bf16.gmra.mrb[0].mxu0 %v4680
        %v4740 = vpop.f32.mrb[0].mxu0
        %v4741 = vadd.f32 0.0, %v4740
        %v4742 = vpop.f32.mrb[0].mxu0
        %v4743 = vadd.f32 0.0, %v4742
        %v4744 = vpop.f32.mrb[0].mxu0
        %v4745 = vadd.f32 0.0, %v4744
        %v4746 = vpop.f32.mrb[0].mxu0
        %v4747 = vadd.f32 0.0, %v4746
        %4748 = vmatprep.mubr.bf16.mxu0 0
        %4749 = vmatmul.mubr.bf16.gmra.mrb[0].mxu0 %v4683
        %v4750 = vpop.f32.mrb[0].mxu0
        %v4751 = vadd.f32 0.0, %v4750
        %v4752 = vpop.f32.mrb[0].mxu0
        %v4753 = vadd.f32 0.0, %v4752
        %v4754 = vpop.f32.mrb[0].mxu0
        %v4755 = vadd.f32 0.0, %v4754
        %v4756 = vpop.f32.mrb[0].mxu0
        %v4757 = vadd.f32 0.0, %v4756
        %4758 = vmatprep.mubr.bf16.mxu0 0
        %4759 = vmatmul.mubr.bf16.gmra.mrb[0].mxu0 %v4686
        %v4760 = vpop.f32.mrb[0].mxu0
        %v4761 = vadd.f32 0.0, %v4760
        %v4762 = vpop.f32.mrb[0].mxu0
        %v4763 = vadd.f32 0.0, %v4762
        %v4764 = vpop.f32.mrb[0].mxu0
        %v4765 = vadd.f32 0.0, %v4764
        %v4766 = vpop.f32.mrb[0].mxu0
        %v4767 = vadd.f32 0.0, %v4766
        %4768 = vmatprep.mubr.bf16.mxu0 0
        %4769 = vmatmul.mubr.bf16.gmra.mrb[0].mxu0 %v4689
        %v4770 = vpop.f32.mrb[0].mxu0
        %v4771 = vadd.f32 0.0, %v4770
        %v4772 = vpop.f32.mrb[0].mxu0
        %v4773 = vadd.f32 0.0, %v4772
        %v4774 = vpop.f32.mrb[0].mxu0
        %v4775 = vadd.f32 0.0, %v4774
        %v4776 = vpop.f32.mrb[0].mxu0
        %v4777 = vadd.f32 0.0, %v4776
        %4778 = vmatprep.mubr.bf16.mxu0 0
        %4779 = vmatmul.mubr.bf16.gmra.mrb[0].mxu0 %v4692
        %v4780 = vpop.f32.mrb[0].mxu0
        %v4781 = vadd.f32 0.0, %v4780
        %v4782 = vpop.f32.mrb[0].mxu0
        %v4783 = vadd.f32 0.0, %v4782
        %v4784 = vpop.f32.mrb[0].mxu0
        %v4785 = vadd.f32 0.0, %v4784
        %v4786 = vpop.f32.mrb[0].mxu0
        %v4787 = vadd.f32 0.0, %v4786
        %4788 = vmatprep.mubr.bf16.mxu0 0
        %4789 = vmatmul.mubr.bf16.gmra.mrb[0].mxu0 %v4695
        %v4790 = vpop.f32.mrb[0].mxu0
        %v4791 = vadd.f32 0.0, %v4790
        %v4792 = vpop.f32.mrb[0].mxu0
        %v4793 = vadd.f32 0.0, %v4792
        %v4794 = vpop.f32.mrb[0].mxu0
        %v4795 = vadd.f32 0.0, %v4794
        %v4796 = vpop.f32.mrb[0].mxu0
        %v4797 = vadd.f32 0.0, %v4796
        %4798 = vmatprep.mubr.bf16.mxu0 0
        %4799 = vmatmul.mubr.bf16.gmra.mrb[0].mxu0 %v4698
        %v4800 = vpop.f32.mrb[0].mxu0
        %v4801 = vadd.f32 0.0, %v4800
        %v4802 = vpop.f32.mrb[0].mxu0
        %v4803 = vadd.f32 0.0, %v4802
        %v4804 = vpop.f32.mrb[0].mxu0
        %v4805 = vadd.f32 0.0, %v4804
        %v4806 = vpop.f32.mrb[0].mxu0
        %v4807 = vadd.f32 0.0, %v4806
        %4808 = vdwg.mxu0
        %v4809 = vadd.f32 %v4571, %v4741
        %v4810 = vadd.f32 %v4572, %v4743
        %v4811 = vadd.f32 %v4573, %v4745
        %v4812 = vadd.f32 %v4574, %v4747
        %v4813 = vadd.f32 %v4575, %v4751
        %v4814 = vadd.f32 %v4576, %v4753
        %v4815 = vadd.f32 %v4577, %v4755
        %v4816 = vadd.f32 %v4578, %v4757
        %v4817 = vadd.f32 %v4579, %v4761
        %v4818 = vadd.f32 %v4580, %v4763
        %v4819 = vadd.f32 %v4581, %v4765
        %v4820 = vadd.f32 %v4582, %v4767
        %v4821 = vadd.f32 %v4583, %v4771
        %v4822 = vadd.f32 %v4584, %v4773
        %v4823 = vadd.f32 %v4585, %v4775
        %v4824 = vadd.f32 %v4586, %v4777
        %v4825 = vadd.f32 %v4587, %v4781
        %v4826 = vadd.f32 %v4588, %v4783
        %v4827 = vadd.f32 %v4589, %v4785
        %v4828 = vadd.f32 %v4590, %v4787
        %v4829 = vadd.f32 %v4591, %v4791
        %v4830 = vadd.f32 %v4592, %v4793
        %v4831 = vadd.f32 %v4593, %v4795
        %v4832 = vadd.f32 %v4594, %v4797
        %v4833 = vadd.f32 %v4595, %v4801
        %v4834 = vadd.f32 %v4596, %v4803
        %v4835 = vadd.f32 %v4597, %v4805
        %v4836 = vadd.f32 %v4598, %v4807
        %v4837 = vld [vmem:[%s6] sm:$0x3]
        %v4839 = vlaneseq
        %v4840 = vshrl.u32 %v4839, 7
        %v4841 = vsub.s32 0, %v4840
        %v4842 = vrot.slane %v4837, %v4841
        %v4843 = vlaneseq
        %v4844 = vshrl.u32 %v4843, 7
        %v4845 = vsub.s32 1, %v4844
        %v4846 = vrot.slane %v4837, %v4845
        %v4849 = vadd.f32 %v4809, %v4842
        %v4850 = vadd.f32 %v4810, %v4846
        %v4851 = vadd.f32 %v4811, %v4842
        %v4852 = vadd.f32 %v4812, %v4846
        %v4853 = vadd.f32 %v4813, %v4842
        %v4854 = vadd.f32 %v4814, %v4846
        %v4855 = vadd.f32 %v4815, %v4842
        %v4856 = vadd.f32 %v4816, %v4846
        %v4857 = vadd.f32 %v4817, %v4842
        %v4858 = vadd.f32 %v4818, %v4846
        %v4859 = vadd.f32 %v4819, %v4842
        %v4860 = vadd.f32 %v4820, %v4846
        %v4861 = vadd.f32 %v4821, %v4842
        %v4862 = vadd.f32 %v4822, %v4846
        %v4863 = vadd.f32 %v4823, %v4842
        %v4864 = vadd.f32 %v4824, %v4846
        %v4865 = vadd.f32 %v4825, %v4842
        %v4866 = vadd.f32 %v4826, %v4846
        %v4867 = vadd.f32 %v4827, %v4842
        %v4868 = vadd.f32 %v4828, %v4846
        %v4869 = vadd.f32 %v4829, %v4842
        %v4870 = vadd.f32 %v4830, %v4846
        %v4871 = vadd.f32 %v4831, %v4842
        %v4872 = vadd.f32 %v4832, %v4846
        %v4873 = vadd.f32 %v4833, %v4842
        %v4874 = vadd.f32 %v4834, %v4846
        %v4875 = vadd.f32 %v4835, %v4842
        %v4876 = vadd.f32 %v4836, %v4846
        %v4877 = vmax.f32 %v4849, 0.0
        %v4878 = vmax.f32 %v4850, 0.0
        %v4879 = vmax.f32 %v4851, 0.0
        %v4880 = vmax.f32 %v4852, 0.0
        %v4881 = vmax.f32 %v4853, 0.0
        %v4882 = vmax.f32 %v4854, 0.0
        %v4883 = vmax.f32 %v4855, 0.0
        %v4884 = vmax.f32 %v4856, 0.0
        %v4885 = vmax.f32 %v4857, 0.0
        %v4886 = vmax.f32 %v4858, 0.0
        %v4887 = vmax.f32 %v4859, 0.0
        %v4888 = vmax.f32 %v4860, 0.0
        %v4889 = vmax.f32 %v4861, 0.0
        %v4890 = vmax.f32 %v4862, 0.0
        %v4891 = vmax.f32 %v4863, 0.0
        %v4892 = vmax.f32 %v4864, 0.0
        %v4893 = vmax.f32 %v4865, 0.0
        %v4894 = vmax.f32 %v4866, 0.0
        %v4895 = vmax.f32 %v4867, 0.0
        %v4896 = vmax.f32 %v4868, 0.0
        %v4897 = vmax.f32 %v4869, 0.0
        %v4898 = vmax.f32 %v4870, 0.0
        %v4899 = vmax.f32 %v4871, 0.0
        %v4900 = vmax.f32 %v4872, 0.0
        %v4901 = vmax.f32 %v4873, 0.0
        %v4902 = vmax.f32 %v4874, 0.0
        %v4903 = vmax.f32 %v4875, 0.0
        %v4904 = vmax.f32 %v4876, 0.0
        %v4905 = vpack.c.bf16 %v4879, %v4877
        %v4906 = vpack.c.bf16 %v4880, %v4878
        %v4907 = vpack.c.bf16 %v4883, %v4881
        %v4908 = vpack.c.bf16 %v4884, %v4882
        %v4909 = vpack.c.bf16 %v4887, %v4885
        %v4910 = vpack.c.bf16 %v4888, %v4886
        %v4911 = vpack.c.bf16 %v4891, %v4889
        %v4912 = vpack.c.bf16 %v4892, %v4890
        %v4913 = vpack.c.bf16 %v4895, %v4893
        %v4914 = vpack.c.bf16 %v4896, %v4894
        %v4915 = vpack.c.bf16 %v4899, %v4897
        %v4916 = vpack.c.bf16 %v4900, %v4898
        %v4917 = vpack.c.bf16 %v4903, %v4901
        %v4918 = vpack.c.bf16 %v4904, %v4902
        %v4919 = vld [vmem:[%s7] sm:$0xf]
        %v4920 = vld [vmem:[%s7 + $0x4] sm:$0xf]
        %v4921 = vld [vmem:[%s7 + $0x8] sm:$0xf]
        %v4922 = vld [vmem:[%s7 + $0xc] sm:$0xf]
        %v4923 = vld [vmem:[%s7 + $0x10] sm:$0xf]
        %v4929 = vunpack.c.l.b16 %v4919
        %v4930 = vunpack.c.l.b16 %v4920
        %v4931 = vunpack.c.l.b16 %v4921
        %v4932 = vunpack.c.l.b16 %v4922
        %v4933 = vunpack.c.l.b16 %v4923
        %v4934 = vpack.c.b16 %v4930, %v4929
        %v4935 = vpack.c.b16 %v4932, %v4931
        %v4936 = vpack.c.b16 %v4933, %v4933
        %vm4937 = vcmask 883712
        %v4939 = vsel %vm4937, %v4934, 0
        %v4942 = vsel %vm4937, %v4935, 0
        %v4945 = vsel %vm4937, %v4936, 0
        %v4948 = vsel %vm2908, %v4917, 0
        %v4951 = vsel %vm2908, %v4918, 0
        %4953 = vmatprep.subr.bf16.mxu0 %v4906
        %4954 = vmatpush1.bf16.msra.mxu0 %v4905
        %4955 = vmatprep.subr.bf16.mxu0 %v4908
        %4956 = vmatpush1.bf16.msra.mxu0 %v4907
        %4957 = vmatprep.subr.bf16.mxu0 %v4910
        %4958 = vmatpush1.bf16.msra.mxu0 %v4909
        %4959 = vmatprep.subr.bf16.mxu0 %v4912
        %4960 = vmatpush1.bf16.msra.mxu0 %v4911
        %4961 = vmatprep.subr.bf16.mxu0 %v4914
        %4962 = vmatpush1.bf16.msra.mxu0 %v4913
        %4963 = vmatprep.subr.bf16.mxu0 %v4916
        %4964 = vmatpush1.bf16.msra.mxu0 %v4915
        %4965 = vmatprep.subr.bf16.mxu0 %v4951
        %4966 = vmatpush1.bf16.msra.mxu0 %v4948
        %4967 = vmatprep.subr.bf16.mxu0 0
        %4968 = vmatpush1.bf16.msra.mxu0 0
        %4969 = vmatprep.subr.bf16.mxu0 0
        %4970 = vmatpush1.bf16.msra.mxu0 0
        %4971 = vmatprep.subr.bf16.mxu0 0
        %4972 = vmatpush1.bf16.msra.mxu0 0
        %4973 = vmatprep.subr.bf16.mxu0 0
        %4974 = vmatpush1.bf16.msra.mxu0 0
        %4975 = vmatprep.subr.bf16.mxu0 0
        %4976 = vmatpush1.bf16.msra.mxu0 0
        %4977 = vmatprep.subr.bf16.mxu0 0
        %4978 = vmatpush1.bf16.msra.mxu0 0
        %4979 = vmatprep.subr.bf16.mxu0 0
        %4980 = vmatpush1.bf16.msra.mxu0 0
        %4981 = vmatprep.subr.bf16.mxu0 0
        %4982 = vmatpush1.bf16.msra.mxu0 0
        %4983 = vmatprep.subr.bf16.mxu0 0
        %4984 = vmatpush1.bf16.msra.mxu0 0
        %4985 = vmatprep.mubr.bf16.mxu0 0
        %4986 = vmatmul.mubr.bf16.gmra.mrb[0].mxu0 %v4939
        %v4987 = vpop.f32.mrb[0].mxu0
        %v4988 = vadd.f32 0.0, %v4987
        %v4989 = vpop.f32.mrb[0].mxu0
        %v4990 = vadd.f32 0.0, %v4989
        %v4991 = vpop.f32.mrb[0].mxu0
        %v4992 = vadd.f32 0.0, %v4991
        %v4993 = vpop.f32.mrb[0].mxu0
        %v4994 = vadd.f32 0.0, %v4993
        %4995 = vmatprep.mubr.bf16.mxu0 0
        %4996 = vmatmul.mubr.bf16.gmra.mrb[0].mxu0 %v4942
        %v4997 = vpop.f32.mrb[0].mxu0
        %v4998 = vadd.f32 0.0, %v4997
        %v4999 = vpop.f32.mrb[0].mxu0
        %v5000 = vadd.f32 0.0, %v4999
        %v5001 = vpop.f32.mrb[0].mxu0
        %v5002 = vadd.f32 0.0, %v5001
        %v5003 = vpop.f32.mrb[0].mxu0
        %v5004 = vadd.f32 0.0, %v5003
        %5005 = vmatprep.mubr.bf16.mxu0 0
        %5006 = vmatmul.mubr.bf16.gmra.mrb[0].mxu0 %v4945
        %v5007 = vpop.f32.mrb[0].mxu0
        %v5008 = vadd.f32 0.0, %v5007
        %v5009 = vpop.f32.mrb[0].mxu0
        %v5010 = vadd.f32 0.0, %v5009
        %v5011 = vpop.f32.mrb[0].mxu0
        %v5012 = vpop.f32.mrb[0].mxu0
        %5013 = vdwg.mxu0
        %s5014 = scalar_lea.vmem %s7, 20
        %v5015 = vld [vmem:[%s5014] sm:$0xf]
        %v5016 = vld [vmem:[%s5014 + $0x4] sm:$0xf]
        %v5017 = vld [vmem:[%s5014 + $0x8] sm:$0xf]
        %v5018 = vld [vmem:[%s5014 + $0xc] sm:$0xf]
        %v5019 = vld [vmem:[%s5014 + $0x10] sm:$0xf]
        %v5025 = vunpack.c.l.b16 %v5015
        %v5026 = vunpack.c.l.b16 %v5016
        %v5027 = vunpack.c.l.b16 %v5017
        %v5028 = vunpack.c.l.b16 %v5018
        %v5029 = vunpack.c.l.b16 %v5019
        %v5030 = vpack.c.b16 %v5026, %v5025
        %v5031 = vpack.c.b16 %v5028, %v5027
        %v5032 = vpack.c.b16 %v5029, %v5029
        %v5034 = vsel %vm4937, %v5030, 0
        %v5037 = vsel %vm4937, %v5031, 0
        %v5040 = vsel %vm4937, %v5032, 0
        %5042 = vmatprep.subr.bf16.mxu0 %v4906
        %5043 = vmatpush1.bf16.msra.mxu0 %v4905
        %5044 = vmatprep.subr.bf16.mxu0 %v4908
        %5045 = vmatpush1.bf16.msra.mxu0 %v4907
        %5046 = vmatprep.subr.bf16.mxu0 %v4910
        %5047 = vmatpush1.bf16.msra.mxu0 %v4909
        %5048 = vmatprep.subr.bf16.mxu0 %v4912
        %5049 = vmatpush1.bf16.msra.mxu0 %v4911
        %5050 = vmatprep.subr.bf16.mxu0 %v4914
        %5051 = vmatpush1.bf16.msra.mxu0 %v4913
        %5052 = vmatprep.subr.bf16.mxu0 %v4916
        %5053 = vmatpush1.bf16.msra.mxu0 %v4915
        %5054 = vmatprep.subr.bf16.mxu0 %v4951
        %5055 = vmatpush1.bf16.msra.mxu0 %v4948
        %5056 = vmatprep.subr.bf16.mxu0 0
        %5057 = vmatpush1.bf16.msra.mxu0 0
        %5058 = vmatprep.subr.bf16.mxu0 0
        %5059 = vmatpush1.bf16.msra.mxu0 0
        %5060 = vmatprep.subr.bf16.mxu0 0
        %5061 = vmatpush1.bf16.msra.mxu0 0
        %5062 = vmatprep.subr.bf16.mxu0 0
        %5063 = vmatpush1.bf16.msra.mxu0 0
        %5064 = vmatprep.subr.bf16.mxu0 0
        %5065 = vmatpush1.bf16.msra.mxu0 0
        %5066 = vmatprep.subr.bf16.mxu0 0
        %5067 = vmatpush1.bf16.msra.mxu0 0
        %5068 = vmatprep.subr.bf16.mxu0 0
        %5069 = vmatpush1.bf16.msra.mxu0 0
        %5070 = vmatprep.subr.bf16.mxu0 0
        %5071 = vmatpush1.bf16.msra.mxu0 0
        %5072 = vmatprep.subr.bf16.mxu0 0
        %5073 = vmatpush1.bf16.msra.mxu0 0
        %5074 = vmatprep.mubr.bf16.mxu0 0
        %5075 = vmatmul.mubr.bf16.gmra.mrb[0].mxu0 %v5034
        %v5076 = vpop.f32.mrb[0].mxu0
        %v5077 = vadd.f32 0.0, %v5076
        %v5078 = vpop.f32.mrb[0].mxu0
        %v5079 = vadd.f32 0.0, %v5078
        %v5080 = vpop.f32.mrb[0].mxu0
        %v5081 = vadd.f32 0.0, %v5080
        %v5082 = vpop.f32.mrb[0].mxu0
        %v5083 = vadd.f32 0.0, %v5082
        %5084 = vmatprep.mubr.bf16.mxu0 0
        %5085 = vmatmul.mubr.bf16.gmra.mrb[0].mxu0 %v5037
        %v5086 = vpop.f32.mrb[0].mxu0
        %v5087 = vadd.f32 0.0, %v5086
        %v5088 = vpop.f32.mrb[0].mxu0
        %v5089 = vadd.f32 0.0, %v5088
        %v5090 = vpop.f32.mrb[0].mxu0
        %v5091 = vadd.f32 0.0, %v5090
        %v5092 = vpop.f32.mrb[0].mxu0
        %v5093 = vadd.f32 0.0, %v5092
        %5094 = vmatprep.mubr.bf16.mxu0 0
        %5095 = vmatmul.mubr.bf16.gmra.mrb[0].mxu0 %v5040
        %v5096 = vpop.f32.mrb[0].mxu0
        %v5097 = vadd.f32 0.0, %v5096
        %v5098 = vpop.f32.mrb[0].mxu0
        %v5099 = vadd.f32 0.0, %v5098
        %v5100 = vpop.f32.mrb[0].mxu0
        %v5101 = vpop.f32.mrb[0].mxu0
        %5102 = vdwg.mxu0
        %v5103 = vmax.f32 %v4988, %v5077
        %v5104 = vmax.f32 %v4990, %v5079
        %v5105 = vmax.f32 %v4992, %v5081
        %v5106 = vmax.f32 %v4994, %v5083
        %v5107 = vmax.f32 %v4998, %v5087
        %v5108 = vmax.f32 %v5000, %v5089
        %v5109 = vmax.f32 %v5002, %v5091
        %v5110 = vmax.f32 %v5004, %v5093
        %v5111 = vmax.f32 %v5008, %v5097
        %v5112 = vmax.f32 %v5010, %v5099
        %v5113 = vpack.c.bf16 %v5105, %v5103
        %v5114 = vpack.c.bf16 %v5106, %v5104
        %v5115 = vpack.c.bf16 %v5109, %v5107
        %v5116 = vpack.c.bf16 %v5110, %v5108
        %v5117 = vpack.c.bf16 %v5111, %v5111
        %v5118 = vpack.c.bf16 %v5112, %v5112
        %v5119 = vld [vmem:[%s8] sm:$0xf]
        %v5120 = vld [vmem:[%s8 + $0x4] sm:$0xf]
        %v5121 = vld [vmem:[%s8 + $0x8] sm:$0xf]
        %v5122 = vld [vmem:[%s8 + $0xc] sm:$0xf]
        %v5123 = vld [vmem:[%s8 + $0x10] sm:$0xf]
        %v5124 = vld [vmem:[%s8 + $0x14] sm:$0xf]
        %v5125 = vld [vmem:[%s8 + $0x18] sm:$0xf]
        %v5126 = vld [vmem:[%s8 + $0x1c] sm:$0xf]
        %v5127 = vld [vmem:[%s8 + $0x20] sm:$0xf]
        %v5128 = vld [vmem:[%s8 + $0x24] sm:$0xf]
        %v5129 = vld [vmem:[%s8 + $0x28] sm:$0xf]
        %v5130 = vld [vmem:[%s8 + $0x2c] sm:$0xf]
        %v5131 = vld [vmem:[%s8 + $0x30] sm:$0xf]
        %v5132 = vld [vmem:[%s8 + $0x34] sm:$0xf]
        %v5133 = vld [vmem:[%s8 + $0x38] sm:$0xf]
        %v5134 = vld [vmem:[%s8 + $0x3c] sm:$0xf]
        %v5135 = vld [vmem:[%s8 + $0x40] sm:$0xf]
        %v5136 = vld [vmem:[%s8 + $0x44] sm:$0xf]
        %v5137 = vld [vmem:[%s8 + $0x48] sm:$0xf]
        %v5138 = vld [vmem:[%s8 + $0x4c] sm:$0xf]
        %v5159 = vunpack.c.l.b16 %v5119
        %v5160 = vunpack.c.l.b16 %v5120
        %v5161 = vunpack.c.l.b16 %v5121
        %v5162 = vunpack.c.l.b16 %v5122
        %v5163 = vunpack.c.l.b16 %v5123
        %v5164 = vunpack.c.l.b16 %v5124
        %v5165 = vunpack.c.l.b16 %v5125
        %v5166 = vunpack.c.l.b16 %v5126
        %v5167 = vunpack.c.l.b16 %v5127
        %v5168 = vunpack.c.l.b16 %v5128
        %v5169 = vunpack.c.l.b16 %v5129
        %v5170 = vunpack.c.l.b16 %v5130
        %v5171 = vunpack.c.l.b16 %v5131
        %v5172 = vunpack.c.l.b16 %v5132
        %v5173 = vunpack.c.l.b16 %v5133
        %v5174 = vunpack.c.l.b16 %v5134
        %v5175 = vunpack.c.l.b16 %v5135
        %v5176 = vunpack.c.l.b16 %v5136
        %v5177 = vunpack.c.l.b16 %v5137
        %v5178 = vunpack.c.l.b16 %v5138
        %v5179 = vpack.c.b16 %v5160, %v5159
        %v5180 = vpack.c.b16 %v5162, %v5161
        %v5181 = vpack.c.b16 %v5164, %v5163
        %v5182 = vpack.c.b16 %v5166, %v5165
        %v5183 = vpack.c.b16 %v5168, %v5167
        %v5184 = vpack.c.b16 %v5170, %v5169
        %v5185 = vpack.c.b16 %v5172, %v5171
        %v5186 = vpack.c.b16 %v5174, %v5173
        %v5187 = vpack.c.b16 %v5176, %v5175
        %v5188 = vpack.c.b16 %v5178, %v5177
        %vm5199 = vcmask 261120
        %v5201 = vsel %vm5199, %v5114, 0
        %v5204 = vsel %vm5199, %v5116, 0
        %v5207 = vsel %vm5199, %v5118, 0
        %5209 = vmatprep.subr.bf16.mxu0 0
        %5210 = vmatpush1.bf16.msra.mxu0 %v5179
        %5211 = vmatprep.subr.bf16.mxu0 0
        %5212 = vmatpush1.bf16.msra.mxu0 %v5180
        %5213 = vmatprep.subr.bf16.mxu0 0
        %5214 = vmatpush1.bf16.msra.mxu0 %v5181
        %5215 = vmatprep.subr.bf16.mxu0 0
        %5216 = vmatpush1.bf16.msra.mxu0 %v5182
        %5217 = vmatprep.subr.bf16.mxu0 0
        %5218 = vmatpush1.bf16.msra.mxu0 %v5183
        %5219 = vmatprep.subr.bf16.mxu0 0
        %5220 = vmatpush1.bf16.msra.mxu0 %v5184
        %5221 = vmatprep.subr.bf16.mxu0 0
        %5222 = vmatpush1.bf16.msra.mxu0 %v5185
        %5223 = vmatprep.subr.bf16.mxu0 0
        %5224 = vmatpush1.bf16.msra.mxu0 %v5186
        %5225 = vmatprep.subr.bf16.mxu0 0
        %5226 = vmatpush1.bf16.msra.mxu0 %v5187
        %5227 = vmatprep.subr.bf16.mxu0 0
        %5228 = vmatpush1.bf16.msra.mxu0 %v5188
        %5229 = vmatprep.subr.bf16.mxu0 0
        %5230 = vmatpush1.bf16.msra.mxu0 0
        %5231 = vmatprep.subr.bf16.mxu0 0
        %5232 = vmatpush1.bf16.msra.mxu0 0
        %5233 = vmatprep.subr.bf16.mxu0 0
        %5234 = vmatpush1.bf16.msra.mxu0 0
        %5235 = vmatprep.subr.bf16.mxu0 0
        %5236 = vmatpush1.bf16.msra.mxu0 0
        %5237 = vmatprep.subr.bf16.mxu0 0
        %5238 = vmatpush1.bf16.msra.mxu0 0
        %5239 = vmatprep.subr.bf16.mxu0 0
        %5240 = vmatpush1.bf16.msra.mxu0 0
        %5241 = vmatprep.mubr.bf16.mxu0 %v5201
        %5242 = vmatmul.mubr.bf16.gmra.mrb[0].mxu0 %v5113
        %v5243 = vpop.f32.mrb[0].mxu0
        %v5244 = vadd.f32 0.0, %v5243
        %v5245 = vpop.f32.mrb[0].mxu0
        %v5246 = vpop.f32.mrb[0].mxu0
        %v5247 = vadd.f32 0.0, %v5246
        %v5248 = vpop.f32.mrb[0].mxu0
        %5249 = vmatprep.mubr.bf16.mxu0 %v5204
        %5250 = vmatmul.mubr.bf16.gmra.mrb[0].mxu0 %v5115
        %v5251 = vpop.f32.mrb[0].mxu0
        %v5252 = vadd.f32 0.0, %v5251
        %v5253 = vpop.f32.mrb[0].mxu0
        %v5254 = vpop.f32.mrb[0].mxu0
        %v5255 = vadd.f32 0.0, %v5254
        %v5256 = vpop.f32.mrb[0].mxu0
        %5257 = vmatprep.mubr.bf16.mxu0 %v5207
        %5258 = vmatmul.mubr.bf16.gmra.mrb[0].mxu0 %v5117
        %v5259 = vpop.f32.mrb[0].mxu0
        %v5260 = vadd.f32 0.0, %v5259
        %v5261 = vpop.f32.mrb[0].mxu0
        %v5262 = vpop.f32.mrb[0].mxu0
        %v5263 = vpop.f32.mrb[0].mxu0
        %5264 = vdwg.mxu0
        %s5265 = scalar_lea.vmem %s8, 80
        %v5266 = vld [vmem:[%s5265] sm:$0xf]
        %v5267 = vld [vmem:[%s5265 + $0x4] sm:$0xf]
        %v5268 = vld [vmem:[%s5265 + $0x8] sm:$0xf]
        %v5269 = vld [vmem:[%s5265 + $0xc] sm:$0xf]
        %v5270 = vld [vmem:[%s5265 + $0x10] sm:$0xf]
        %v5271 = vld [vmem:[%s5265 + $0x14] sm:$0xf]
        %v5272 = vld [vmem:[%s5265 + $0x18] sm:$0xf]
        %v5273 = vld [vmem:[%s5265 + $0x1c] sm:$0xf]
        %v5274 = vld [vmem:[%s5265 + $0x20] sm:$0xf]
        %v5275 = vld [vmem:[%s5265 + $0x24] sm:$0xf]
        %v5276 = vld [vmem:[%s5265 + $0x28] sm:$0xf]
        %v5277 = vld [vmem:[%s5265 + $0x2c] sm:$0xf]
        %v5278 = vld [vmem:[%s5265 + $0x30] sm:$0xf]
        %v5279 = vld [vmem:[%s5265 + $0x34] sm:$0xf]
        %v5280 = vld [vmem:[%s5265 + $0x38] sm:$0xf]
        %v5281 = vld [vmem:[%s5265 + $0x3c] sm:$0xf]
        %v5282 = vld [vmem:[%s5265 + $0x40] sm:$0xf]
        %v5283 = vld [vmem:[%s5265 + $0x44] sm:$0xf]
        %v5284 = vld [vmem:[%s5265 + $0x48] sm:$0xf]
        %v5285 = vld [vmem:[%s5265 + $0x4c] sm:$0xf]
        %v5306 = vunpack.c.l.b16 %v5266
        %v5307 = vunpack.c.l.b16 %v5267
        %v5308 = vunpack.c.l.b16 %v5268
        %v5309 = vunpack.c.l.b16 %v5269
        %v5310 = vunpack.c.l.b16 %v5270
        %v5311 = vunpack.c.l.b16 %v5271
        %v5312 = vunpack.c.l.b16 %v5272
        %v5313 = vunpack.c.l.b16 %v5273
        %v5314 = vunpack.c.l.b16 %v5274
        %v5315 = vunpack.c.l.b16 %v5275
        %v5316 = vunpack.c.l.b16 %v5276
        %v5317 = vunpack.c.l.b16 %v5277
        %v5318 = vunpack.c.l.b16 %v5278
        %v5319 = vunpack.c.l.b16 %v5279
        %v5320 = vunpack.c.l.b16 %v5280
        %v5321 = vunpack.c.l.b16 %v5281
        %v5322 = vunpack.c.l.b16 %v5282
        %v5323 = vunpack.c.l.b16 %v5283
        %v5324 = vunpack.c.l.b16 %v5284
        %v5325 = vunpack.c.l.b16 %v5285
        %v5326 = vpack.c.b16 %v5307, %v5306
        %v5327 = vpack.c.b16 %v5309, %v5308
        %v5328 = vpack.c.b16 %v5311, %v5310
        %v5329 = vpack.c.b16 %v5313, %v5312
        %v5330 = vpack.c.b16 %v5315, %v5314
        %v5331 = vpack.c.b16 %v5317, %v5316
        %v5332 = vpack.c.b16 %v5319, %v5318
        %v5333 = vpack.c.b16 %v5321, %v5320
        %v5334 = vpack.c.b16 %v5323, %v5322
        %v5335 = vpack.c.b16 %v5325, %v5324
        %5346 = vmatprep.subr.bf16.mxu0 0
        %5347 = vmatpush1.bf16.msra.mxu0 %v5326
        %5348 = vmatprep.subr.bf16.mxu0 0
        %5349 = vmatpush1.bf16.msra.mxu0 %v5327
        %5350 = vmatprep.subr.bf16.mxu0 0
        %5351 = vmatpush1.bf16.msra.mxu0 %v5328
        %5352 = vmatprep.subr.bf16.mxu0 0
        %5353 = vmatpush1.bf16.msra.mxu0 %v5329
        %5354 = vmatprep.subr.bf16.mxu0 0
        %5355 = vmatpush1.bf16.msra.mxu0 %v5330
        %5356 = vmatprep.subr.bf16.mxu0 0
        %5357 = vmatpush1.bf16.msra.mxu0 %v5331
        %5358 = vmatprep.subr.bf16.mxu0 0
        %5359 = vmatpush1.bf16.msra.mxu0 %v5332
        %5360 = vmatprep.subr.bf16.mxu0 0
        %5361 = vmatpush1.bf16.msra.mxu0 %v5333
        %5362 = vmatprep.subr.bf16.mxu0 0
        %5363 = vmatpush1.bf16.msra.mxu0 %v5334
        %5364 = vmatprep.subr.bf16.mxu0 0
        %5365 = vmatpush1.bf16.msra.mxu0 %v5335
        %5366 = vmatprep.subr.bf16.mxu0 0
        %5367 = vmatpush1.bf16.msra.mxu0 0
        %5368 = vmatprep.subr.bf16.mxu0 0
        %5369 = vmatpush1.bf16.msra.mxu0 0
        %5370 = vmatprep.subr.bf16.mxu0 0
        %5371 = vmatpush1.bf16.msra.mxu0 0
        %5372 = vmatprep.subr.bf16.mxu0 0
        %5373 = vmatpush1.bf16.msra.mxu0 0
        %5374 = vmatprep.subr.bf16.mxu0 0
        %5375 = vmatpush1.bf16.msra.mxu0 0
        %5376 = vmatprep.subr.bf16.mxu0 0
        %5377 = vmatpush1.bf16.msra.mxu0 0
        %5378 = vmatprep.mubr.bf16.mxu0 %v5201
        %5379 = vmatmul.mubr.bf16.gmra.mrb[0].mxu0 %v5113
        %v5380 = vpop.f32.mrb[0].mxu0
        %v5381 = vadd.f32 0.0, %v5380
        %v5382 = vpop.f32.mrb[0].mxu0
        %v5383 = vpop.f32.mrb[0].mxu0
        %v5384 = vadd.f32 0.0, %v5383
        %v5385 = vpop.f32.mrb[0].mxu0
        %5386 = vmatprep.mubr.bf16.mxu0 %v5204
        %5387 = vmatmul.mubr.bf16.gmra.mrb[0].mxu0 %v5115
        %v5388 = vpop.f32.mrb[0].mxu0
        %v5389 = vadd.f32 0.0, %v5388
        %v5390 = vpop.f32.mrb[0].mxu0
        %v5391 = vpop.f32.mrb[0].mxu0
        %v5392 = vadd.f32 0.0, %v5391
        %v5393 = vpop.f32.mrb[0].mxu0
        %5394 = vmatprep.mubr.bf16.mxu0 %v5207
        %5395 = vmatmul.mubr.bf16.gmra.mrb[0].mxu0 %v5117
        %v5396 = vpop.f32.mrb[0].mxu0
        %v5397 = vadd.f32 0.0, %v5396
        %v5398 = vpop.f32.mrb[0].mxu0
        %v5399 = vpop.f32.mrb[0].mxu0
        %v5400 = vpop.f32.mrb[0].mxu0
        %5401 = vdwg.mxu0
        %v5402 = vmax.f32 %v5244, %v5381
        %v5403 = vmax.f32 %v5247, %v5384
        %v5404 = vmax.f32 %v5252, %v5389
        %v5405 = vmax.f32 %v5255, %v5392
        %v5406 = vmax.f32 %v5260, %v5397
        %v5407 = vpack.c.bf16 %v5403, %v5402
        %v5408 = vpack.c.bf16 %v5405, %v5404
        %v5409 = vpack.c.bf16 %v5406, %v5406
        %v5410 = vld [vmem:[%s9] sm:$0xf]
        %v5412 = vsel %vm3346, %v5410, 0
        %v5415 = vsel %vm3368, %v5409, 0
        %5417 = vmatprep.subr.bf16.mxu0 0
        %5418 = vmatpush1.bf16.msra.mxu0 %v5407
        %5419 = vmatprep.subr.bf16.mxu0 0
        %5420 = vmatpush1.bf16.msra.mxu0 %v5408
        %5421 = vmatprep.subr.bf16.mxu0 0
        %5422 = vmatpush1.bf16.msra.mxu0 %v5415
        %5423 = vmatprep.subr.bf16.mxu0 0
        %5424 = vmatpush1.bf16.msra.mxu0 0
        %5425 = vmatprep.subr.bf16.mxu0 0
        %5426 = vmatpush1.bf16.msra.mxu0 0
        %5427 = vmatprep.subr.bf16.mxu0 0
        %5428 = vmatpush1.bf16.msra.mxu0 0
        %5429 = vmatprep.subr.bf16.mxu0 0
        %5430 = vmatpush1.bf16.msra.mxu0 0
        %5431 = vmatprep.subr.bf16.mxu0 0
        %5432 = vmatpush1.bf16.msra.mxu0 0
        %5433 = vmatprep.subr.bf16.mxu0 0
        %5434 = vmatpush1.bf16.msra.mxu0 0
        %5435 = vmatprep.subr.bf16.mxu0 0
        %5436 = vmatpush1.bf16.msra.mxu0 0
        %5437 = vmatprep.subr.bf16.mxu0 0
        %5438 = vmatpush1.bf16.msra.mxu0 0
        %5439 = vmatprep.subr.bf16.mxu0 0
        %5440 = vmatpush1.bf16.msra.mxu0 0
        %5441 = vmatprep.subr.bf16.mxu0 0
        %5442 = vmatpush1.bf16.msra.mxu0 0
        %5443 = vmatprep.subr.bf16.mxu0 0
        %5444 = vmatpush1.bf16.msra.mxu0 0
        %5445 = vmatprep.subr.bf16.mxu0 0
        %5446 = vmatpush1.bf16.msra.mxu0 0
        %5447 = vmatprep.subr.bf16.mxu0 0
        %5448 = vmatpush1.bf16.msra.mxu0 0
        %5449 = vmatprep.mubr.bf16.mxu0 0
        %5450 = vmatmul.mubr.bf16.gmra.mrb[0].mxu0 %v5412
        %v5451 = vpop.f32.mrb[0].mxu0
        %v5452 = vadd.f32 0.0, %v5451
        %v5453 = vpop.f32.mrb[0].mxu0
        %v5454 = vpop.f32.mrb[0].mxu0
        %v5455 = vpop.f32.mrb[0].mxu0
        %5456 = vdwg.mxu0
        %v5457 = vpack.c.bf16 %v5452, %v5452
        %v5458 = vld [vmem:[%s10] sm:$0xf]
        %v5459 = vld [vmem:[%s10 + $0x4] sm:$0xf]
        %v5460 = vld [vmem:[%s10 + $0x8] sm:$0xf]
        %v5461 = vld [vmem:[%s10 + $0xc] sm:$0xf]
        %v5462 = vld [vmem:[%s10 + $0x10] sm:$0xf]
        %v5463 = vld [vmem:[%s10 + $0x14] sm:$0xf]
        %v5464 = vld [vmem:[%s10 + $0x18] sm:$0xf]
        %v5465 = vld [vmem:[%s10 + $0x1c] sm:$0xf]
        %v5466 = vld [vmem:[%s10 + $0x20] sm:$0xf]
        %v5467 = vld [vmem:[%s10 + $0x24] sm:$0xf]
        %s5468 = scalar_lea.vmem %s9, 4
        %v5469 = vld [vmem:[%s5468] sm:$0xf]
        %v5471 = vsel %vm3346, %v5469, 0
        %5473 = vmatprep.subr.bf16.mxu0 0
        %5474 = vmatpush1.bf16.msra.mxu0 %v5407
        %5475 = vmatprep.subr.bf16.mxu0 0
        %5476 = vmatpush1.bf16.msra.mxu0 %v5408
        %5477 = vmatprep.subr.bf16.mxu0 0
        %5478 = vmatpush1.bf16.msra.mxu0 %v5415
        %5479 = vmatprep.subr.bf16.mxu0 0
        %5480 = vmatpush1.bf16.msra.mxu0 0
        %5481 = vmatprep.subr.bf16.mxu0 0
        %5482 = vmatpush1.bf16.msra.mxu0 0
        %5483 = vmatprep.subr.bf16.mxu0 0
        %5484 = vmatpush1.bf16.msra.mxu0 0
        %5485 = vmatprep.subr.bf16.mxu0 0
        %5486 = vmatpush1.bf16.msra.mxu0 0
        %5487 = vmatprep.subr.bf16.mxu0 0
        %5488 = vmatpush1.bf16.msra.mxu0 0
        %5489 = vmatprep.subr.bf16.mxu0 0
        %5490 = vmatpush1.bf16.msra.mxu0 0
        %5491 = vmatprep.subr.bf16.mxu0 0
        %5492 = vmatpush1.bf16.msra.mxu0 0
        %5493 = vmatprep.subr.bf16.mxu0 0
        %5494 = vmatpush1.bf16.msra.mxu0 0
        %5495 = vmatprep.subr.bf16.mxu0 0
        %5496 = vmatpush1.bf16.msra.mxu0 0
        %5497 = vmatprep.subr.bf16.mxu0 0
        %5498 = vmatpush1.bf16.msra.mxu0 0
        %5499 = vmatprep.subr.bf16.mxu0 0
        %5500 = vmatpush1.bf16.msra.mxu0 0
        %5501 = vmatprep.subr.bf16.mxu0 0
        %5502 = vmatpush1.bf16.msra.mxu0 0
        %5503 = vmatprep.subr.bf16.mxu0 0
        %5504 = vmatpush1.bf16.msra.mxu0 0
        %5505 = vmatprep.mubr.bf16.mxu0 0
        %5506 = vmatmul.mubr.bf16.gmra.mrb[0].mxu0 %v5471
        %v5507 = vpop.f32.mrb[0].mxu0
        %v5508 = vadd.f32 0.0, %v5507
        %v5509 = vpop.f32.mrb[0].mxu0
        %v5510 = vpop.f32.mrb[0].mxu0
        %v5511 = vpop.f32.mrb[0].mxu0
        %5512 = vdwg.mxu0
        %v5513 = vpack.c.bf16 %v5508, %v5508
        %s5514 = scalar_lea.vmem %s10, 40
        %v5515 = vld [vmem:[%s5514] sm:$0xf]
        %v5516 = vld [vmem:[%s5514 + $0x4] sm:$0xf]
        %v5517 = vld [vmem:[%s5514 + $0x8] sm:$0xf]
        %v5518 = vld [vmem:[%s5514 + $0xc] sm:$0xf]
        %v5519 = vld [vmem:[%s5514 + $0x10] sm:$0xf]
        %v5520 = vld [vmem:[%s5514 + $0x14] sm:$0xf]
        %v5521 = vld [vmem:[%s5514 + $0x18] sm:$0xf]
        %v5522 = vld [vmem:[%s5514 + $0x1c] sm:$0xf]
        %v5523 = vld [vmem:[%s5514 + $0x20] sm:$0xf]
        %v5524 = vld [vmem:[%s5514 + $0x24] sm:$0xf]
        %v5535 = vunpack.c.l.b16 %v5515
        %v5536 = vunpack.c.l.b16 %v5516
        %v5537 = vunpack.c.l.b16 %v5517
        %v5538 = vunpack.c.l.b16 %v5518
        %v5539 = vunpack.c.l.b16 %v5519
        %v5540 = vunpack.c.l.b16 %v5520
        %v5541 = vunpack.c.l.b16 %v5521
        %v5542 = vunpack.c.l.b16 %v5522
        %v5543 = vunpack.c.l.b16 %v5523
        %v5544 = vunpack.c.l.b16 %v5524
        %v5545 = vpack.c.b16 %v5536, %v5535
        %v5546 = vpack.c.b16 %v5538, %v5537
        %v5547 = vpack.c.b16 %v5540, %v5539
        %v5548 = vpack.c.b16 %v5542, %v5541
        %v5549 = vpack.c.b16 %v5544, %v5543
        %vm5555 = vcmask 654336
        %v5557 = vsel %vm5555, %v5513, 0
        %5559 = vmatprep.subr.bf16.mxu0 0
        %5560 = vmatpush1.bf16.msra.mxu0 %v5545
        %5561 = vmatprep.subr.bf16.mxu0 0
        %5562 = vmatpush1.bf16.msra.mxu0 %v5546
        %5563 = vmatprep.subr.bf16.mxu0 0
        %5564 = vmatpush1.bf16.msra.mxu0 %v5547
        %5565 = vmatprep.subr.bf16.mxu0 0
        %5566 = vmatpush1.bf16.msra.mxu0 %v5548
        %5567 = vmatprep.subr.bf16.mxu0 0
        %5568 = vmatpush1.bf16.msra.mxu0 %v5549
        %5569 = vmatprep.subr.bf16.mxu0 0
        %5570 = vmatpush1.bf16.msra.mxu0 0
        %5571 = vmatprep.subr.bf16.mxu0 0
        %5572 = vmatpush1.bf16.msra.mxu0 0
        %5573 = vmatprep.subr.bf16.mxu0 0
        %5574 = vmatpush1.bf16.msra.mxu0 0
        %5575 = vmatprep.subr.bf16.mxu0 0
        %5576 = vmatpush1.bf16.msra.mxu0 0
        %5577 = vmatprep.subr.bf16.mxu0 0
        %5578 = vmatpush1.bf16.msra.mxu0 0
        %5579 = vmatprep.subr.bf16.mxu0 0
        %5580 = vmatpush1.bf16.msra.mxu0 0
        %5581 = vmatprep.subr.bf16.mxu0 0
        %5582 = vmatpush1.bf16.msra.mxu0 0
        %5583 = vmatprep.subr.bf16.mxu0 0
        %5584 = vmatpush1.bf16.msra.mxu0 0
        %5585 = vmatprep.subr.bf16.mxu0 0
        %5586 = vmatpush1.bf16.msra.mxu0 0
        %5587 = vmatprep.subr.bf16.mxu0 0
        %5588 = vmatpush1.bf16.msra.mxu0 0
        %5589 = vmatprep.subr.bf16.mxu0 0
        %5590 = vmatpush1.bf16.msra.mxu0 0
        %5591 = vmatprep.mubr.bf16.mxu0 0
        %5592 = vmatmul.mubr.bf16.gmra.mrb[0].mxu0 %v5557
        %v5593 = vpop.f32.mrb[0].mxu0
        %v5594 = vadd.f32 0.0, %v5593
        %v5595 = vpop.f32.mrb[0].mxu0
        %v5596 = vpop.f32.mrb[0].mxu0
        %v5597 = vpop.f32.mrb[0].mxu0
        %5598 = vdwg.mxu0
        %v5609 = vunpack.c.l.b16 %v5458
        %v5610 = vunpack.c.l.b16 %v5459
        %v5611 = vunpack.c.l.b16 %v5460
        %v5612 = vunpack.c.l.b16 %v5461
        %v5613 = vunpack.c.l.b16 %v5462
        %v5614 = vunpack.c.l.b16 %v5463
        %v5615 = vunpack.c.l.b16 %v5464
        %v5616 = vunpack.c.l.b16 %v5465
        %v5617 = vunpack.c.l.b16 %v5466
        %v5618 = vunpack.c.l.b16 %v5467
        %v5619 = vpack.c.b16 %v5610, %v5609
        %v5620 = vpack.c.b16 %v5612, %v5611
        %v5621 = vpack.c.b16 %v5614, %v5613
        %v5622 = vpack.c.b16 %v5616, %v5615
        %v5623 = vpack.c.b16 %v5618, %v5617
        %v5630 = vsel %vm5555, %v5457, 0
        %5632 = vmatprep.subr.bf16.mxu0 0
        %5633 = vmatpush1.bf16.msra.mxu0 %v5619
        %5634 = vmatprep.subr.bf16.mxu0 0
        %5635 = vmatpush1.bf16.msra.mxu0 %v5620
        %5636 = vmatprep.subr.bf16.mxu0 0
        %5637 = vmatpush1.bf16.msra.mxu0 %v5621
        %5638 = vmatprep.subr.bf16.mxu0 0
        %5639 = vmatpush1.bf16.msra.mxu0 %v5622
        %5640 = vmatprep.subr.bf16.mxu0 0
        %5641 = vmatpush1.bf16.msra.mxu0 %v5623
        %5642 = vmatprep.subr.bf16.mxu0 0
        %5643 = vmatpush1.bf16.msra.mxu0 0
        %5644 = vmatprep.subr.bf16.mxu0 0
        %5645 = vmatpush1.bf16.msra.mxu0 0
        %5646 = vmatprep.subr.bf16.mxu0 0
        %5647 = vmatpush1.bf16.msra.mxu0 0
        %5648 = vmatprep.subr.bf16.mxu0 0
        %5649 = vmatpush1.bf16.msra.mxu0 0
        %5650 = vmatprep.subr.bf16.mxu0 0
        %5651 = vmatpush1.bf16.msra.mxu0 0
        %5652 = vmatprep.subr.bf16.mxu0 0
        %5653 = vmatpush1.bf16.msra.mxu0 0
        %5654 = vmatprep.subr.bf16.mxu0 0
        %5655 = vmatpush1.bf16.msra.mxu0 0
        %5656 = vmatprep.subr.bf16.mxu0 0
        %5657 = vmatpush1.bf16.msra.mxu0 0
        %5658 = vmatprep.subr.bf16.mxu0 0
        %5659 = vmatpush1.bf16.msra.mxu0 0
        %5660 = vmatprep.subr.bf16.mxu0 0
        %5661 = vmatpush1.bf16.msra.mxu0 0
        %5662 = vmatprep.subr.bf16.mxu0 0
        %5663 = vmatpush1.bf16.msra.mxu0 0
        %5664 = vmatprep.mubr.bf16.mxu0 0
        %5665 = vmatmul.mubr.bf16.gmra.mrb[0].mxu0 %v5630
        %v5666 = vpop.f32.mrb[0].mxu0
        %v5667 = vadd.f32 %v5594, %v5666
        %v5668 = vpop.f32.mrb[0].mxu0
        %v5669 = vpop.f32.mrb[0].mxu0
        %v5670 = vpop.f32.mrb[0].mxu0
        %5671 = vdwg.mxu0
        %s5672 = scalar_lea.vmem %s9, 8
        %v5673 = vld [vmem:[%s5672] sm:$0xf]
        %v5675 = vsel %vm3346, %v5673, 0
        %5677 = vmatprep.subr.bf16.mxu0 0
        %5678 = vmatpush1.bf16.msra.mxu0 %v5407
        %5679 = vmatprep.subr.bf16.mxu0 0
        %5680 = vmatpush1.bf16.msra.mxu0 %v5408
        %5681 = vmatprep.subr.bf16.mxu0 0
        %5682 = vmatpush1.bf16.msra.mxu0 %v5415
        %5683 = vmatprep.subr.bf16.mxu0 0
        %5684 = vmatpush1.bf16.msra.mxu0 0
        %5685 = vmatprep.subr.bf16.mxu0 0
        %5686 = vmatpush1.bf16.msra.mxu0 0
        %5687 = vmatprep.subr.bf16.mxu0 0
        %5688 = vmatpush1.bf16.msra.mxu0 0
        %5689 = vmatprep.subr.bf16.mxu0 0
        %5690 = vmatpush1.bf16.msra.mxu0 0
        %5691 = vmatprep.subr.bf16.mxu0 0
        %5692 = vmatpush1.bf16.msra.mxu0 0
        %5693 = vmatprep.subr.bf16.mxu0 0
        %5694 = vmatpush1.bf16.msra.mxu0 0
        %5695 = vmatprep.subr.bf16.mxu0 0
        %5696 = vmatpush1.bf16.msra.mxu0 0
        %5697 = vmatprep.subr.bf16.mxu0 0
        %5698 = vmatpush1.bf16.msra.mxu0 0
        %5699 = vmatprep.subr.bf16.mxu0 0
        %5700 = vmatpush1.bf16.msra.mxu0 0
        %5701 = vmatprep.subr.bf16.mxu0 0
        %5702 = vmatpush1.bf16.msra.mxu0 0
        %5703 = vmatprep.subr.bf16.mxu0 0
        %5704 = vmatpush1.bf16.msra.mxu0 0
        %5705 = vmatprep.subr.bf16.mxu0 0
        %5706 = vmatpush1.bf16.msra.mxu0 0
        %5707 = vmatprep.subr.bf16.mxu0 0
        %5708 = vmatpush1.bf16.msra.mxu0 0
        %5709 = vmatprep.mubr.bf16.mxu0 0
        %5710 = vmatmul.mubr.bf16.gmra.mrb[0].mxu0 %v5675
        %v5711 = vpop.f32.mrb[0].mxu0
        %v5712 = vadd.f32 0.0, %v5711
        %v5713 = vpop.f32.mrb[0].mxu0
        %v5714 = vpop.f32.mrb[0].mxu0
        %v5715 = vpop.f32.mrb[0].mxu0
        %5716 = vdwg.mxu0
        %v5717 = vpack.c.bf16 %v5712, %v5712
        %s5718 = scalar_lea.vmem %s10, 80
        %v5719 = vld [vmem:[%s5718] sm:$0xf]
        %v5720 = vld [vmem:[%s5718 + $0x4] sm:$0xf]
        %v5721 = vld [vmem:[%s5718 + $0x8] sm:$0xf]
        %v5722 = vld [vmem:[%s5718 + $0xc] sm:$0xf]
        %v5723 = vld [vmem:[%s5718 + $0x10] sm:$0xf]
        %v5724 = vld [vmem:[%s5718 + $0x14] sm:$0xf]
        %v5725 = vld [vmem:[%s5718 + $0x18] sm:$0xf]
        %v5726 = vld [vmem:[%s5718 + $0x1c] sm:$0xf]
        %v5727 = vld [vmem:[%s5718 + $0x20] sm:$0xf]
        %v5728 = vld [vmem:[%s5718 + $0x24] sm:$0xf]
        %v5739 = vunpack.c.l.b16 %v5719
        %v5740 = vunpack.c.l.b16 %v5720
        %v5741 = vunpack.c.l.b16 %v5721
        %v5742 = vunpack.c.l.b16 %v5722
        %v5743 = vunpack.c.l.b16 %v5723
        %v5744 = vunpack.c.l.b16 %v5724
        %v5745 = vunpack.c.l.b16 %v5725
        %v5746 = vunpack.c.l.b16 %v5726
        %v5747 = vunpack.c.l.b16 %v5727
        %v5748 = vunpack.c.l.b16 %v5728
        %v5749 = vpack.c.b16 %v5740, %v5739
        %v5750 = vpack.c.b16 %v5742, %v5741
        %v5751 = vpack.c.b16 %v5744, %v5743
        %v5752 = vpack.c.b16 %v5746, %v5745
        %v5753 = vpack.c.b16 %v5748, %v5747
        %v5760 = vsel %vm5555, %v5717, 0
        %5762 = vmatprep.subr.bf16.mxu0 0
        %5763 = vmatpush1.bf16.msra.mxu0 %v5749
        %5764 = vmatprep.subr.bf16.mxu0 0
        %5765 = vmatpush1.bf16.msra.mxu0 %v5750
        %5766 = vmatprep.subr.bf16.mxu0 0
        %5767 = vmatpush1.bf16.msra.mxu0 %v5751
        %5768 = vmatprep.subr.bf16.mxu0 0
        %5769 = vmatpush1.bf16.msra.mxu0 %v5752
        %5770 = vmatprep.subr.bf16.mxu0 0
        %5771 = vmatpush1.bf16.msra.mxu0 %v5753
        %5772 = vmatprep.subr.bf16.mxu0 0
        %5773 = vmatpush1.bf16.msra.mxu0 0
        %5774 = vmatprep.subr.bf16.mxu0 0
        %5775 = vmatpush1.bf16.msra.mxu0 0
        %5776 = vmatprep.subr.bf16.mxu0 0
        %5777 = vmatpush1.bf16.msra.mxu0 0
        %5778 = vmatprep.subr.bf16.mxu0 0
        %5779 = vmatpush1.bf16.msra.mxu0 0
        %5780 = vmatprep.subr.bf16.mxu0 0
        %5781 = vmatpush1.bf16.msra.mxu0 0
        %5782 = vmatprep.subr.bf16.mxu0 0
        %5783 = vmatpush1.bf16.msra.mxu0 0
        %5784 = vmatprep.subr.bf16.mxu0 0
        %5785 = vmatpush1.bf16.msra.mxu0 0
        %5786 = vmatprep.subr.bf16.mxu0 0
        %5787 = vmatpush1.bf16.msra.mxu0 0
        %5788 = vmatprep.subr.bf16.mxu0 0
        %5789 = vmatpush1.bf16.msra.mxu0 0
        %5790 = vmatprep.subr.bf16.mxu0 0
        %5791 = vmatpush1.bf16.msra.mxu0 0
        %5792 = vmatprep.subr.bf16.mxu0 0
        %5793 = vmatpush1.bf16.msra.mxu0 0
        %5794 = vmatprep.mubr.bf16.mxu0 0
        %5795 = vmatmul.mubr.bf16.gmra.mrb[0].mxu0 %v5760
        %v5796 = vpop.f32.mrb[0].mxu0
        %v5797 = vadd.f32 0.0, %v5796
        %v5798 = vpop.f32.mrb[0].mxu0
        %v5799 = vpop.f32.mrb[0].mxu0
        %v5800 = vpop.f32.mrb[0].mxu0
        %5801 = vdwg.mxu0
        %v5802 = vadd.f32 %v5667, %v5797
        %s5803 = scalar_lea.vmem %s9, 12
        %v5804 = vld [vmem:[%s5803] sm:$0xf]
        %v5806 = vsel %vm3346, %v5804, 0
        %5808 = vmatprep.subr.bf16.mxu0 0
        %5809 = vmatpush1.bf16.msra.mxu0 %v5407
        %5810 = vmatprep.subr.bf16.mxu0 0
        %5811 = vmatpush1.bf16.msra.mxu0 %v5408
        %5812 = vmatprep.subr.bf16.mxu0 0
        %5813 = vmatpush1.bf16.msra.mxu0 %v5415
        %5814 = vmatprep.subr.bf16.mxu0 0
        %5815 = vmatpush1.bf16.msra.mxu0 0
        %5816 = vmatprep.subr.bf16.mxu0 0
        %5817 = vmatpush1.bf16.msra.mxu0 0
        %5818 = vmatprep.subr.bf16.mxu0 0
        %5819 = vmatpush1.bf16.msra.mxu0 0
        %5820 = vmatprep.subr.bf16.mxu0 0
        %5821 = vmatpush1.bf16.msra.mxu0 0
        %5822 = vmatprep.subr.bf16.mxu0 0
        %5823 = vmatpush1.bf16.msra.mxu0 0
        %5824 = vmatprep.subr.bf16.mxu0 0
        %5825 = vmatpush1.bf16.msra.mxu0 0
        %5826 = vmatprep.subr.bf16.mxu0 0
        %5827 = vmatpush1.bf16.msra.mxu0 0
        %5828 = vmatprep.subr.bf16.mxu0 0
        %5829 = vmatpush1.bf16.msra.mxu0 0
        %5830 = vmatprep.subr.bf16.mxu0 0
        %5831 = vmatpush1.bf16.msra.mxu0 0
        %5832 = vmatprep.subr.bf16.mxu0 0
        %5833 = vmatpush1.bf16.msra.mxu0 0
        %5834 = vmatprep.subr.bf16.mxu0 0
        %5835 = vmatpush1.bf16.msra.mxu0 0
        %5836 = vmatprep.subr.bf16.mxu0 0
        %5837 = vmatpush1.bf16.msra.mxu0 0
        %5838 = vmatprep.subr.bf16.mxu0 0
        %5839 = vmatpush1.bf16.msra.mxu0 0
        %5840 = vmatprep.mubr.bf16.mxu0 0
        %5841 = vmatmul.mubr.bf16.gmra.mrb[0].mxu0 %v5806
        %v5842 = vpop.f32.mrb[0].mxu0
        %v5843 = vadd.f32 0.0, %v5842
        %v5844 = vpop.f32.mrb[0].mxu0
        %v5845 = vpop.f32.mrb[0].mxu0
        %v5846 = vpop.f32.mrb[0].mxu0
        %5847 = vdwg.mxu0
        %v5848 = vpack.c.bf16 %v5843, %v5843
        %s5849 = scalar_lea.vmem %s10, 120
        %v5850 = vld [vmem:[%s5849] sm:$0xf]
        %v5851 = vld [vmem:[%s5849 + $0x4] sm:$0xf]
        %v5852 = vld [vmem:[%s5849 + $0x8] sm:$0xf]
        %v5853 = vld [vmem:[%s5849 + $0xc] sm:$0xf]
        %v5854 = vld [vmem:[%s5849 + $0x10] sm:$0xf]
        %v5855 = vld [vmem:[%s5849 + $0x14] sm:$0xf]
        %v5856 = vld [vmem:[%s5849 + $0x18] sm:$0xf]
        %v5857 = vld [vmem:[%s5849 + $0x1c] sm:$0xf]
        %v5858 = vld [vmem:[%s5849 + $0x20] sm:$0xf]
        %v5859 = vld [vmem:[%s5849 + $0x24] sm:$0xf]
        %v5870 = vunpack.c.l.b16 %v5850
        %v5871 = vunpack.c.l.b16 %v5851
        %v5872 = vunpack.c.l.b16 %v5852
        %v5873 = vunpack.c.l.b16 %v5853
        %v5874 = vunpack.c.l.b16 %v5854
        %v5875 = vunpack.c.l.b16 %v5855
        %v5876 = vunpack.c.l.b16 %v5856
        %v5877 = vunpack.c.l.b16 %v5857
        %v5878 = vunpack.c.l.b16 %v5858
        %v5879 = vunpack.c.l.b16 %v5859
        %v5880 = vpack.c.b16 %v5871, %v5870
        %v5881 = vpack.c.b16 %v5873, %v5872
        %v5882 = vpack.c.b16 %v5875, %v5874
        %v5883 = vpack.c.b16 %v5877, %v5876
        %v5884 = vpack.c.b16 %v5879, %v5878
        %v5891 = vsel %vm5555, %v5848, 0
        %5893 = vmatprep.subr.bf16.mxu0 0
        %5894 = vmatpush1.bf16.msra.mxu0 %v5880
        %5895 = vmatprep.subr.bf16.mxu0 0
        %5896 = vmatpush1.bf16.msra.mxu0 %v5881
        %5897 = vmatprep.subr.bf16.mxu0 0
        %5898 = vmatpush1.bf16.msra.mxu0 %v5882
        %5899 = vmatprep.subr.bf16.mxu0 0
        %5900 = vmatpush1.bf16.msra.mxu0 %v5883
        %5901 = vmatprep.subr.bf16.mxu0 0
        %5902 = vmatpush1.bf16.msra.mxu0 %v5884
        %5903 = vmatprep.subr.bf16.mxu0 0
        %5904 = vmatpush1.bf16.msra.mxu0 0
        %5905 = vmatprep.subr.bf16.mxu0 0
        %5906 = vmatpush1.bf16.msra.mxu0 0
        %5907 = vmatprep.subr.bf16.mxu0 0
        %5908 = vmatpush1.bf16.msra.mxu0 0
        %5909 = vmatprep.subr.bf16.mxu0 0
        %5910 = vmatpush1.bf16.msra.mxu0 0
        %5911 = vmatprep.subr.bf16.mxu0 0
        %5912 = vmatpush1.bf16.msra.mxu0 0
        %5913 = vmatprep.subr.bf16.mxu0 0
        %5914 = vmatpush1.bf16.msra.mxu0 0
        %5915 = vmatprep.subr.bf16.mxu0 0
        %5916 = vmatpush1.bf16.msra.mxu0 0
        %5917 = vmatprep.subr.bf16.mxu0 0
        %5918 = vmatpush1.bf16.msra.mxu0 0
        %5919 = vmatprep.subr.bf16.mxu0 0
        %5920 = vmatpush1.bf16.msra.mxu0 0
        %5921 = vmatprep.subr.bf16.mxu0 0
        %5922 = vmatpush1.bf16.msra.mxu0 0
        %5923 = vmatprep.subr.bf16.mxu0 0
        %5924 = vmatpush1.bf16.msra.mxu0 0
        %5925 = vmatprep.mubr.bf16.mxu0 0
        %5926 = vmatmul.mubr.bf16.gmra.mrb[0].mxu0 %v5891
        %v5927 = vpop.f32.mrb[0].mxu0
        %v5928 = vadd.f32 0.0, %v5927
        %v5929 = vpop.f32.mrb[0].mxu0
        %v5930 = vpop.f32.mrb[0].mxu0
        %v5931 = vpop.f32.mrb[0].mxu0
        %5932 = vdwg.mxu0
        %v5933 = vadd.f32 %v5802, %v5928
        %s5934 = scalar_lea.vmem %s9, 16
        %v5935 = vld [vmem:[%s5934] sm:$0xf]
        %v5937 = vsel %vm3346, %v5935, 0
        %5939 = vmatprep.subr.bf16.mxu0 0
        %5940 = vmatpush1.bf16.msra.mxu0 %v5407
        %5941 = vmatprep.subr.bf16.mxu0 0
        %5942 = vmatpush1.bf16.msra.mxu0 %v5408
        %5943 = vmatprep.subr.bf16.mxu0 0
        %5944 = vmatpush1.bf16.msra.mxu0 %v5415
        %5945 = vmatprep.subr.bf16.mxu0 0
        %5946 = vmatpush1.bf16.msra.mxu0 0
        %5947 = vmatprep.subr.bf16.mxu0 0
        %5948 = vmatpush1.bf16.msra.mxu0 0
        %5949 = vmatprep.subr.bf16.mxu0 0
        %5950 = vmatpush1.bf16.msra.mxu0 0
        %5951 = vmatprep.subr.bf16.mxu0 0
        %5952 = vmatpush1.bf16.msra.mxu0 0
        %5953 = vmatprep.subr.bf16.mxu0 0
        %5954 = vmatpush1.bf16.msra.mxu0 0
        %5955 = vmatprep.subr.bf16.mxu0 0
        %5956 = vmatpush1.bf16.msra.mxu0 0
        %5957 = vmatprep.subr.bf16.mxu0 0
        %5958 = vmatpush1.bf16.msra.mxu0 0
        %5959 = vmatprep.subr.bf16.mxu0 0
        %5960 = vmatpush1.bf16.msra.mxu0 0
        %5961 = vmatprep.subr.bf16.mxu0 0
        %5962 = vmatpush1.bf16.msra.mxu0 0
        %5963 = vmatprep.subr.bf16.mxu0 0
        %5964 = vmatpush1.bf16.msra.mxu0 0
        %5965 = vmatprep.subr.bf16.mxu0 0
        %5966 = vmatpush1.bf16.msra.mxu0 0
        %5967 = vmatprep.subr.bf16.mxu0 0
        %5968 = vmatpush1.bf16.msra.mxu0 0
        %5969 = vmatprep.subr.bf16.mxu0 0
        %5970 = vmatpush1.bf16.msra.mxu0 0
        %5971 = vmatprep.mubr.bf16.mxu0 0
        %5972 = vmatmul.mubr.bf16.gmra.mrb[0].mxu0 %v5937
        %v5973 = vpop.f32.mrb[0].mxu0
        %v5974 = vadd.f32 0.0, %v5973
        %v5975 = vpop.f32.mrb[0].mxu0
        %v5976 = vpop.f32.mrb[0].mxu0
        %v5977 = vpop.f32.mrb[0].mxu0
        %5978 = vdwg.mxu0
        %v5979 = vpack.c.bf16 %v5974, %v5974
        %s5980 = scalar_lea.vmem %s10, 160
        %v5981 = vld [vmem:[%s5980] sm:$0xf]
        %v5982 = vld [vmem:[%s5980 + $0x4] sm:$0xf]
        %v5983 = vld [vmem:[%s5980 + $0x8] sm:$0xf]
        %v5984 = vld [vmem:[%s5980 + $0xc] sm:$0xf]
        %v5985 = vld [vmem:[%s5980 + $0x10] sm:$0xf]
        %v5986 = vld [vmem:[%s5980 + $0x14] sm:$0xf]
        %v5987 = vld [vmem:[%s5980 + $0x18] sm:$0xf]
        %v5988 = vld [vmem:[%s5980 + $0x1c] sm:$0xf]
        %v5989 = vld [vmem:[%s5980 + $0x20] sm:$0xf]
        %v5990 = vld [vmem:[%s5980 + $0x24] sm:$0xf]
        %v6001 = vunpack.c.l.b16 %v5981
        %v6002 = vunpack.c.l.b16 %v5982
        %v6003 = vunpack.c.l.b16 %v5983
        %v6004 = vunpack.c.l.b16 %v5984
        %v6005 = vunpack.c.l.b16 %v5985
        %v6006 = vunpack.c.l.b16 %v5986
        %v6007 = vunpack.c.l.b16 %v5987
        %v6008 = vunpack.c.l.b16 %v5988
        %v6009 = vunpack.c.l.b16 %v5989
        %v6010 = vunpack.c.l.b16 %v5990
        %v6011 = vpack.c.b16 %v6002, %v6001
        %v6012 = vpack.c.b16 %v6004, %v6003
        %v6013 = vpack.c.b16 %v6006, %v6005
        %v6014 = vpack.c.b16 %v6008, %v6007
        %v6015 = vpack.c.b16 %v6010, %v6009
        %v6022 = vsel %vm5555, %v5979, 0
        %6024 = vmatprep.subr.bf16.mxu0 0
        %6025 = vmatpush1.bf16.msra.mxu0 %v6011
        %6026 = vmatprep.subr.bf16.mxu0 0
        %6027 = vmatpush1.bf16.msra.mxu0 %v6012
        %6028 = vmatprep.subr.bf16.mxu0 0
        %6029 = vmatpush1.bf16.msra.mxu0 %v6013
        %6030 = vmatprep.subr.bf16.mxu0 0
        %6031 = vmatpush1.bf16.msra.mxu0 %v6014
        %6032 = vmatprep.subr.bf16.mxu0 0
        %6033 = vmatpush1.bf16.msra.mxu0 %v6015
        %6034 = vmatprep.subr.bf16.mxu0 0
        %6035 = vmatpush1.bf16.msra.mxu0 0
        %6036 = vmatprep.subr.bf16.mxu0 0
        %6037 = vmatpush1.bf16.msra.mxu0 0
        %6038 = vmatprep.subr.bf16.mxu0 0
        %6039 = vmatpush1.bf16.msra.mxu0 0
        %6040 = vmatprep.subr.bf16.mxu0 0
        %6041 = vmatpush1.bf16.msra.mxu0 0
        %6042 = vmatprep.subr.bf16.mxu0 0
        %6043 = vmatpush1.bf16.msra.mxu0 0
        %6044 = vmatprep.subr.bf16.mxu0 0
        %6045 = vmatpush1.bf16.msra.mxu0 0
        %6046 = vmatprep.subr.bf16.mxu0 0
        %6047 = vmatpush1.bf16.msra.mxu0 0
        %6048 = vmatprep.subr.bf16.mxu0 0
        %6049 = vmatpush1.bf16.msra.mxu0 0
        %6050 = vmatprep.subr.bf16.mxu0 0
        %6051 = vmatpush1.bf16.msra.mxu0 0
        %6052 = vmatprep.subr.bf16.mxu0 0
        %6053 = vmatpush1.bf16.msra.mxu0 0
        %6054 = vmatprep.subr.bf16.mxu0 0
        %6055 = vmatpush1.bf16.msra.mxu0 0
        %6056 = vmatprep.mubr.bf16.mxu0 0
        %6057 = vmatmul.mubr.bf16.gmra.mrb[0].mxu0 %v6022
        %v6058 = vpop.f32.mrb[0].mxu0
        %v6059 = vadd.f32 0.0, %v6058
        %v6060 = vpop.f32.mrb[0].mxu0
        %v6061 = vpop.f32.mrb[0].mxu0
        %v6062 = vpop.f32.mrb[0].mxu0
        %6063 = vdwg.mxu0
        %v6064 = vadd.f32 %v5933, %v6059
        %v6065 = vld [vmem:[%s11] sm:$0x1]
        %v6067 = vlaneseq
        %v6068 = vshrl.u32 %v6067, 7
        %v6069 = vsub.s32 0, %v6068
        %v6070 = vrot.slane %v6065, %v6069
        %v6072 = vadd.f32 %v6064, %v6070
        %v6073 = vmax.f32 %v6072, 0.0
        %v6074 = vpack.c.bf16 %v6073, %v6073
        %v6075 = vld [vmem:[%s12] sm:$0xf]
        %v6076 = vld [vmem:[%s12 + $0x4] sm:$0xf]
        %v6077 = vld [vmem:[%s12 + $0x8] sm:$0xf]
        %v6078 = vld [vmem:[%s12 + $0xc] sm:$0xf]
        %v6079 = vld [vmem:[%s12 + $0x10] sm:$0xf]
        %v6080 = vld [vmem:[%s12 + $0x14] sm:$0xf]
        %v6081 = vld [vmem:[%s12 + $0x18] sm:$0xf]
        %v6082 = vld [vmem:[%s12 + $0x1c] sm:$0xf]
        %v6083 = vld [vmem:[%s12 + $0x20] sm:$0xf]
        %v6084 = vld [vmem:[%s12 + $0x24] sm:$0xf]
        %v6085 = vld [vmem:[%s12 + $0x28] sm:$0xf]
        %v6086 = vld [vmem:[%s12 + $0x2c] sm:$0xf]
        %v6087 = vld [vmem:[%s12 + $0x30] sm:$0xf]
        %v6088 = vld [vmem:[%s12 + $0x34] sm:$0xf]
        %v6089 = vld [vmem:[%s12 + $0x38] sm:$0xf]
        %v6090 = vld [vmem:[%s12 + $0x3c] sm:$0xf]
        %v6091 = vld [vmem:[%s13] sm:$0x1]
        %v6093 = vlaneseq
        %v6094 = vshrl.u32 %v6093, 7
        %v6095 = vsub.s32 0, %v6094
        %v6096 = vrot.slane %v6091, %v6095
        %v6114 = vunpack.c.l.b16 %v6075
        %v6115 = vunpack.c.l.b16 %v6076
        %v6116 = vunpack.c.l.b16 %v6077
        %v6117 = vunpack.c.l.b16 %v6078
        %v6118 = vunpack.c.l.b16 %v6079
        %v6119 = vunpack.c.l.b16 %v6080
        %v6120 = vunpack.c.l.b16 %v6081
        %v6121 = vunpack.c.l.b16 %v6082
        %v6122 = vunpack.c.l.b16 %v6083
        %v6123 = vunpack.c.l.b16 %v6084
        %v6124 = vunpack.c.l.b16 %v6085
        %v6125 = vunpack.c.l.b16 %v6086
        %v6126 = vunpack.c.l.b16 %v6087
        %v6127 = vunpack.c.l.b16 %v6088
        %v6128 = vunpack.c.l.b16 %v6089
        %v6129 = vunpack.c.l.b16 %v6090
        %v6130 = vpack.c.b16 %v6115, %v6114
        %v6131 = vpack.c.b16 %v6117, %v6116
        %v6132 = vpack.c.b16 %v6119, %v6118
        %v6133 = vpack.c.b16 %v6121, %v6120
        %v6134 = vpack.c.b16 %v6123, %v6122
        %v6135 = vpack.c.b16 %v6125, %v6124
        %v6136 = vpack.c.b16 %v6127, %v6126
        %v6137 = vpack.c.b16 %v6129, %v6128
        %6146 = vmatprep.subr.bf16.mxu0 0
        %6147 = vmatpush1.bf16.msra.mxu0 %v6130
        %6148 = vmatprep.subr.bf16.mxu0 0
        %6149 = vmatpush1.bf16.msra.mxu0 %v6131
        %6150 = vmatprep.subr.bf16.mxu0 0
        %6151 = vmatpush1.bf16.msra.mxu0 %v6132
        %6152 = vmatprep.subr.bf16.mxu0 0
        %6153 = vmatpush1.bf16.msra.mxu0 %v6133
        %6154 = vmatprep.subr.bf16.mxu0 0
        %6155 = vmatpush1.bf16.msra.mxu0 %v6134
        %6156 = vmatprep.subr.bf16.mxu0 0
        %6157 = vmatpush1.bf16.msra.mxu0 %v6135
        %6158 = vmatprep.subr.bf16.mxu0 0
        %6159 = vmatpush1.bf16.msra.mxu0 %v6136
        %6160 = vmatprep.subr.bf16.mxu0 0
        %6161 = vmatpush1.bf16.msra.mxu0 %v6137
        %6162 = vmatprep.subr.bf16.mxu0 0
        %6163 = vmatpush1.bf16.msra.mxu0 0
        %6164 = vmatprep.subr.bf16.mxu0 0
        %6165 = vmatpush1.bf16.msra.mxu0 0
        %6166 = vmatprep.subr.bf16.mxu0 0
        %6167 = vmatpush1.bf16.msra.mxu0 0
        %6168 = vmatprep.subr.bf16.mxu0 0
        %6169 = vmatpush1.bf16.msra.mxu0 0
        %6170 = vmatprep.subr.bf16.mxu0 0
        %6171 = vmatpush1.bf16.msra.mxu0 0
        %6172 = vmatprep.subr.bf16.mxu0 0
        %6173 = vmatpush1.bf16.msra.mxu0 0
        %6174 = vmatprep.subr.bf16.mxu0 0
        %6175 = vmatpush1.bf16.msra.mxu0 0
        %6176 = vmatprep.subr.bf16.mxu0 0
        %6177 = vmatpush1.bf16.msra.mxu0 0
        %6178 = vmatprep.mubr.bf16.mxu0 0
        %6179 = vmatmul.mubr.bf16.gmra.mrb[0].mxu0 %v6074
        %v6180 = vpop.f32.mrb[0].mxu0
        %v6181 = vadd.f32 %v6096, %v6180
        %v6182 = vpop.f32.mrb[0].mxu0
        %v6183 = vpop.f32.mrb[0].mxu0
        %v6184 = vpop.f32.mrb[0].mxu0
        %6185 = vdwg.mxu0
        %v6186 = vmax.f32 %v6181, 0.0
        %v6187 = vpack.c.bf16 %v6186, %v6186
        %v6188 = vld [vmem:[%s14] sm:$0xf]
        %v6189 = vld [vmem:[%s14 + $0x4] sm:$0xf]
        %v6190 = vld [vmem:[%s14 + $0x8] sm:$0xf]
        %v6191 = vld [vmem:[%s14 + $0xc] sm:$0xf]
        %v6192 = vld [vmem:[%s14 + $0x10] sm:$0xf]
        %v6193 = vld [vmem:[%s14 + $0x14] sm:$0xf]
        %v6194 = vld [vmem:[%s14 + $0x18] sm:$0xf]
        %v6195 = vld [vmem:[%s14 + $0x1c] sm:$0xf]
        %v6196 = vld [vmem:[%s14 + $0x20] sm:$0xf]
        %v6197 = vld [vmem:[%s14 + $0x24] sm:$0xf]
        %v6198 = vld [vmem:[%s14 + $0x28] sm:$0xf]
        %v6199 = vld [vmem:[%s14 + $0x2c] sm:$0xf]
        %v6200 = vld [vmem:[%s14 + $0x30] sm:$0xf]
        %v6201 = vld [vmem:[%s14 + $0x34] sm:$0xf]
        %v6202 = vld [vmem:[%s14 + $0x38] sm:$0xf]
        %v6203 = vld [vmem:[%s14 + $0x3c] sm:$0xf]
        %v6204 = vld [vmem:[%s15] sm:$0x1]
        %v6206 = vlaneseq
        %v6207 = vshrl.u32 %v6206, 7
        %v6208 = vsub.s32 0, %v6207
        %v6209 = vrot.slane %v6204, %v6208
        %v6227 = vunpack.c.l.b16 %v6188
        %v6228 = vunpack.c.l.b16 %v6189
        %v6229 = vunpack.c.l.b16 %v6190
        %v6230 = vunpack.c.l.b16 %v6191
        %v6231 = vunpack.c.l.b16 %v6192
        %v6232 = vunpack.c.l.b16 %v6193
        %v6233 = vunpack.c.l.b16 %v6194
        %v6234 = vunpack.c.l.b16 %v6195
        %v6235 = vunpack.c.l.b16 %v6196
        %v6236 = vunpack.c.l.b16 %v6197
        %v6237 = vunpack.c.l.b16 %v6198
        %v6238 = vunpack.c.l.b16 %v6199
        %v6239 = vunpack.c.l.b16 %v6200
        %v6240 = vunpack.c.l.b16 %v6201
        %v6241 = vunpack.c.l.b16 %v6202
        %v6242 = vunpack.c.l.b16 %v6203
        %v6243 = vpack.c.b16 %v6228, %v6227
        %v6244 = vpack.c.b16 %v6230, %v6229
        %v6245 = vpack.c.b16 %v6232, %v6231
        %v6246 = vpack.c.b16 %v6234, %v6233
        %v6247 = vpack.c.b16 %v6236, %v6235
        %v6248 = vpack.c.b16 %v6238, %v6237
        %v6249 = vpack.c.b16 %v6240, %v6239
        %v6250 = vpack.c.b16 %v6242, %v6241
        %6259 = vmatprep.subr.bf16.mxu0 0
        %6260 = vmatpush1.bf16.msra.mxu0 %v6243
        %6261 = vmatprep.subr.bf16.mxu0 0
        %6262 = vmatpush1.bf16.msra.mxu0 %v6244
        %6263 = vmatprep.subr.bf16.mxu0 0
        %6264 = vmatpush1.bf16.msra.mxu0 %v6245
        %6265 = vmatprep.subr.bf16.mxu0 0
        %6266 = vmatpush1.bf16.msra.mxu0 %v6246
        %6267 = vmatprep.subr.bf16.mxu0 0
        %6268 = vmatpush1.bf16.msra.mxu0 %v6247
        %6269 = vmatprep.subr.bf16.mxu0 0
        %6270 = vmatpush1.bf16.msra.mxu0 %v6248
        %6271 = vmatprep.subr.bf16.mxu0 0
        %6272 = vmatpush1.bf16.msra.mxu0 %v6249
        %6273 = vmatprep.subr.bf16.mxu0 0
        %6274 = vmatpush1.bf16.msra.mxu0 %v6250
        %6275 = vmatprep.subr.bf16.mxu0 0
        %6276 = vmatpush1.bf16.msra.mxu0 0
        %6277 = vmatprep.subr.bf16.mxu0 0
        %6278 = vmatpush1.bf16.msra.mxu0 0
        %6279 = vmatprep.subr.bf16.mxu0 0
        %6280 = vmatpush1.bf16.msra.mxu0 0
        %6281 = vmatprep.subr.bf16.mxu0 0
        %6282 = vmatpush1.bf16.msra.mxu0 0
        %6283 = vmatprep.subr.bf16.mxu0 0
        %6284 = vmatpush1.bf16.msra.mxu0 0
        %6285 = vmatprep.subr.bf16.mxu0 0
        %6286 = vmatpush1.bf16.msra.mxu0 0
        %6287 = vmatprep.subr.bf16.mxu0 0
        %6288 = vmatpush1.bf16.msra.mxu0 0
        %6289 = vmatprep.subr.bf16.mxu0 0
        %6290 = vmatpush1.bf16.msra.mxu0 0
        %6291 = vmatprep.mubr.bf16.mxu0 0
        %6292 = vmatmul.mubr.bf16.gmra.mrb[0].mxu0 %v6187
        %v6293 = vpop.f32.mrb[0].mxu0
        %v6294 = vadd.f32 %v6209, %v6293
        %v6295 = vpop.f32.mrb[0].mxu0
        %v6296 = vpop.f32.mrb[0].mxu0
        %v6297 = vpop.f32.mrb[0].mxu0
        %6298 = vdwg.mxu0
        %6299 = vst [vmem:[%s515] sm:$0xff] %v6294
        %s6300 = sand.u32 %s379, 1
        %s6301 = scalar_lea.sflag [#allocation3], %s6300
        %s6302 = sand.u32 %s379, 1
        %s6303 = smul.addr %s6302, 8
        %s6304 = scalar_lea.vmem [#allocation2], %s6303
        // Predicated region
        $region85: #{net_forward.1} parent=83 // pred_check
          %p6305 = pneg %p389
        $region86: #{net_forward.1} parent=83 // pred_check_branch
          %6307 = sbr.rel (%p6305) target = $region88
        $region87: #{net_forward.1} parent=83 // pred_region
          %s6309 = ssub.s32 128, 128
          %6310 = vsyncadd %s6301, %s6309
          %s6311 = smul.addr %s30, 128
          %s6312 = scalar_lea.hbm %s16, %s6311
          %s6314 = sshll.u32 %s6304, 4
          %s6315 = int_to_ptr.vmem [resolvable:$true] %s6314
          %6317 = dma.vmem_to_hbm [thread:$0]  %s6315, 128, %s6312, %s6301
        $region88: #{net_forward.1} parent=83 // pred_fallthru
          _
      $region84: #{net_forward.1} parent=5 // pred_fallthru
        _
      %p6318 = scmp.le.s32.totalorder 2, %s25
      // Predicated region
      $region89: #{net_forward.1} parent=5 // pred_check
        %p6319 = pneg %p6318
      $region90: #{net_forward.1} parent=5 // pred_check_branch
        %6321 = sbr.rel (%p6319) target = $region92
      $region91: #{net_forward.1} parent=5 // pred_region
        %s6322 = ssub.s32 %s25, 2
        // Predicated region
        $region93: #{net_forward.1} parent=91 // pred_check
          %p6323 = pneg %p395
        $region94: #{net_forward.1} parent=91 // pred_check_branch
          %6325 = sbr.rel (%p6323) target = $region96
        $region95: #{net_forward.1} parent=91 // pred_region
          %s6326 = sand.u32 %s380, 1
          %s6327 = scalar_lea.sflag [#allocation3], %s6326
          %s6328 = sand.u32 %s380, 1
          %s6329 = smul.addr %s6328, 8
          %s6330 = scalar_lea.vmem [#allocation2], %s6329
          %6331 = dma.done %s6327, 128
        $region96: #{net_forward.1} parent=91 // pred_fallthru
          _
      $region92: #{net_forward.1} parent=5 // pred_fallthru
        _
    $region6: #{net_forward.1} parent=1 // loop_footer
      %s29 = sadd.s32 1, %s25
    $region7: #{net_forward.1} parent=1 // loop_footer_branch
      %24 = sbr.rel target = $region3
    $region8: #{net_forward.1} parent=1 // loop_exit
      _
    %6332 = vsyncpa [#allocation3], 1
    %s6333 = scalar_lea.sflag [#allocation3], 1
    %6334 = vsyncpa %s6333, 1

</llo_original>
